<compile_context>
chip_gen: v5e
topology: v5e:2x2
jax: 0.10.0
libtpu: 0.0.40
codegen_flags: <defaults>
</compile_context>

<pallas_src>
import math

import jax
import jax.numpy as jnp
from jax.experimental import pallas as pl
from jax.experimental.pallas import tpu as pltpu

LN_EPS = 1e-5  # torch.nn.LayerNorm default


def _round_up(v, m):
    return ((v + m - 1) // m) * m


def _layernorm(z, w, b):
    mu = jnp.mean(z, axis=-1, keepdims=True)
    zc = z - mu
    var = jnp.mean(zc * zc, axis=-1, keepdims=True)
    return zc * jax.lax.rsqrt(var + LN_EPS) * w + b


def _vmem_limit_bytes():
    try:
        cap = int(pltpu.get_tpu_info().vmem_capacity_bytes)
    except Exception:
        cap = 64 << 20  # conservative fallback (v7x per-TC size)
    # leave ~25% headroom for double-buffering / internal scratch
    return min(int(cap * 0.75), 96 << 20)


def _pick_batch_tile(B, max_tile=1024):
    """Batch tile: multiple of 16 (bf16 sublane tile); >=2 grid steps when
    the batch is large enough so v7x's two TensorCores both get work."""
    if B <= 16:
        return 16
    return min(max_tile, _round_up(pl.cdiv(B, 2), 16))


def _qnet_kernel(x_ref,
                 w1_ref, b1_ref,          # fc1
                 w2_ref, b2_ref,          # fc2
                 wattn_ref, battn_ref,    # fused MHA (Wv@Wo, bv@Wo+bo)
                 ln1w_ref, ln1b_ref,      # norm1
                 wf1_ref, bf1_ref,        # feed_forward[0]
                 wf2_ref, bf2_ref,        # feed_forward[2]
                 ln2w_ref, ln2b_ref,      # norm2
                 wva_ref, bva_ref,        # fused [fc_value | fc_advantage]
                 whead_ref, bhead_ref,    # fused heads with dueling combine folded in
                 out_ref):
    cdt = w1_ref.dtype  # MXU operand dtype (bf16 in the fast path)

    # Input arrives as f32; cast to the MXU operand dtype inside the kernel.
    x = x_ref[...].astype(cdt)

    # fc1 -> relu
    h = jnp.dot(x, w1_ref[...], preferred_element_type=jnp.float32) + b1_ref[...]
    h = jnp.maximum(h, 0.0).astype(cdt)
    # fc2 -> relu
    e32 = jnp.dot(h, w2_ref[...], preferred_element_type=jnp.float32) + b2_ref[...]
    e32 = jnp.maximum(e32, 0.0)
    e = e32.astype(cdt)

    # seq-len-1 multihead attention (fused): out_proj(v_proj(e))
    attn = jnp.dot(e, wattn_ref[...], preferred_element_type=jnp.float32) + battn_ref[...]

    # norm1(attn + query)   (dropout = identity in eval)
    x1 = _layernorm(attn + e32, ln1w_ref[...], ln1b_ref[...])  # f32

    # feed_forward: Linear -> ReLU -> Linear
    f = jnp.dot(x1.astype(cdt), wf1_ref[...], preferred_element_type=jnp.float32) + bf1_ref[...]
    f = jnp.maximum(f, 0.0).astype(cdt)
    f2 = jnp.dot(f, wf2_ref[...], preferred_element_type=jnp.float32) + bf2_ref[...]

    # norm2(ff + x1)
    x2 = _layernorm(f2 + x1, ln2w_ref[...], ln2b_ref[...])  # f32

    # fused dueling first layers: relu(x2 @ [Wval|Wadv] + [bval|badv])
    va = jnp.dot(x2.astype(cdt), wva_ref[...], preferred_element_type=jnp.float32) + bva_ref[...]
    va = jnp.maximum(va, 0.0).astype(cdt)  # (TB, 512)

    # Heads with the dueling combine pre-folded into whead/bhead:
    # lanes 0..A-1 of the lane-dense (TB, 128) slab hold Q directly.
    out_ref[...] = jnp.dot(va, whead_ref[...],
                           preferred_element_type=jnp.float32) + bhead_ref[...]


def prepare_params(raw, n_actions, head_lanes, compute_dtype=jnp.bfloat16):
    """Fuse (attention, dueling first layers, heads + dueling combine) and cast."""
    (w1, b1, w2, b2, wv, bv, wo, bo, ln1w, ln1b,
     wf1, bf1, wf2, bf2, ln2w, ln2b,
     wval, bval, wadv, badv, wv2, bv2, wa2, ba2) = raw

    # seq-len-1 MHA:  (e @ Wv + bv) @ Wo + bo == e @ (Wv Wo) + (bv Wo + bo)
    # TODO(synk): exact only for seq_len == 1, as in this model's forward.
    w_attn = wv @ wo
    b_attn = bv @ wo + bo

    # dueling first layers side-by-side
    w_va = jnp.concatenate([wval, wadv], axis=1)        # (E, 512)
    b_va = jnp.concatenate([bval, badv], axis=1)        # (1, 512)

    # Fold the dueling combine (value + adv - mean(adv)) into the head weights:
    #   q[:, a] = vh @ wv2 + bv2 + ah @ (wa2[:, a] - mean_j wa2[:, j])
    #                            + (ba2[a] - mean_j ba2[j])
    hid = wval.shape[1]                                  # 256
    wa2_c = wa2 - jnp.mean(wa2, axis=1, keepdims=True)   # (hid, A)
    ba2_c = ba2 - jnp.mean(ba2, axis=1, keepdims=True)   # (1, A)
    w_head = jnp.zeros((2 * hid, head_lanes), jnp.float32)
    w_head = w_head.at[:hid, :n_actions].set(jnp.broadcast_to(wv2, (hid, n_actions)))
    w_head = w_head.at[hid:, :n_actions].set(wa2_c)
    b_head = jnp.zeros((1, head_lanes), jnp.float32)
    b_head = b_head.at[:, :n_actions].set(bv2 + ba2_c)

    wcast = lambda a: a.astype(compute_dtype)
    f32 = lambda a: a.astype(jnp.float32)
    return (wcast(w1), f32(b1), wcast(w2), f32(b2),
            wcast(w_attn), f32(b_attn),
            f32(ln1w), f32(ln1b),
            wcast(wf1), f32(bf1), wcast(wf2), f32(bf2),
            f32(ln2w), f32(ln2b),
            wcast(w_va), f32(b_va),
            wcast(w_head), f32(b_head))


def enhanced_dueling_crop_qnet(x, prepared_params, output_shape):
    """x: (B, C, H, W) float32.  prepared_params from prepare_params()."""
    B = x.shape[0]
    n_actions = math.prod(output_shape)
    head_lanes = prepared_params[-1].shape[-1]

    # Input stays f32 — the bf16 cast happens inside the kernel (no extra
    # wrapper-side cast kernel / HBM round trip of the input).
    x_flat = x.reshape(B, -1).astype(jnp.float32)
    input_dim = x_flat.shape[1]

    tb = _pick_batch_tile(B)
    b_pad = _round_up(B, tb)
    if b_pad != B:
        x_flat = jnp.pad(x_flat, ((0, b_pad - B), (0, 0)))
    grid = (b_pad // tb,)

    def resident(arr):
        # whole weight stays in VMEM; constant block index -> DMA'd once
        return pl.BlockSpec(arr.shape, lambda i: (0, 0))

    in_specs = [pl.BlockSpec((tb, input_dim), lambda i: (i, 0))]
    in_specs += [resident(p) for p in prepared_params]
    out_spec = pl.BlockSpec((tb, head_lanes), lambda i: (i, 0))

    out = pl.pallas_call(
        _qnet_kernel,
        grid=grid,
        out_shape=jax.ShapeDtypeStruct((b_pad, head_lanes), jnp.float32),
        in_specs=in_specs,
        out_specs=out_spec,
        compiler_params=pltpu.CompilerParams(
            dimension_semantics=("parallel",),
            vmem_limit_bytes=_vmem_limit_bytes(),
        ),
    )(x_flat, *prepared_params)

    q = out[:B, :n_actions]
    return q.reshape((B,) + tuple(output_shape))


def init_params(key, input_dim, embed_size, n_actions, forward_expansion=2):
    """Deterministic synthetic init (PyTorch-Linear-style uniform bounds)."""
    def linear(k, fan_in, fan_out):
        kw, kb = jax.random.split(k)
        bound = 1.0 / float(fan_in) ** 0.5
        W = jax.random.uniform(kw, (fan_in, fan_out), jnp.float32, -bound, bound)
        b = jax.random.uniform(kb, (1, fan_out), jnp.float32, -bound, bound)
        return W, b

    ks = jax.random.split(key, 10)
    E, FE = embed_size, forward_expansion

    w1, b1 = linear(ks[0], input_dim, 1024)          # fc1
    w2, b2 = linear(ks[1], 1024, E)                  # fc2
    wv, _ = linear(ks[2], E, E)                      # MHA in_proj V slice
    bv = jnp.zeros((1, E), jnp.float32)              # torch in_proj_bias init = 0
    wo, bo = linear(ks[3], E, E)                     # MHA out_proj
    ln1w = jnp.ones((1, E), jnp.float32)
    ln1b = jnp.zeros((1, E), jnp.float32)
    wf1, bf1 = linear(ks[4], E, FE * E)              # feed_forward[0]
    wf2, bf2 = linear(ks[5], FE * E, E)              # feed_forward[2]
    ln2w = jnp.ones((1, E), jnp.float32)
    ln2b = jnp.zeros((1, E), jnp.float32)
    wval, bval = linear(ks[6], E, 256)               # fc_value
    wadv, badv = linear(ks[7], E, 256)               # fc_advantage
    wv2, bv2 = linear(ks[8], 256, 1)                 # value
    wa2, ba2 = linear(ks[9], 256, n_actions)         # advantage

    return (w1, b1, w2, b2, wv, bv, wo, bo, ln1w, ln1b,
            wf1, bf1, wf2, bf2, ln2w, ln2b,
            wval, bval, wadv, badv, wv2, bv2, wa2, ba2)


def raw_reference(x, raw, output_shape):
    """Exact f32 mirror of the PyTorch module math (no fusion, no bf16)."""
    (w1, b1, w2, b2, wv, bv, wo, bo, ln1w, ln1b,
     wf1, bf1, wf2, bf2, ln2w, ln2b,
     wval, bval, wadv, badv, wv2, bv2, wa2, ba2) = raw
    B = x.shape[0]
    xf = x.reshape(B, -1)
    h = jax.nn.relu(xf @ w1 + b1)
    e = jax.nn.relu(h @ w2 + b2)
    attn = (e @ wv + bv) @ wo + bo        # seq_len == 1 -> softmax == 1
    x1 = _layernorm(attn + e, ln1w, ln1b)
    f = jax.nn.relu(x1 @ wf1 + bf1) @ wf2 + bf2
    x2 = _layernorm(f + x1, ln2w, ln2b)
    vh = jax.nn.relu(x2 @ wval + bval)
    ah = jax.nn.relu(x2 @ wadv + badv)
    value = vh @ wv2 + bv2
    adv = ah @ wa2 + ba2
    q = value + adv - jnp.mean(adv, axis=-1, keepdims=True)
    return q.reshape((B,) + tuple(output_shape))


def fused_reference(x, prepared, n_actions, output_shape):
    """Pure-JAX mirror of the kernel math (same fusion, same dtypes)."""
    (w1, b1, w2, b2, wattn, battn, ln1w, ln1b,
     wf1, bf1, wf2, bf2, ln2w, ln2b, wva, bva, whead, bhead) = prepared
    cdt = w1.dtype
    dot = lambda a, b: jnp.dot(a, b, preferred_element_type=jnp.float32)
    B = x.shape[0]
    xf = x.reshape(B, -1).astype(cdt)
    h = jnp.maximum(dot(xf, w1) + b1, 0.0).astype(cdt)
    e32 = jnp.maximum(dot(h, w2) + b2, 0.0)
    attn = dot(e32.astype(cdt), wattn) + battn
    x1 = _layernorm(attn + e32, ln1w, ln1b)
    f = jnp.maximum(dot(x1.astype(cdt), wf1) + bf1, 0.0).astype(cdt)
    f2 = dot(f, wf2) + bf2
    x2 = _layernorm(f2 + x1, ln2w, ln2b)
    va = jnp.maximum(dot(x2.astype(cdt), wva) + bva, 0.0).astype(cdt)
    head = dot(va, whead) + bhead
    return head[:, :n_actions].reshape((B,) + tuple(output_shape))


if __name__ == "__main__":
    # Small shapes consistent with the module: input_shape=(4,16,16) -> input_dim=1024
    B = 2
    input_shape = (4, 16, 16)
    output_shape = (8,)
    embed_size = 128
    forward_expansion = 2

    input_dim = 4 * 16 * 16
    n_actions = math.prod(output_shape)
    head_lanes = max(128, _round_up(n_actions, 128))

    key = jax.random.PRNGKey(0)
    kx, kp = jax.random.split(key)
    x = jax.random.normal(kx, (B,) + input_shape, jnp.float32)
    raw = init_params(kp, input_dim, embed_size, n_actions, forward_expansion)

    # 1) validate the algebraic fusions in pure f32 (exact, tight tolerance)
    prepared_f32 = prepare_params(raw, n_actions, head_lanes, compute_dtype=jnp.float32)
    q_fused_f32 = fused_reference(x, prepared_f32, n_actions, output_shape)
    q_raw = raw_reference(x, raw, output_shape)
    assert jnp.allclose(q_fused_f32, q_raw, atol=1e-4, rtol=1e-4), (q_fused_f32, q_raw)

    # 2) validate the Pallas kernel against a same-dtype (bf16) mirror
    prepared = prepare_params(raw, n_actions, head_lanes, compute_dtype=jnp.bfloat16)
    q = enhanced_dueling_crop_qnet(x, prepared, output_shape)
    q = jax.block_until_ready(q)
    q_ref = fused_reference(x, prepared, n_actions, output_shape)

    assert q.shape == (B,) + output_shape
    assert jnp.allclose(q, q_ref, atol=5e-3, rtol=5e-3), (q, q_ref)

    print("KERNEL_OK")
</pallas_src>

<mosaic_0001>
module attributes {stable_mosaic.version = 11 : i64} {
  func.func @_qnet_kernel(%arg0: i32, %arg1: memref<16x1024xf32, #tpu.memory_space<vmem>>, %arg2: memref<1024x1024xbf16, #tpu.memory_space<vmem>>, %arg3: memref<1x1024xf32, #tpu.memory_space<vmem>>, %arg4: memref<1024x128xbf16, #tpu.memory_space<vmem>>, %arg5: memref<1x128xf32, #tpu.memory_space<vmem>>, %arg6: memref<128x128xbf16, #tpu.memory_space<vmem>>, %arg7: memref<1x128xf32, #tpu.memory_space<vmem>>, %arg8: memref<1x128xf32, #tpu.memory_space<vmem>>, %arg9: memref<1x128xf32, #tpu.memory_space<vmem>>, %arg10: memref<128x256xbf16, #tpu.memory_space<vmem>>, %arg11: memref<1x256xf32, #tpu.memory_space<vmem>>, %arg12: memref<256x128xbf16, #tpu.memory_space<vmem>>, %arg13: memref<1x128xf32, #tpu.memory_space<vmem>>, %arg14: memref<1x128xf32, #tpu.memory_space<vmem>>, %arg15: memref<1x128xf32, #tpu.memory_space<vmem>>, %arg16: memref<128x512xbf16, #tpu.memory_space<vmem>>, %arg17: memref<1x512xf32, #tpu.memory_space<vmem>>, %arg18: memref<512x128xbf16, #tpu.memory_space<vmem>>, %arg19: memref<1x128xf32, #tpu.memory_space<vmem>>, %arg20: memref<16x128xf32, #tpu.memory_space<vmem>>) attributes {dimension_semantics = [#tpu.dimension_semantics<parallel>], iteration_bounds = array<i64: 1>, scalar_prefetch = 0 : i64, scratch_operands = 0 : i64, tpu.core_type = #tpu.core_type<tc>, window_params = [{transform_indices = @transform_0, window_bounds = array<i64: 16, 1024>}, {pipeline_mode = #tpu.pipeline_mode<synchronous>, transform_indices = @transform_1, window_bounds = array<i64: 1024, 1024>}, {pipeline_mode = #tpu.pipeline_mode<synchronous>, transform_indices = @transform_2, window_bounds = array<i64: 1, 1024>}, {pipeline_mode = #tpu.pipeline_mode<synchronous>, transform_indices = @transform_3, window_bounds = array<i64: 1024, 128>}, {pipeline_mode = #tpu.pipeline_mode<synchronous>, transform_indices = @transform_4, window_bounds = array<i64: 1, 128>}, {pipeline_mode = #tpu.pipeline_mode<synchronous>, transform_indices = @transform_5, window_bounds = array<i64: 128, 128>}, {pipeline_mode = #tpu.pipeline_mode<synchronous>, transform_indices = @transform_6, window_bounds = array<i64: 1, 128>}, {pipeline_mode = #tpu.pipeline_mode<synchronous>, transform_indices = @transform_7, window_bounds = array<i64: 1, 128>}, {pipeline_mode = #tpu.pipeline_mode<synchronous>, transform_indices = @transform_8, window_bounds = array<i64: 1, 128>}, {pipeline_mode = #tpu.pipeline_mode<synchronous>, transform_indices = @transform_9, window_bounds = array<i64: 128, 256>}, {pipeline_mode = #tpu.pipeline_mode<synchronous>, transform_indices = @transform_10, window_bounds = array<i64: 1, 256>}, {pipeline_mode = #tpu.pipeline_mode<synchronous>, transform_indices = @transform_11, window_bounds = array<i64: 256, 128>}, {pipeline_mode = #tpu.pipeline_mode<synchronous>, transform_indices = @transform_12, window_bounds = array<i64: 1, 128>}, {pipeline_mode = #tpu.pipeline_mode<synchronous>, transform_indices = @transform_13, window_bounds = array<i64: 1, 128>}, {pipeline_mode = #tpu.pipeline_mode<synchronous>, transform_indices = @transform_14, window_bounds = array<i64: 1, 128>}, {pipeline_mode = #tpu.pipeline_mode<synchronous>, transform_indices = @transform_15, window_bounds = array<i64: 128, 512>}, {pipeline_mode = #tpu.pipeline_mode<synchronous>, transform_indices = @transform_16, window_bounds = array<i64: 1, 512>}, {pipeline_mode = #tpu.pipeline_mode<synchronous>, transform_indices = @transform_17, window_bounds = array<i64: 512, 128>}, {pipeline_mode = #tpu.pipeline_mode<synchronous>, transform_indices = @transform_18, window_bounds = array<i64: 1, 128>}, {transform_indices = @transform_19, window_bounds = array<i64: 16, 128>}]} {
    %c0 = arith.constant 0 : index
    %c0_0 = arith.constant 0 : index
    %0 = vector.load %arg1[%c0, %c0_0] : memref<16x1024xf32, #tpu.memory_space<vmem>>, vector<16x1024xf32>
    %1 = arith.truncf %0 : vector<16x1024xf32> to vector<16x1024xbf16>
    %c0_1 = arith.constant 0 : index
    %c0_2 = arith.constant 0 : index
    %2 = vector.load %arg2[%c0_1, %c0_2] : memref<1024x1024xbf16, #tpu.memory_space<vmem>>, vector<1024x1024xbf16>
    %cst = arith.constant dense<0.000000e+00> : vector<16x1024xf32>
    %3 = tpu.matmul %1, %2, %cst {dimension_numbers = #tpu.dot_dimension_numbers<[1], [0], [0], [1], [0, 0, 1, 1], [], []>} : vector<16x1024xbf16>, vector<1024x1024xbf16>, vector<16x1024xf32> -> vector<16x1024xf32>
    %c0_3 = arith.constant 0 : index
    %c0_4 = arith.constant 0 : index
    %4 = vector.load %arg3[%c0_3, %c0_4] : memref<1x1024xf32, #tpu.memory_space<vmem>>, vector<1x1024xf32>
    %5 = vector.broadcast %4 : vector<1x1024xf32> to vector<16x1024xf32>
    %6 = arith.addf %3, %5 : vector<16x1024xf32>
    %cst_5 = arith.constant 0.000000e+00 : f32
    %7 = vector.broadcast %cst_5 : f32 to vector<16x1024xf32>
    %8 = arith.maximumf %6, %7 : vector<16x1024xf32>
    %9 = arith.truncf %8 : vector<16x1024xf32> to vector<16x1024xbf16>
    %c0_6 = arith.constant 0 : index
    %c0_7 = arith.constant 0 : index
    %10 = vector.load %arg4[%c0_6, %c0_7] : memref<1024x128xbf16, #tpu.memory_space<vmem>>, vector<1024x128xbf16>
    %cst_8 = arith.constant dense<0.000000e+00> : vector<16x128xf32>
    %11 = tpu.matmul %9, %10, %cst_8 {dimension_numbers = #tpu.dot_dimension_numbers<[1], [0], [0], [1], [0, 0, 1, 1], [], []>} : vector<16x1024xbf16>, vector<1024x128xbf16>, vector<16x128xf32> -> vector<16x128xf32>
    %c0_9 = arith.constant 0 : index
    %c0_10 = arith.constant 0 : index
    %12 = vector.load %arg5[%c0_9, %c0_10] : memref<1x128xf32, #tpu.memory_space<vmem>>, vector<1x128xf32>
    %13 = vector.broadcast %12 : vector<1x128xf32> to vector<16x128xf32>
    %14 = arith.addf %11, %13 : vector<16x128xf32>
    %cst_11 = arith.constant 0.000000e+00 : f32
    %15 = vector.broadcast %cst_11 : f32 to vector<16x128xf32>
    %16 = arith.maximumf %14, %15 : vector<16x128xf32>
    %17 = arith.truncf %16 : vector<16x128xf32> to vector<16x128xbf16>
    %c0_12 = arith.constant 0 : index
    %c0_13 = arith.constant 0 : index
    %18 = vector.load %arg6[%c0_12, %c0_13] : memref<128x128xbf16, #tpu.memory_space<vmem>>, vector<128x128xbf16>
    %cst_14 = arith.constant dense<0.000000e+00> : vector<16x128xf32>
    %19 = tpu.matmul %17, %18, %cst_14 {dimension_numbers = #tpu.dot_dimension_numbers<[1], [0], [0], [1], [0, 0, 1, 1], [], []>} : vector<16x128xbf16>, vector<128x128xbf16>, vector<16x128xf32> -> vector<16x128xf32>
    %c0_15 = arith.constant 0 : index
    %c0_16 = arith.constant 0 : index
    %20 = vector.load %arg7[%c0_15, %c0_16] : memref<1x128xf32, #tpu.memory_space<vmem>>, vector<1x128xf32>
    %21 = vector.broadcast %20 : vector<1x128xf32> to vector<16x128xf32>
    %22 = arith.addf %19, %21 : vector<16x128xf32>
    %23 = arith.addf %22, %16 : vector<16x128xf32>
    %c0_17 = arith.constant 0 : index
    %c0_18 = arith.constant 0 : index
    %24 = vector.load %arg8[%c0_17, %c0_18] : memref<1x128xf32, #tpu.memory_space<vmem>>, vector<1x128xf32>
    %c0_19 = arith.constant 0 : index
    %c0_20 = arith.constant 0 : index
    %25 = vector.load %arg9[%c0_19, %c0_20] : memref<1x128xf32, #tpu.memory_space<vmem>>, vector<1x128xf32>
    %cst_21 = arith.constant dense<0.000000e+00> : vector<16xf32>
    %26 = vector.multi_reduction <add>, %23, %cst_21 [1] : vector<16x128xf32> to vector<16xf32>
    %27 = vector.shape_cast %26 : vector<16xf32> to vector<16x1xf32>
    %cst_22 = arith.constant 1.280000e+02 : f32
    %28 = vector.broadcast %cst_22 : f32 to vector<16x1xf32>
    %29 = arith.divf %27, %28 : vector<16x1xf32>
    %30 = vector.broadcast %29 : vector<16x1xf32> to vector<16x128xf32>
    %31 = arith.subf %23, %30 : vector<16x128xf32>
    %32 = arith.mulf %31, %31 : vector<16x128xf32>
    %cst_23 = arith.constant dense<0.000000e+00> : vector<16xf32>
    %33 = vector.multi_reduction <add>, %32, %cst_23 [1] : vector<16x128xf32> to vector<16xf32>
    %34 = vector.shape_cast %33 : vector<16xf32> to vector<16x1xf32>
    %cst_24 = arith.constant 1.280000e+02 : f32
    %35 = vector.broadcast %cst_24 : f32 to vector<16x1xf32>
    %36 = arith.divf %34, %35 : vector<16x1xf32>
    %cst_25 = arith.constant 9.99999974E-6 : f32
    %37 = vector.broadcast %cst_25 : f32 to vector<16x1xf32>
    %38 = arith.addf %36, %37 : vector<16x1xf32>
    %39 = math.rsqrt %38 : vector<16x1xf32>
    %40 = vector.broadcast %39 : vector<16x1xf32> to vector<16x128xf32>
    %41 = arith.mulf %31, %40 : vector<16x128xf32>
    %42 = vector.broadcast %24 : vector<1x128xf32> to vector<16x128xf32>
    %43 = arith.mulf %41, %42 : vector<16x128xf32>
    %44 = vector.broadcast %25 : vector<1x128xf32> to vector<16x128xf32>
    %45 = arith.addf %43, %44 : vector<16x128xf32>
    %46 = arith.truncf %45 : vector<16x128xf32> to vector<16x128xbf16>
    %c0_26 = arith.constant 0 : index
    %c0_27 = arith.constant 0 : index
    %47 = vector.load %arg10[%c0_26, %c0_27] : memref<128x256xbf16, #tpu.memory_space<vmem>>, vector<128x256xbf16>
    %cst_28 = arith.constant dense<0.000000e+00> : vector<16x256xf32>
    %48 = tpu.matmul %46, %47, %cst_28 {dimension_numbers = #tpu.dot_dimension_numbers<[1], [0], [0], [1], [0, 0, 1, 1], [], []>} : vector<16x128xbf16>, vector<128x256xbf16>, vector<16x256xf32> -> vector<16x256xf32>
    %c0_29 = arith.constant 0 : index
    %c0_30 = arith.constant 0 : index
    %49 = vector.load %arg11[%c0_29, %c0_30] : memref<1x256xf32, #tpu.memory_space<vmem>>, vector<1x256xf32>
    %50 = vector.broadcast %49 : vector<1x256xf32> to vector<16x256xf32>
    %51 = arith.addf %48, %50 : vector<16x256xf32>
    %cst_31 = arith.constant 0.000000e+00 : f32
    %52 = vector.broadcast %cst_31 : f32 to vector<16x256xf32>
    %53 = arith.maximumf %51, %52 : vector<16x256xf32>
    %54 = arith.truncf %53 : vector<16x256xf32> to vector<16x256xbf16>
    %c0_32 = arith.constant 0 : index
    %c0_33 = arith.constant 0 : index
    %55 = vector.load %arg12[%c0_32, %c0_33] : memref<256x128xbf16, #tpu.memory_space<vmem>>, vector<256x128xbf16>
    %cst_34 = arith.constant dense<0.000000e+00> : vector<16x128xf32>
    %56 = tpu.matmul %54, %55, %cst_34 {dimension_numbers = #tpu.dot_dimension_numbers<[1], [0], [0], [1], [0, 0, 1, 1], [], []>} : vector<16x256xbf16>, vector<256x128xbf16>, vector<16x128xf32> -> vector<16x128xf32>
    %c0_35 = arith.constant 0 : index
    %c0_36 = arith.constant 0 : index
    %57 = vector.load %arg13[%c0_35, %c0_36] : memref<1x128xf32, #tpu.memory_space<vmem>>, vector<1x128xf32>
    %58 = vector.broadcast %57 : vector<1x128xf32> to vector<16x128xf32>
    %59 = arith.addf %56, %58 : vector<16x128xf32>
    %60 = arith.addf %59, %45 : vector<16x128xf32>
    %c0_37 = arith.constant 0 : index
    %c0_38 = arith.constant 0 : index
    %61 = vector.load %arg14[%c0_37, %c0_38] : memref<1x128xf32, #tpu.memory_space<vmem>>, vector<1x128xf32>
    %c0_39 = arith.constant 0 : index
    %c0_40 = arith.constant 0 : index
    %62 = vector.load %arg15[%c0_39, %c0_40] : memref<1x128xf32, #tpu.memory_space<vmem>>, vector<1x128xf32>
    %cst_41 = arith.constant dense<0.000000e+00> : vector<16xf32>
    %63 = vector.multi_reduction <add>, %60, %cst_41 [1] : vector<16x128xf32> to vector<16xf32>
    %64 = vector.shape_cast %63 : vector<16xf32> to vector<16x1xf32>
    %cst_42 = arith.constant 1.280000e+02 : f32
    %65 = vector.broadcast %cst_42 : f32 to vector<16x1xf32>
    %66 = arith.divf %64, %65 : vector<16x1xf32>
    %67 = vector.broadcast %66 : vector<16x1xf32> to vector<16x128xf32>
    %68 = arith.subf %60, %67 : vector<16x128xf32>
    %69 = arith.mulf %68, %68 : vector<16x128xf32>
    %cst_43 = arith.constant dense<0.000000e+00> : vector<16xf32>
    %70 = vector.multi_reduction <add>, %69, %cst_43 [1] : vector<16x128xf32> to vector<16xf32>
    %71 = vector.shape_cast %70 : vector<16xf32> to vector<16x1xf32>
    %cst_44 = arith.constant 1.280000e+02 : f32
    %72 = vector.broadcast %cst_44 : f32 to vector<16x1xf32>
    %73 = arith.divf %71, %72 : vector<16x1xf32>
    %cst_45 = arith.constant 9.99999974E-6 : f32
    %74 = vector.broadcast %cst_45 : f32 to vector<16x1xf32>
    %75 = arith.addf %73, %74 : vector<16x1xf32>
    %76 = math.rsqrt %75 : vector<16x1xf32>
    %77 = vector.broadcast %76 : vector<16x1xf32> to vector<16x128xf32>
    %78 = arith.mulf %68, %77 : vector<16x128xf32>
    %79 = vector.broadcast %61 : vector<1x128xf32> to vector<16x128xf32>
    %80 = arith.mulf %78, %79 : vector<16x128xf32>
    %81 = vector.broadcast %62 : vector<1x128xf32> to vector<16x128xf32>
    %82 = arith.addf %80, %81 : vector<16x128xf32>
    %83 = arith.truncf %82 : vector<16x128xf32> to vector<16x128xbf16>
    %c0_46 = arith.constant 0 : index
    %c0_47 = arith.constant 0 : index
    %84 = vector.load %arg16[%c0_46, %c0_47] : memref<128x512xbf16, #tpu.memory_space<vmem>>, vector<128x512xbf16>
    %cst_48 = arith.constant dense<0.000000e+00> : vector<16x512xf32>
    %85 = tpu.matmul %83, %84, %cst_48 {dimension_numbers = #tpu.dot_dimension_numbers<[1], [0], [0], [1], [0, 0, 1, 1], [], []>} : vector<16x128xbf16>, vector<128x512xbf16>, vector<16x512xf32> -> vector<16x512xf32>
    %c0_49 = arith.constant 0 : index
    %c0_50 = arith.constant 0 : index
    %86 = vector.load %arg17[%c0_49, %c0_50] : memref<1x512xf32, #tpu.memory_space<vmem>>, vector<1x512xf32>
    %87 = vector.broadcast %86 : vector<1x512xf32> to vector<16x512xf32>
    %88 = arith.addf %85, %87 : vector<16x512xf32>
    %cst_51 = arith.constant 0.000000e+00 : f32
    %89 = vector.broadcast %cst_51 : f32 to vector<16x512xf32>
    %90 = arith.maximumf %88, %89 : vector<16x512xf32>
    %91 = arith.truncf %90 : vector<16x512xf32> to vector<16x512xbf16>
    %c0_52 = arith.constant 0 : index
    %c0_53 = arith.constant 0 : index
    %92 = vector.load %arg18[%c0_52, %c0_53] : memref<512x128xbf16, #tpu.memory_space<vmem>>, vector<512x128xbf16>
    %cst_54 = arith.constant dense<0.000000e+00> : vector<16x128xf32>
    %93 = tpu.matmul %91, %92, %cst_54 {dimension_numbers = #tpu.dot_dimension_numbers<[1], [0], [0], [1], [0, 0, 1, 1], [], []>} : vector<16x512xbf16>, vector<512x128xbf16>, vector<16x128xf32> -> vector<16x128xf32>
    %c0_55 = arith.constant 0 : index
    %c0_56 = arith.constant 0 : index
    %94 = vector.load %arg19[%c0_55, %c0_56] : memref<1x128xf32, #tpu.memory_space<vmem>>, vector<1x128xf32>
    %95 = vector.broadcast %94 : vector<1x128xf32> to vector<16x128xf32>
    %96 = arith.addf %93, %95 : vector<16x128xf32>
    %c0_57 = arith.constant 0 : index
    %c0_58 = arith.constant 0 : index
    %97 = vector.load %arg20[%c0_57, %c0_58] : memref<16x128xf32, #tpu.memory_space<vmem>>, vector<16x128xf32>
    tpu.vector_store %arg20[%c0_57, %c0_58], %96 {strides = array<i32>} : memref<16x128xf32, #tpu.memory_space<vmem>>, vector<16x128xf32>,
    return
  }
  func.func @transform_0(%arg0: i32) -> (i32, i32) {
    %c0_i32 = arith.constant 0 : i32
    %c0_i32_0 = arith.constant 0 : i32
    return %arg0, %c0_i32 : i32, i32
  }
  func.func @transform_1(%arg0: i32) -> (i32, i32) {
    %c0_i32 = arith.constant 0 : i32
    %c0_i32_0 = arith.constant 0 : i32
    %c0_i32_1 = arith.constant 0 : i32
    return %c0_i32, %c0_i32_0 : i32, i32
  }
  func.func @transform_2(%arg0: i32) -> (i32, i32) {
    %c0_i32 = arith.constant 0 : i32
    %c0_i32_0 = arith.constant 0 : i32
    %c0_i32_1 = arith.constant 0 : i32
    return %c0_i32, %c0_i32_0 : i32, i32
  }
  func.func @transform_3(%arg0: i32) -> (i32, i32) {
    %c0_i32 = arith.constant 0 : i32
    %c0_i32_0 = arith.constant 0 : i32
    %c0_i32_1 = arith.constant 0 : i32
    return %c0_i32, %c0_i32_0 : i32, i32
  }
  func.func @transform_4(%arg0: i32) -> (i32, i32) {
    %c0_i32 = arith.constant 0 : i32
    %c0_i32_0 = arith.constant 0 : i32
    %c0_i32_1 = arith.constant 0 : i32
    return %c0_i32, %c0_i32_0 : i32, i32
  }
  func.func @transform_5(%arg0: i32) -> (i32, i32) {
    %c0_i32 = arith.constant 0 : i32
    %c0_i32_0 = arith.constant 0 : i32
    %c0_i32_1 = arith.constant 0 : i32
    return %c0_i32, %c0_i32_0 : i32, i32
  }
  func.func @transform_6(%arg0: i32) -> (i32, i32) {
    %c0_i32 = arith.constant 0 : i32
    %c0_i32_0 = arith.constant 0 : i32
    %c0_i32_1 = arith.constant 0 : i32
    return %c0_i32, %c0_i32_0 : i32, i32
  }
  func.func @transform_7(%arg0: i32) -> (i32, i32) {
    %c0_i32 = arith.constant 0 : i32
    %c0_i32_0 = arith.constant 0 : i32
    %c0_i32_1 = arith.constant 0 : i32
    return %c0_i32, %c0_i32_0 : i32, i32
  }
  func.func @transform_8(%arg0: i32) -> (i32, i32) {
    %c0_i32 = arith.constant 0 : i32
    %c0_i32_0 = arith.constant 0 : i32
    %c0_i32_1 = arith.constant 0 : i32
    return %c0_i32, %c0_i32_0 : i32, i32
  }
  func.func @transform_9(%arg0: i32) -> (i32, i32) {
    %c0_i32 = arith.constant 0 : i32
    %c0_i32_0 = arith.constant 0 : i32
    %c0_i32_1 = arith.constant 0 : i32
    return %c0_i32, %c0_i32_0 : i32, i32
  }
  func.func @transform_10(%arg0: i32) -> (i32, i32) {
    %c0_i32 = arith.constant 0 : i32
    %c0_i32_0 = arith.constant 0 : i32
    %c0_i32_1 = arith.constant 0 : i32
    return %c0_i32, %c0_i32_0 : i32, i32
  }
  func.func @transform_11(%arg0: i32) -> (i32, i32) {
    %c0_i32 = arith.constant 0 : i32
    %c0_i32_0 = arith.constant 0 : i32
    %c0_i32_1 = arith.constant 0 : i32
    return %c0_i32, %c0_i32_0 : i32, i32
  }
  func.func @transform_12(%arg0: i32) -> (i32, i32) {
    %c0_i32 = arith.constant 0 : i32
    %c0_i32_0 = arith.constant 0 : i32
    %c0_i32_1 = arith.constant 0 : i32
    return %c0_i32, %c0_i32_0 : i32, i32
  }
  func.func @transform_13(%arg0: i32) -> (i32, i32) {
    %c0_i32 = arith.constant 0 : i32
    %c0_i32_0 = arith.constant 0 : i32
    %c0_i32_1 = arith.constant 0 : i32
    return %c0_i32, %c0_i32_0 : i32, i32
  }
  func.func @transform_14(%arg0: i32) -> (i32, i32) {
    %c0_i32 = arith.constant 0 : i32
    %c0_i32_0 = arith.constant 0 : i32
    %c0_i32_1 = arith.constant 0 : i32
    return %c0_i32, %c0_i32_0 : i32, i32
  }
  func.func @transform_15(%arg0: i32) -> (i32, i32) {
    %c0_i32 = arith.constant 0 : i32
    %c0_i32_0 = arith.constant 0 : i32
    %c0_i32_1 = arith.constant 0 : i32
    return %c0_i32, %c0_i32_0 : i32, i32
  }
  func.func @transform_16(%arg0: i32) -> (i32, i32) {
    %c0_i32 = arith.constant 0 : i32
    %c0_i32_0 = arith.constant 0 : i32
    %c0_i32_1 = arith.constant 0 : i32
    return %c0_i32, %c0_i32_0 : i32, i32
  }
  func.func @transform_17(%arg0: i32) -> (i32, i32) {
    %c0_i32 = arith.constant 0 : i32
    %c0_i32_0 = arith.constant 0 : i32
    %c0_i32_1 = arith.constant 0 : i32
    return %c0_i32, %c0_i32_0 : i32, i32
  }
  func.func @transform_18(%arg0: i32) -> (i32, i32) {
    %c0_i32 = arith.constant 0 : i32
    %c0_i32_0 = arith.constant 0 : i32
    %c0_i32_1 = arith.constant 0 : i32
    return %c0_i32, %c0_i32_0 : i32, i32
  }
  func.func @transform_19(%arg0: i32) -> (i32, i32) {
    %c0_i32 = arith.constant 0 : i32
    %c0_i32_0 = arith.constant 0 : i32
    return %arg0, %c0_i32 : i32, i32
  }
}

</mosaic_0001>

<llo_original>
// kernel: tpu_custom_call.1
$region0: #{tpu_custom_call.1}
  #allocation0 [shape = 'u32[]', space=smem, size = 0x4, offset = 0x4, fixed_abs, tag = 'smem constant byte address 0x4 - core index']
  #allocation1 [shape = 'u32[72,128]{1,0:T(1,128)}', space=vmem, size = 0x9000, scoped, tag = 'internal scratch']
  %s0 = inlined_call_operand.hbm [shape: f32[16,1024], index: 0, kind: input, shape index: {}]
  %s1 = inlined_call_operand.hbm [shape: bf16[1024,1024], index: 1, kind: input, shape index: {}]
  %s2 = inlined_call_operand.hbm [shape: f32[1,1024], index: 2, kind: input, shape index: {}]
  %s3 = inlined_call_operand.hbm [shape: bf16[1024,128], index: 3, kind: input, shape index: {}]
  %s4 = inlined_call_operand.hbm [shape: f32[1,128], index: 4, kind: input, shape index: {}]
  %s5 = inlined_call_operand.hbm [shape: bf16[128,128], index: 5, kind: input, shape index: {}]
  %s6 = inlined_call_operand.hbm [shape: f32[1,128], index: 6, kind: input, shape index: {}]
  %s7 = inlined_call_operand.hbm [shape: f32[1,128], index: 7, kind: input, shape index: {}]
  %s8 = inlined_call_operand.hbm [shape: f32[1,128], index: 8, kind: input, shape index: {}]
  %s9 = inlined_call_operand.hbm [shape: bf16[128,256], index: 9, kind: input, shape index: {}]
  %s10 = inlined_call_operand.hbm [shape: f32[1,256], index: 10, kind: input, shape index: {}]
  %s11 = inlined_call_operand.hbm [shape: bf16[256,128], index: 11, kind: input, shape index: {}]
  %s12 = inlined_call_operand.hbm [shape: f32[1,128], index: 12, kind: input, shape index: {}]
  %s13 = inlined_call_operand.hbm [shape: f32[1,128], index: 13, kind: input, shape index: {}]
  %s14 = inlined_call_operand.hbm [shape: f32[1,128], index: 14, kind: input, shape index: {}]
  %s15 = inlined_call_operand.hbm [shape: bf16[128,512], index: 15, kind: input, shape index: {}]
  %s16 = inlined_call_operand.hbm [shape: f32[1,512], index: 16, kind: input, shape index: {}]
  %s17 = inlined_call_operand.hbm [shape: bf16[512,128], index: 17, kind: input, shape index: {}]
  %s18 = inlined_call_operand.hbm [shape: f32[1,128], index: 18, kind: input, shape index: {}]
  %s19 = inlined_call_operand.hbm [shape: f32[16,128], index: 19, kind: output, shape index: {}]
  %s20 = sld [smem:[#allocation0]]
  $region162: #{tpu_custom_call.1} parent=0
    _
  %s22 = ssub.s32 1, %s20
  %s23 = scalar_select 0, %s22, %s20
  $region1: #{tpu_custom_call.1} parent=0
    #allocation2 [shape = 'u8[65536]{0}', space=vmem, size = 0x10000, scoped, tag = 'input window, operand 0, single buffered']
    #allocation3 [shape = 's32[1]{0}', space=sflag, size = 0x4, scoped, tag = 'scoped memory for tpu_custom_call.1']
    #allocation4 [shape = 's32[1]{0}', space=sflag, size = 0x4, scoped, tag = 'scoped memory for tpu_custom_call.1']
    #allocation5 [shape = 'u8[2097152]{0}', space=vmem, size = 0x200000, scoped, tag = 'input window, operand 1, single buffered']
    #allocation6 [shape = 's32[1]{0}', space=sflag, size = 0x4, scoped, tag = 'scoped memory for tpu_custom_call.1']
    #allocation7 [shape = 'u8[4096]{0}', space=vmem, size = 0x1000, scoped, tag = 'input window, operand 2, single buffered']
    #allocation8 [shape = 'u8[262144]{0}', space=vmem, size = 0x40000, scoped, tag = 'input window, operand 3, single buffered']
    #allocation9 [shape = 's32[1]{0}', space=sflag, size = 0x4, scoped, tag = 'scoped memory for tpu_custom_call.1']
    #allocation10 [shape = 'u8[512]{0}', space=vmem, size = 0x400, scoped, tag = 'input window, operand 4, single buffered']
    #allocation11 [shape = 'u8[32768]{0}', space=vmem, size = 0x8000, scoped, tag = 'input window, operand 5, single buffered']
    #allocation12 [shape = 's32[1]{0}', space=sflag, size = 0x4, scoped, tag = 'scoped memory for tpu_custom_call.1']
    #allocation13 [shape = 'u8[512]{0}', space=vmem, size = 0x400, scoped, tag = 'input window, operand 6, single buffered']
    #allocation14 [shape = 'u8[512]{0}', space=vmem, size = 0x400, scoped, tag = 'input window, operand 7, single buffered']
    #allocation15 [shape = 's32[1]{0}', space=sflag, size = 0x4, scoped, tag = 'scoped memory for tpu_custom_call.1']
    #allocation16 [shape = 'u8[512]{0}', space=vmem, size = 0x400, scoped, tag = 'input window, operand 8, single buffered']
    #allocation17 [shape = 'u8[65536]{0}', space=vmem, size = 0x10000, scoped, tag = 'input window, operand 9, single buffered']
    #allocation18 [shape = 's32[1]{0}', space=sflag, size = 0x4, scoped, tag = 'scoped memory for tpu_custom_call.1']
    #allocation19 [shape = 'u8[1024]{0}', space=vmem, size = 0x400, scoped, tag = 'input window, operand 10, single buffered']
    #allocation20 [shape = 'u8[65536]{0}', space=vmem, size = 0x10000, scoped, tag = 'input window, operand 11, single buffered']
    #allocation21 [shape = 's32[1]{0}', space=sflag, size = 0x4, scoped, tag = 'scoped memory for tpu_custom_call.1']
    #allocation22 [shape = 'u8[512]{0}', space=vmem, size = 0x400, scoped, tag = 'input window, operand 12, single buffered']
    #allocation23 [shape = 'u8[512]{0}', space=vmem, size = 0x400, scoped, tag = 'input window, operand 13, single buffered']
    #allocation24 [shape = 's32[1]{0}', space=sflag, size = 0x4, scoped, tag = 'scoped memory for tpu_custom_call.1']
    #allocation25 [shape = 'u8[512]{0}', space=vmem, size = 0x400, scoped, tag = 'input window, operand 14, single buffered']
    #allocation26 [shape = 'u8[131072]{0}', space=vmem, size = 0x20000, scoped, tag = 'input window, operand 15, single buffered']
    #allocation27 [shape = 's32[1]{0}', space=sflag, size = 0x4, scoped, tag = 'scoped memory for tpu_custom_call.1']
    #allocation28 [shape = 'u8[2048]{0}', space=vmem, size = 0x800, scoped, tag = 'input window, operand 16, single buffered']
    #allocation29 [shape = 'u8[131072]{0}', space=vmem, size = 0x20000, scoped, tag = 'input window, operand 17, single buffered']
    #allocation30 [shape = 's32[1]{0}', space=sflag, size = 0x4, scoped, tag = 'scoped memory for tpu_custom_call.1']
    #allocation31 [shape = 'u8[512]{0}', space=vmem, size = 0x400, scoped, tag = 'input window, operand 18, single buffered']
    #allocation32 [shape = 'u8[8192]{0}', space=vmem, size = 0x2000, scoped, tag = 'output window, operand 0, single buffered']
    %24 = vsyncpa [#allocation3], 0
    %25 = vsyncpa [#allocation6], 0
    %26 = vsyncpa [#allocation9], 0
    %27 = vsyncpa [#allocation12], 0
    %28 = vsyncpa [#allocation15], 0
    %29 = vsyncpa [#allocation18], 0
    %30 = vsyncpa [#allocation21], 0
    %31 = vsyncpa [#allocation24], 0
    %32 = vsyncpa [#allocation27], 0
    %33 = vsyncpa [#allocation30], 0
    %34 = vsyncpa [#allocation4], 0
    // Predicated region
    $region2: #{tpu_custom_call.1} parent=1 // pred_check
      _
    $region3: #{tpu_custom_call.1} parent=1 // pred_check_branch
      %36 = sbr.rel (0) target = $region5
    $region4: #{tpu_custom_call.1} parent=1 // pred_region
      %38 = vsyncadd [#allocation3], 0
      %s39 = sshll.u32 %s0, 4
      %s40 = int_to_ptr.hbm [resolvable:$true] %s39
      %s41 = sshll.u32 [#allocation2], 4
      %s42 = int_to_ptr.vmem [resolvable:$true] %s41
      %47 = dma.hbm_to_vmem [thread:$0]  %s40, 2048, %s42, [#allocation3], 1024, 1024, 64
    $region5: #{tpu_custom_call.1} parent=1 // pred_fallthru
      _
    // Predicated region
    $region6: #{tpu_custom_call.1} parent=1 // pred_check
      _
    $region7: #{tpu_custom_call.1} parent=1 // pred_check_branch
      %49 = sbr.rel (0) target = $region9
    $region8: #{tpu_custom_call.1} parent=1 // pred_region
      %51 = vsyncadd [#allocation6], 0
      %s52 = sshll.u32 %s1, 4
      %s53 = int_to_ptr.hbm [resolvable:$true] %s52
      %s54 = sshll.u32 [#allocation5], 4
      %s55 = int_to_ptr.vmem [resolvable:$true] %s54
      %60 = dma.hbm_to_vmem [thread:$0]  %s53, 65536, %s55, [#allocation6], 512, 512, 32
    $region9: #{tpu_custom_call.1} parent=1 // pred_fallthru
      _
    // Predicated region
    $region10: #{tpu_custom_call.1} parent=1 // pred_check
      _
    $region11: #{tpu_custom_call.1} parent=1 // pred_check_branch
      %62 = sbr.rel (0) target = $region13
    $region12: #{tpu_custom_call.1} parent=1 // pred_region
      %64 = vsyncadd [#allocation6], 0
      %s66 = sshll.u32 %s2, 4
      %s67 = int_to_ptr.hbm [resolvable:$true] %s66
      %s68 = sshll.u32 [#allocation7], 4
      %s69 = int_to_ptr.vmem [resolvable:$true] %s68
      %71 = dma.hbm_to_vmem [thread:$0]  %s67, 128, %s69, [#allocation6]
    $region13: #{tpu_custom_call.1} parent=1 // pred_fallthru
      _
    // Predicated region
    $region14: #{tpu_custom_call.1} parent=1 // pred_check
      _
    $region15: #{tpu_custom_call.1} parent=1 // pred_check_branch
      %73 = sbr.rel (0) target = $region17
    $region16: #{tpu_custom_call.1} parent=1 // pred_region
      %75 = vsyncadd [#allocation9], 0
      %s76 = sshll.u32 %s3, 4
      %s77 = int_to_ptr.hbm [resolvable:$true] %s76
      %s78 = sshll.u32 [#allocation8], 4
      %s79 = int_to_ptr.vmem [resolvable:$true] %s78
      %84 = dma.hbm_to_vmem [thread:$0]  %s77, 8192, %s79, [#allocation9], 64, 64, 4
    $region17: #{tpu_custom_call.1} parent=1 // pred_fallthru
      _
    // Predicated region
    $region18: #{tpu_custom_call.1} parent=1 // pred_check
      _
    $region19: #{tpu_custom_call.1} parent=1 // pred_check_branch
      %86 = sbr.rel (0) target = $region21
    $region20: #{tpu_custom_call.1} parent=1 // pred_region
      %88 = vsyncadd [#allocation9], 0
      %s90 = sshll.u32 %s4, 4
      %s91 = int_to_ptr.hbm [resolvable:$true] %s90
      %s92 = sshll.u32 [#allocation10], 4
      %s93 = int_to_ptr.vmem [resolvable:$true] %s92
      %95 = dma.hbm_to_vmem [thread:$0]  %s91, 16, %s93, [#allocation9]
    $region21: #{tpu_custom_call.1} parent=1 // pred_fallthru
      _
    // Predicated region
    $region22: #{tpu_custom_call.1} parent=1 // pred_check
      _
    $region23: #{tpu_custom_call.1} parent=1 // pred_check_branch
      %97 = sbr.rel (0) target = $region25
    $region24: #{tpu_custom_call.1} parent=1 // pred_region
      %99 = vsyncadd [#allocation12], 0
      %s100 = sshll.u32 %s5, 4
      %s101 = int_to_ptr.hbm [resolvable:$true] %s100
      %s102 = sshll.u32 [#allocation11], 4
      %s103 = int_to_ptr.vmem [resolvable:$true] %s102
      %108 = dma.hbm_to_vmem [thread:$0]  %s101, 1024, %s103, [#allocation12], 64, 64, 4
    $region25: #{tpu_custom_call.1} parent=1 // pred_fallthru
      _
    // Predicated region
    $region26: #{tpu_custom_call.1} parent=1 // pred_check
      _
    $region27: #{tpu_custom_call.1} parent=1 // pred_check_branch
      %110 = sbr.rel (0) target = $region29
    $region28: #{tpu_custom_call.1} parent=1 // pred_region
      %112 = vsyncadd [#allocation12], 0
      %s114 = sshll.u32 %s6, 4
      %s115 = int_to_ptr.hbm [resolvable:$true] %s114
      %s116 = sshll.u32 [#allocation13], 4
      %s117 = int_to_ptr.vmem [resolvable:$true] %s116
      %119 = dma.hbm_to_vmem [thread:$0]  %s115, 16, %s117, [#allocation12]
    $region29: #{tpu_custom_call.1} parent=1 // pred_fallthru
      _
    // Predicated region
    $region30: #{tpu_custom_call.1} parent=1 // pred_check
      _
    $region31: #{tpu_custom_call.1} parent=1 // pred_check_branch
      %121 = sbr.rel (0) target = $region33
    $region32: #{tpu_custom_call.1} parent=1 // pred_region
      %123 = vsyncadd [#allocation15], 0
      %s125 = sshll.u32 %s7, 4
      %s126 = int_to_ptr.hbm [resolvable:$true] %s125
      %s127 = sshll.u32 [#allocation14], 4
      %s128 = int_to_ptr.vmem [resolvable:$true] %s127
      %130 = dma.hbm_to_vmem [thread:$0]  %s126, 16, %s128, [#allocation15]
    $region33: #{tpu_custom_call.1} parent=1 // pred_fallthru
      _
    // Predicated region
    $region34: #{tpu_custom_call.1} parent=1 // pred_check
      _
    $region35: #{tpu_custom_call.1} parent=1 // pred_check_branch
      %132 = sbr.rel (0) target = $region37
    $region36: #{tpu_custom_call.1} parent=1 // pred_region
      %134 = vsyncadd [#allocation15], 0
      %s136 = sshll.u32 %s8, 4
      %s137 = int_to_ptr.hbm [resolvable:$true] %s136
      %s138 = sshll.u32 [#allocation16], 4
      %s139 = int_to_ptr.vmem [resolvable:$true] %s138
      %141 = dma.hbm_to_vmem [thread:$0]  %s137, 16, %s139, [#allocation15]
    $region37: #{tpu_custom_call.1} parent=1 // pred_fallthru
      _
    // Predicated region
    $region38: #{tpu_custom_call.1} parent=1 // pred_check
      _
    $region39: #{tpu_custom_call.1} parent=1 // pred_check_branch
      %143 = sbr.rel (0) target = $region41
    $region40: #{tpu_custom_call.1} parent=1 // pred_region
      %145 = vsyncadd [#allocation18], 0
      %s146 = sshll.u32 %s9, 4
      %s147 = int_to_ptr.hbm [resolvable:$true] %s146
      %s148 = sshll.u32 [#allocation17], 4
      %s149 = int_to_ptr.vmem [resolvable:$true] %s148
      %154 = dma.hbm_to_vmem [thread:$0]  %s147, 2048, %s149, [#allocation18], 128, 128, 8
    $region41: #{tpu_custom_call.1} parent=1 // pred_fallthru
      _
    // Predicated region
    $region42: #{tpu_custom_call.1} parent=1 // pred_check
      _
    $region43: #{tpu_custom_call.1} parent=1 // pred_check_branch
      %156 = sbr.rel (0) target = $region45
    $region44: #{tpu_custom_call.1} parent=1 // pred_region
      %158 = vsyncadd [#allocation18], 0
      %s160 = sshll.u32 %s10, 4
      %s161 = int_to_ptr.hbm [resolvable:$true] %s160
      %s162 = sshll.u32 [#allocation19], 4
      %s163 = int_to_ptr.vmem [resolvable:$true] %s162
      %165 = dma.hbm_to_vmem [thread:$0]  %s161, 32, %s163, [#allocation18]
    $region45: #{tpu_custom_call.1} parent=1 // pred_fallthru
      _
    // Predicated region
    $region46: #{tpu_custom_call.1} parent=1 // pred_check
      _
    $region47: #{tpu_custom_call.1} parent=1 // pred_check_branch
      %167 = sbr.rel (0) target = $region49
    $region48: #{tpu_custom_call.1} parent=1 // pred_region
      %169 = vsyncadd [#allocation21], 0
      %s170 = sshll.u32 %s11, 4
      %s171 = int_to_ptr.hbm [resolvable:$true] %s170
      %s172 = sshll.u32 [#allocation20], 4
      %s173 = int_to_ptr.vmem [resolvable:$true] %s172
      %178 = dma.hbm_to_vmem [thread:$0]  %s171, 2048, %s173, [#allocation21], 64, 64, 4
    $region49: #{tpu_custom_call.1} parent=1 // pred_fallthru
      _
    // Predicated region
    $region50: #{tpu_custom_call.1} parent=1 // pred_check
      _
    $region51: #{tpu_custom_call.1} parent=1 // pred_check_branch
      %180 = sbr.rel (0) target = $region53
    $region52: #{tpu_custom_call.1} parent=1 // pred_region
      %182 = vsyncadd [#allocation21], 0
      %s184 = sshll.u32 %s12, 4
      %s185 = int_to_ptr.hbm [resolvable:$true] %s184
      %s186 = sshll.u32 [#allocation22], 4
      %s187 = int_to_ptr.vmem [resolvable:$true] %s186
      %189 = dma.hbm_to_vmem [thread:$0]  %s185, 16, %s187, [#allocation21]
    $region53: #{tpu_custom_call.1} parent=1 // pred_fallthru
      _
    // Predicated region
    $region54: #{tpu_custom_call.1} parent=1 // pred_check
      _
    $region55: #{tpu_custom_call.1} parent=1 // pred_check_branch
      %191 = sbr.rel (0) target = $region57
    $region56: #{tpu_custom_call.1} parent=1 // pred_region
      %193 = vsyncadd [#allocation24], 0
      %s195 = sshll.u32 %s13, 4
      %s196 = int_to_ptr.hbm [resolvable:$true] %s195
      %s197 = sshll.u32 [#allocation23], 4
      %s198 = int_to_ptr.vmem [resolvable:$true] %s197
      %200 = dma.hbm_to_vmem [thread:$0]  %s196, 16, %s198, [#allocation24]
    $region57: #{tpu_custom_call.1} parent=1 // pred_fallthru
      _
    // Predicated region
    $region58: #{tpu_custom_call.1} parent=1 // pred_check
      _
    $region59: #{tpu_custom_call.1} parent=1 // pred_check_branch
      %202 = sbr.rel (0) target = $region61
    $region60: #{tpu_custom_call.1} parent=1 // pred_region
      %204 = vsyncadd [#allocation24], 0
      %s206 = sshll.u32 %s14, 4
      %s207 = int_to_ptr.hbm [resolvable:$true] %s206
      %s208 = sshll.u32 [#allocation25], 4
      %s209 = int_to_ptr.vmem [resolvable:$true] %s208
      %211 = dma.hbm_to_vmem [thread:$0]  %s207, 16, %s209, [#allocation24]
    $region61: #{tpu_custom_call.1} parent=1 // pred_fallthru
      _
    // Predicated region
    $region62: #{tpu_custom_call.1} parent=1 // pred_check
      _
    $region63: #{tpu_custom_call.1} parent=1 // pred_check_branch
      %213 = sbr.rel (0) target = $region65
    $region64: #{tpu_custom_call.1} parent=1 // pred_region
      %215 = vsyncadd [#allocation27], 0
      %s216 = sshll.u32 %s15, 4
      %s217 = int_to_ptr.hbm [resolvable:$true] %s216
      %s218 = sshll.u32 [#allocation26], 4
      %s219 = int_to_ptr.vmem [resolvable:$true] %s218
      %224 = dma.hbm_to_vmem [thread:$0]  %s217, 4096, %s219, [#allocation27], 256, 256, 16
    $region65: #{tpu_custom_call.1} parent=1 // pred_fallthru
      _
    // Predicated region
    $region66: #{tpu_custom_call.1} parent=1 // pred_check
      _
    $region67: #{tpu_custom_call.1} parent=1 // pred_check_branch
      %226 = sbr.rel (0) target = $region69
    $region68: #{tpu_custom_call.1} parent=1 // pred_region
      %228 = vsyncadd [#allocation27], 0
      %s230 = sshll.u32 %s16, 4
      %s231 = int_to_ptr.hbm [resolvable:$true] %s230
      %s232 = sshll.u32 [#allocation28], 4
      %s233 = int_to_ptr.vmem [resolvable:$true] %s232
      %235 = dma.hbm_to_vmem [thread:$0]  %s231, 64, %s233, [#allocation27]
    $region69: #{tpu_custom_call.1} parent=1 // pred_fallthru
      _
    // Predicated region
    $region70: #{tpu_custom_call.1} parent=1 // pred_check
      _
    $region71: #{tpu_custom_call.1} parent=1 // pred_check_branch
      %237 = sbr.rel (0) target = $region73
    $region72: #{tpu_custom_call.1} parent=1 // pred_region
      %239 = vsyncadd [#allocation30], 0
      %s240 = sshll.u32 %s17, 4
      %s241 = int_to_ptr.hbm [resolvable:$true] %s240
      %s242 = sshll.u32 [#allocation29], 4
      %s243 = int_to_ptr.vmem [resolvable:$true] %s242
      %248 = dma.hbm_to_vmem [thread:$0]  %s241, 4096, %s243, [#allocation30], 64, 64, 4
    $region73: #{tpu_custom_call.1} parent=1 // pred_fallthru
      _
    // Predicated region
    $region74: #{tpu_custom_call.1} parent=1 // pred_check
      _
    $region75: #{tpu_custom_call.1} parent=1 // pred_check_branch
      %250 = sbr.rel (0) target = $region77
    $region76: #{tpu_custom_call.1} parent=1 // pred_region
      %252 = vsyncadd [#allocation30], 0
      %s254 = sshll.u32 %s18, 4
      %s255 = int_to_ptr.hbm [resolvable:$true] %s254
      %s256 = sshll.u32 [#allocation31], 4
      %s257 = int_to_ptr.vmem [resolvable:$true] %s256
      %259 = dma.hbm_to_vmem [thread:$0]  %s255, 16, %s257, [#allocation30]
    $region77: #{tpu_custom_call.1} parent=1 // pred_fallthru
      _
    // Predicated region
    $region78: #{tpu_custom_call.1} parent=1 // pred_check
      _
    $region79: #{tpu_custom_call.1} parent=1 // pred_check_branch
      %261 = sbr.rel (0) target = $region81
    $region80: #{tpu_custom_call.1} parent=1 // pred_region
      %263 = dma.done [#allocation3], 2048
    $region81: #{tpu_custom_call.1} parent=1 // pred_fallthru
      _
    // Predicated region
    $region82: #{tpu_custom_call.1} parent=1 // pred_check
      _
    $region83: #{tpu_custom_call.1} parent=1 // pred_check_branch
      %265 = sbr.rel (0) target = $region85
    $region84: #{tpu_custom_call.1} parent=1 // pred_region
      %267 = dma.done [#allocation6], 65536
    $region85: #{tpu_custom_call.1} parent=1 // pred_fallthru
      _
    // Predicated region
    $region86: #{tpu_custom_call.1} parent=1 // pred_check
      _
    $region87: #{tpu_custom_call.1} parent=1 // pred_check_branch
      %269 = sbr.rel (0) target = $region89
    $region88: #{tpu_custom_call.1} parent=1 // pred_region
      %271 = dma.done [#allocation6], 128
    $region89: #{tpu_custom_call.1} parent=1 // pred_fallthru
      _
    // Predicated region
    $region90: #{tpu_custom_call.1} parent=1 // pred_check
      _
    $region91: #{tpu_custom_call.1} parent=1 // pred_check_branch
      %273 = sbr.rel (0) target = $region93
    $region92: #{tpu_custom_call.1} parent=1 // pred_region
      %275 = dma.done [#allocation9], 8192
    $region93: #{tpu_custom_call.1} parent=1 // pred_fallthru
      _
    // Predicated region
    $region94: #{tpu_custom_call.1} parent=1 // pred_check
      _
    $region95: #{tpu_custom_call.1} parent=1 // pred_check_branch
      %277 = sbr.rel (0) target = $region97
    $region96: #{tpu_custom_call.1} parent=1 // pred_region
      %279 = dma.done [#allocation9], 16
    $region97: #{tpu_custom_call.1} parent=1 // pred_fallthru
      _
    // Predicated region
    $region98: #{tpu_custom_call.1} parent=1 // pred_check
      _
    $region99: #{tpu_custom_call.1} parent=1 // pred_check_branch
      %281 = sbr.rel (0) target = $region101
    $region100: #{tpu_custom_call.1} parent=1 // pred_region
      %283 = dma.done [#allocation12], 1024
    $region101: #{tpu_custom_call.1} parent=1 // pred_fallthru
      _
    // Predicated region
    $region102: #{tpu_custom_call.1} parent=1 // pred_check
      _
    $region103: #{tpu_custom_call.1} parent=1 // pred_check_branch
      %285 = sbr.rel (0) target = $region105
    $region104: #{tpu_custom_call.1} parent=1 // pred_region
      %287 = dma.done [#allocation12], 16
    $region105: #{tpu_custom_call.1} parent=1 // pred_fallthru
      _
    // Predicated region
    $region106: #{tpu_custom_call.1} parent=1 // pred_check
      _
    $region107: #{tpu_custom_call.1} parent=1 // pred_check_branch
      %289 = sbr.rel (0) target = $region109
    $region108: #{tpu_custom_call.1} parent=1 // pred_region
      %291 = dma.done [#allocation15], 16
    $region109: #{tpu_custom_call.1} parent=1 // pred_fallthru
      _
    // Predicated region
    $region110: #{tpu_custom_call.1} parent=1 // pred_check
      _
    $region111: #{tpu_custom_call.1} parent=1 // pred_check_branch
      %293 = sbr.rel (0) target = $region113
    $region112: #{tpu_custom_call.1} parent=1 // pred_region
      %295 = dma.done [#allocation15], 16
    $region113: #{tpu_custom_call.1} parent=1 // pred_fallthru
      _
    // Predicated region
    $region114: #{tpu_custom_call.1} parent=1 // pred_check
      _
    $region115: #{tpu_custom_call.1} parent=1 // pred_check_branch
      %297 = sbr.rel (0) target = $region117
    $region116: #{tpu_custom_call.1} parent=1 // pred_region
      %299 = dma.done [#allocation18], 2048
    $region117: #{tpu_custom_call.1} parent=1 // pred_fallthru
      _
    // Predicated region
    $region118: #{tpu_custom_call.1} parent=1 // pred_check
      _
    $region119: #{tpu_custom_call.1} parent=1 // pred_check_branch
      %301 = sbr.rel (0) target = $region121
    $region120: #{tpu_custom_call.1} parent=1 // pred_region
      %303 = dma.done [#allocation18], 32
    $region121: #{tpu_custom_call.1} parent=1 // pred_fallthru
      _
    // Predicated region
    $region122: #{tpu_custom_call.1} parent=1 // pred_check
      _
    $region123: #{tpu_custom_call.1} parent=1 // pred_check_branch
      %305 = sbr.rel (0) target = $region125
    $region124: #{tpu_custom_call.1} parent=1 // pred_region
      %307 = dma.done [#allocation21], 2048
    $region125: #{tpu_custom_call.1} parent=1 // pred_fallthru
      _
    // Predicated region
    $region126: #{tpu_custom_call.1} parent=1 // pred_check
      _
    $region127: #{tpu_custom_call.1} parent=1 // pred_check_branch
      %309 = sbr.rel (0) target = $region129
    $region128: #{tpu_custom_call.1} parent=1 // pred_region
      %311 = dma.done [#allocation21], 16
    $region129: #{tpu_custom_call.1} parent=1 // pred_fallthru
      _
    // Predicated region
    $region130: #{tpu_custom_call.1} parent=1 // pred_check
      _
    $region131: #{tpu_custom_call.1} parent=1 // pred_check_branch
      %313 = sbr.rel (0) target = $region133
    $region132: #{tpu_custom_call.1} parent=1 // pred_region
      %315 = dma.done [#allocation24], 16
    $region133: #{tpu_custom_call.1} parent=1 // pred_fallthru
      _
    // Predicated region
    $region134: #{tpu_custom_call.1} parent=1 // pred_check
      _
    $region135: #{tpu_custom_call.1} parent=1 // pred_check_branch
      %317 = sbr.rel (0) target = $region137
    $region136: #{tpu_custom_call.1} parent=1 // pred_region
      %319 = dma.done [#allocation24], 16
    $region137: #{tpu_custom_call.1} parent=1 // pred_fallthru
      _
    // Predicated region
    $region138: #{tpu_custom_call.1} parent=1 // pred_check
      _
    $region139: #{tpu_custom_call.1} parent=1 // pred_check_branch
      %321 = sbr.rel (0) target = $region141
    $region140: #{tpu_custom_call.1} parent=1 // pred_region
      %323 = dma.done [#allocation27], 4096
    $region141: #{tpu_custom_call.1} parent=1 // pred_fallthru
      _
    // Predicated region
    $region142: #{tpu_custom_call.1} parent=1 // pred_check
      _
    $region143: #{tpu_custom_call.1} parent=1 // pred_check_branch
      %325 = sbr.rel (0) target = $region145
    $region144: #{tpu_custom_call.1} parent=1 // pred_region
      %327 = dma.done [#allocation27], 64
    $region145: #{tpu_custom_call.1} parent=1 // pred_fallthru
      _
    // Predicated region
    $region146: #{tpu_custom_call.1} parent=1 // pred_check
      _
    $region147: #{tpu_custom_call.1} parent=1 // pred_check_branch
      %329 = sbr.rel (0) target = $region149
    $region148: #{tpu_custom_call.1} parent=1 // pred_region
      %331 = dma.done [#allocation30], 4096
    $region149: #{tpu_custom_call.1} parent=1 // pred_fallthru
      _
    // Predicated region
    $region150: #{tpu_custom_call.1} parent=1 // pred_check
      _
    $region151: #{tpu_custom_call.1} parent=1 // pred_check_branch
      %333 = sbr.rel (0) target = $region153
    $region152: #{tpu_custom_call.1} parent=1 // pred_region
      %335 = dma.done [#allocation30], 16
    $region153: #{tpu_custom_call.1} parent=1 // pred_fallthru
      _
    %v336 = vld [vmem:[#allocation2] sm:$0xff]
    %v337 = vld [vmem:[#allocation2 + $0x8] sm:$0xff]
    %v338 = vld [vmem:[#allocation2 + $0x10] sm:$0xff]
    %v339 = vld [vmem:[#allocation2 + $0x18] sm:$0xff]
    %v340 = vld [vmem:[#allocation2 + $0x20] sm:$0xff]
    %v341 = vld [vmem:[#allocation2 + $0x28] sm:$0xff]
    %v342 = vld [vmem:[#allocation2 + $0x30] sm:$0xff]
    %v343 = vld [vmem:[#allocation2 + $0x38] sm:$0xff]
    %v344 = vld [vmem:[#allocation2 + $0x40] sm:$0xff]
    %v345 = vld [vmem:[#allocation2 + $0x48] sm:$0xff]
    %v346 = vld [vmem:[#allocation2 + $0x50] sm:$0xff]
    %v347 = vld [vmem:[#allocation2 + $0x58] sm:$0xff]
    %v348 = vld [vmem:[#allocation2 + $0x60] sm:$0xff]
    %v349 = vld [vmem:[#allocation2 + $0x68] sm:$0xff]
    %v350 = vld [vmem:[#allocation2 + $0x70] sm:$0xff]
    %v351 = vld [vmem:[#allocation2 + $0x78] sm:$0xff]
    %v352 = vpack.c.bf16 %v344, %v336
    %v353 = vpack.c.bf16 %v345, %v337
    %v354 = vpack.c.bf16 %v346, %v338
    %v355 = vpack.c.bf16 %v347, %v339
    %v356 = vpack.c.bf16 %v348, %v340
    %v357 = vpack.c.bf16 %v349, %v341
    %v358 = vpack.c.bf16 %v350, %v342
    %v359 = vpack.c.bf16 %v351, %v343
    %v360 = vld [vmem:[#allocation5] sm:$0xff]
    %v361 = vld [vmem:[#allocation5 + $0x8] sm:$0xff]
    %v362 = vld [vmem:[#allocation5 + $0x10] sm:$0xff]
    %v363 = vld [vmem:[#allocation5 + $0x18] sm:$0xff]
    %v364 = vld [vmem:[#allocation5 + $0x20] sm:$0xff]
    %v365 = vld [vmem:[#allocation5 + $0x28] sm:$0xff]
    %v366 = vld [vmem:[#allocation5 + $0x30] sm:$0xff]
    %v367 = vld [vmem:[#allocation5 + $0x38] sm:$0xff]
    %v368 = vld [vmem:[#allocation5 + $0x40] sm:$0xff]
    %v369 = vld [vmem:[#allocation5 + $0x48] sm:$0xff]
    %v370 = vld [vmem:[#allocation5 + $0x50] sm:$0xff]
    %v371 = vld [vmem:[#allocation5 + $0x58] sm:$0xff]
    %v372 = vld [vmem:[#allocation5 + $0x60] sm:$0xff]
    %v373 = vld [vmem:[#allocation5 + $0x68] sm:$0xff]
    %v374 = vld [vmem:[#allocation5 + $0x70] sm:$0xff]
    %v375 = vld [vmem:[#allocation5 + $0x78] sm:$0xff]
    %v376 = vld [vmem:[#allocation5 + $0x80] sm:$0xff]
    %v377 = vld [vmem:[#allocation5 + $0x88] sm:$0xff]
    %v378 = vld [vmem:[#allocation5 + $0x90] sm:$0xff]
    %v379 = vld [vmem:[#allocation5 + $0x98] sm:$0xff]
    %v380 = vld [vmem:[#allocation5 + $0xa0] sm:$0xff]
    %v381 = vld [vmem:[#allocation5 + $0xa8] sm:$0xff]
    %v382 = vld [vmem:[#allocation5 + $0xb0] sm:$0xff]
    %v383 = vld [vmem:[#allocation5 + $0xb8] sm:$0xff]
    %v384 = vld [vmem:[#allocation5 + $0xc0] sm:$0xff]
    %v385 = vld [vmem:[#allocation5 + $0xc8] sm:$0xff]
    %v386 = vld [vmem:[#allocation5 + $0xd0] sm:$0xff]
    %v387 = vld [vmem:[#allocation5 + $0xd8] sm:$0xff]
    %v388 = vld [vmem:[#allocation5 + $0xe0] sm:$0xff]
    %v389 = vld [vmem:[#allocation5 + $0xe8] sm:$0xff]
    %v390 = vld [vmem:[#allocation5 + $0xf0] sm:$0xff]
    %v391 = vld [vmem:[#allocation5 + $0xf8] sm:$0xff]
    %v392 = vld [vmem:[#allocation5 + $0x100] sm:$0xff]
    %v393 = vld [vmem:[#allocation5 + $0x108] sm:$0xff]
    %v394 = vld [vmem:[#allocation5 + $0x110] sm:$0xff]
    %v395 = vld [vmem:[#allocation5 + $0x118] sm:$0xff]
    %v396 = vld [vmem:[#allocation5 + $0x120] sm:$0xff]
    %v397 = vld [vmem:[#allocation5 + $0x128] sm:$0xff]
    %v398 = vld [vmem:[#allocation5 + $0x130] sm:$0xff]
    %v399 = vld [vmem:[#allocation5 + $0x138] sm:$0xff]
    %v400 = vld [vmem:[#allocation5 + $0x140] sm:$0xff]
    %v401 = vld [vmem:[#allocation5 + $0x148] sm:$0xff]
    %v402 = vld [vmem:[#allocation5 + $0x150] sm:$0xff]
    %v403 = vld [vmem:[#allocation5 + $0x158] sm:$0xff]
    %v404 = vld [vmem:[#allocation5 + $0x160] sm:$0xff]
    %v405 = vld [vmem:[#allocation5 + $0x168] sm:$0xff]
    %v406 = vld [vmem:[#allocation5 + $0x170] sm:$0xff]
    %v407 = vld [vmem:[#allocation5 + $0x178] sm:$0xff]
    %v408 = vld [vmem:[#allocation5 + $0x180] sm:$0xff]
    %v409 = vld [vmem:[#allocation5 + $0x188] sm:$0xff]
    %v410 = vld [vmem:[#allocation5 + $0x190] sm:$0xff]
    %v411 = vld [vmem:[#allocation5 + $0x198] sm:$0xff]
    %v412 = vld [vmem:[#allocation5 + $0x1a0] sm:$0xff]
    %v413 = vld [vmem:[#allocation5 + $0x1a8] sm:$0xff]
    %v414 = vld [vmem:[#allocation5 + $0x1b0] sm:$0xff]
    %v415 = vld [vmem:[#allocation5 + $0x1b8] sm:$0xff]
    %v416 = vld [vmem:[#allocation5 + $0x1c0] sm:$0xff]
    %v417 = vld [vmem:[#allocation5 + $0x1c8] sm:$0xff]
    %v418 = vld [vmem:[#allocation5 + $0x1d0] sm:$0xff]
    %v419 = vld [vmem:[#allocation5 + $0x1d8] sm:$0xff]
    %v420 = vld [vmem:[#allocation5 + $0x1e0] sm:$0xff]
    %v421 = vld [vmem:[#allocation5 + $0x1e8] sm:$0xff]
    %v422 = vld [vmem:[#allocation5 + $0x1f0] sm:$0xff]
    %v423 = vld [vmem:[#allocation5 + $0x1f8] sm:$0xff]
    %v424 = vld [vmem:[#allocation5 + $0x200] sm:$0xff]
    %v425 = vld [vmem:[#allocation5 + $0x208] sm:$0xff]
    %v426 = vld [vmem:[#allocation5 + $0x210] sm:$0xff]
    %v427 = vld [vmem:[#allocation5 + $0x218] sm:$0xff]
    %v428 = vld [vmem:[#allocation5 + $0x220] sm:$0xff]
    %v429 = vld [vmem:[#allocation5 + $0x228] sm:$0xff]
    %v430 = vld [vmem:[#allocation5 + $0x230] sm:$0xff]
    %v431 = vld [vmem:[#allocation5 + $0x238] sm:$0xff]
    %v432 = vld [vmem:[#allocation5 + $0x240] sm:$0xff]
    %v433 = vld [vmem:[#allocation5 + $0x248] sm:$0xff]
    %v434 = vld [vmem:[#allocation5 + $0x250] sm:$0xff]
    %v435 = vld [vmem:[#allocation5 + $0x258] sm:$0xff]
    %v436 = vld [vmem:[#allocation5 + $0x260] sm:$0xff]
    %v437 = vld [vmem:[#allocation5 + $0x268] sm:$0xff]
    %v438 = vld [vmem:[#allocation5 + $0x270] sm:$0xff]
    %v439 = vld [vmem:[#allocation5 + $0x278] sm:$0xff]
    %v440 = vld [vmem:[#allocation5 + $0x280] sm:$0xff]
    %v441 = vld [vmem:[#allocation5 + $0x288] sm:$0xff]
    %v442 = vld [vmem:[#allocation5 + $0x290] sm:$0xff]
    %v443 = vld [vmem:[#allocation5 + $0x298] sm:$0xff]
    %v444 = vld [vmem:[#allocation5 + $0x2a0] sm:$0xff]
    %v445 = vld [vmem:[#allocation5 + $0x2a8] sm:$0xff]
    %v446 = vld [vmem:[#allocation5 + $0x2b0] sm:$0xff]
    %v447 = vld [vmem:[#allocation5 + $0x2b8] sm:$0xff]
    %v448 = vld [vmem:[#allocation5 + $0x2c0] sm:$0xff]
    %v449 = vld [vmem:[#allocation5 + $0x2c8] sm:$0xff]
    %v450 = vld [vmem:[#allocation5 + $0x2d0] sm:$0xff]
    %v451 = vld [vmem:[#allocation5 + $0x2d8] sm:$0xff]
    %v452 = vld [vmem:[#allocation5 + $0x2e0] sm:$0xff]
    %v453 = vld [vmem:[#allocation5 + $0x2e8] sm:$0xff]
    %v454 = vld [vmem:[#allocation5 + $0x2f0] sm:$0xff]
    %v455 = vld [vmem:[#allocation5 + $0x2f8] sm:$0xff]
    %v456 = vld [vmem:[#allocation5 + $0x300] sm:$0xff]
    %v457 = vld [vmem:[#allocation5 + $0x308] sm:$0xff]
    %v458 = vld [vmem:[#allocation5 + $0x310] sm:$0xff]
    %v459 = vld [vmem:[#allocation5 + $0x318] sm:$0xff]
    %v460 = vld [vmem:[#allocation5 + $0x320] sm:$0xff]
    %v461 = vld [vmem:[#allocation5 + $0x328] sm:$0xff]
    %v462 = vld [vmem:[#allocation5 + $0x330] sm:$0xff]
    %v463 = vld [vmem:[#allocation5 + $0x338] sm:$0xff]
    %v464 = vld [vmem:[#allocation5 + $0x340] sm:$0xff]
    %v465 = vld [vmem:[#allocation5 + $0x348] sm:$0xff]
    %v466 = vld [vmem:[#allocation5 + $0x350] sm:$0xff]
    %v467 = vld [vmem:[#allocation5 + $0x358] sm:$0xff]
    %v468 = vld [vmem:[#allocation5 + $0x360] sm:$0xff]
    %v469 = vld [vmem:[#allocation5 + $0x368] sm:$0xff]
    %v470 = vld [vmem:[#allocation5 + $0x370] sm:$0xff]
    %v471 = vld [vmem:[#allocation5 + $0x378] sm:$0xff]
    %v472 = vld [vmem:[#allocation5 + $0x380] sm:$0xff]
    %v473 = vld [vmem:[#allocation5 + $0x388] sm:$0xff]
    %v474 = vld [vmem:[#allocation5 + $0x390] sm:$0xff]
    %v475 = vld [vmem:[#allocation5 + $0x398] sm:$0xff]
    %v476 = vld [vmem:[#allocation5 + $0x3a0] sm:$0xff]
    %v477 = vld [vmem:[#allocation5 + $0x3a8] sm:$0xff]
    %v478 = vld [vmem:[#allocation5 + $0x3b0] sm:$0xff]
    %v479 = vld [vmem:[#allocation5 + $0x3b8] sm:$0xff]
    %v480 = vld [vmem:[#allocation5 + $0x3c0] sm:$0xff]
    %v481 = vld [vmem:[#allocation5 + $0x3c8] sm:$0xff]
    %v482 = vld [vmem:[#allocation5 + $0x3d0] sm:$0xff]
    %v483 = vld [vmem:[#allocation5 + $0x3d8] sm:$0xff]
    %v484 = vld [vmem:[#allocation5 + $0x3e0] sm:$0xff]
    %v485 = vld [vmem:[#allocation5 + $0x3e8] sm:$0xff]
    %v486 = vld [vmem:[#allocation5 + $0x3f0] sm:$0xff]
    %v487 = vld [vmem:[#allocation5 + $0x3f8] sm:$0xff]
    %v488 = vld [vmem:[#allocation5 + $0x400] sm:$0xff]
    %v489 = vld [vmem:[#allocation5 + $0x408] sm:$0xff]
    %v490 = vld [vmem:[#allocation5 + $0x410] sm:$0xff]
    %v491 = vld [vmem:[#allocation5 + $0x418] sm:$0xff]
    %v492 = vld [vmem:[#allocation5 + $0x420] sm:$0xff]
    %v493 = vld [vmem:[#allocation5 + $0x428] sm:$0xff]
    %v494 = vld [vmem:[#allocation5 + $0x430] sm:$0xff]
    %v495 = vld [vmem:[#allocation5 + $0x438] sm:$0xff]
    %v496 = vld [vmem:[#allocation5 + $0x440] sm:$0xff]
    %v497 = vld [vmem:[#allocation5 + $0x448] sm:$0xff]
    %v498 = vld [vmem:[#allocation5 + $0x450] sm:$0xff]
    %v499 = vld [vmem:[#allocation5 + $0x458] sm:$0xff]
    %v500 = vld [vmem:[#allocation5 + $0x460] sm:$0xff]
    %v501 = vld [vmem:[#allocation5 + $0x468] sm:$0xff]
    %v502 = vld [vmem:[#allocation5 + $0x470] sm:$0xff]
    %v503 = vld [vmem:[#allocation5 + $0x478] sm:$0xff]
    %v504 = vld [vmem:[#allocation5 + $0x480] sm:$0xff]
    %v505 = vld [vmem:[#allocation5 + $0x488] sm:$0xff]
    %v506 = vld [vmem:[#allocation5 + $0x490] sm:$0xff]
    %v507 = vld [vmem:[#allocation5 + $0x498] sm:$0xff]
    %v508 = vld [vmem:[#allocation5 + $0x4a0] sm:$0xff]
    %v509 = vld [vmem:[#allocation5 + $0x4a8] sm:$0xff]
    %v510 = vld [vmem:[#allocation5 + $0x4b0] sm:$0xff]
    %v511 = vld [vmem:[#allocation5 + $0x4b8] sm:$0xff]
    %v512 = vld [vmem:[#allocation5 + $0x4c0] sm:$0xff]
    %v513 = vld [vmem:[#allocation5 + $0x4c8] sm:$0xff]
    %v514 = vld [vmem:[#allocation5 + $0x4d0] sm:$0xff]
    %v515 = vld [vmem:[#allocation5 + $0x4d8] sm:$0xff]
    %v516 = vld [vmem:[#allocation5 + $0x4e0] sm:$0xff]
    %v517 = vld [vmem:[#allocation5 + $0x4e8] sm:$0xff]
    %v518 = vld [vmem:[#allocation5 + $0x4f0] sm:$0xff]
    %v519 = vld [vmem:[#allocation5 + $0x4f8] sm:$0xff]
    %v520 = vld [vmem:[#allocation5 + $0x500] sm:$0xff]
    %v521 = vld [vmem:[#allocation5 + $0x508] sm:$0xff]
    %v522 = vld [vmem:[#allocation5 + $0x510] sm:$0xff]
    %v523 = vld [vmem:[#allocation5 + $0x518] sm:$0xff]
    %v524 = vld [vmem:[#allocation5 + $0x520] sm:$0xff]
    %v525 = vld [vmem:[#allocation5 + $0x528] sm:$0xff]
    %v526 = vld [vmem:[#allocation5 + $0x530] sm:$0xff]
    %v527 = vld [vmem:[#allocation5 + $0x538] sm:$0xff]
    %v528 = vld [vmem:[#allocation5 + $0x540] sm:$0xff]
    %v529 = vld [vmem:[#allocation5 + $0x548] sm:$0xff]
    %v530 = vld [vmem:[#allocation5 + $0x550] sm:$0xff]
    %v531 = vld [vmem:[#allocation5 + $0x558] sm:$0xff]
    %v532 = vld [vmem:[#allocation5 + $0x560] sm:$0xff]
    %v533 = vld [vmem:[#allocation5 + $0x568] sm:$0xff]
    %v534 = vld [vmem:[#allocation5 + $0x570] sm:$0xff]
    %v535 = vld [vmem:[#allocation5 + $0x578] sm:$0xff]
    %v536 = vld [vmem:[#allocation5 + $0x580] sm:$0xff]
    %v537 = vld [vmem:[#allocation5 + $0x588] sm:$0xff]
    %v538 = vld [vmem:[#allocation5 + $0x590] sm:$0xff]
    %v539 = vld [vmem:[#allocation5 + $0x598] sm:$0xff]
    %v540 = vld [vmem:[#allocation5 + $0x5a0] sm:$0xff]
    %v541 = vld [vmem:[#allocation5 + $0x5a8] sm:$0xff]
    %v542 = vld [vmem:[#allocation5 + $0x5b0] sm:$0xff]
    %v543 = vld [vmem:[#allocation5 + $0x5b8] sm:$0xff]
    %v544 = vld [vmem:[#allocation5 + $0x5c0] sm:$0xff]
    %v545 = vld [vmem:[#allocation5 + $0x5c8] sm:$0xff]
    %v546 = vld [vmem:[#allocation5 + $0x5d0] sm:$0xff]
    %v547 = vld [vmem:[#allocation5 + $0x5d8] sm:$0xff]
    %v548 = vld [vmem:[#allocation5 + $0x5e0] sm:$0xff]
    %v549 = vld [vmem:[#allocation5 + $0x5e8] sm:$0xff]
    %v550 = vld [vmem:[#allocation5 + $0x5f0] sm:$0xff]
    %v551 = vld [vmem:[#allocation5 + $0x5f8] sm:$0xff]
    %v552 = vld [vmem:[#allocation5 + $0x600] sm:$0xff]
    %v553 = vld [vmem:[#allocation5 + $0x608] sm:$0xff]
    %v554 = vld [vmem:[#allocation5 + $0x610] sm:$0xff]
    %v555 = vld [vmem:[#allocation5 + $0x618] sm:$0xff]
    %v556 = vld [vmem:[#allocation5 + $0x620] sm:$0xff]
    %v557 = vld [vmem:[#allocation5 + $0x628] sm:$0xff]
    %v558 = vld [vmem:[#allocation5 + $0x630] sm:$0xff]
    %v559 = vld [vmem:[#allocation5 + $0x638] sm:$0xff]
    %v560 = vld [vmem:[#allocation5 + $0x640] sm:$0xff]
    %v561 = vld [vmem:[#allocation5 + $0x648] sm:$0xff]
    %v562 = vld [vmem:[#allocation5 + $0x650] sm:$0xff]
    %v563 = vld [vmem:[#allocation5 + $0x658] sm:$0xff]
    %v564 = vld [vmem:[#allocation5 + $0x660] sm:$0xff]
    %v565 = vld [vmem:[#allocation5 + $0x668] sm:$0xff]
    %v566 = vld [vmem:[#allocation5 + $0x670] sm:$0xff]
    %v567 = vld [vmem:[#allocation5 + $0x678] sm:$0xff]
    %v568 = vld [vmem:[#allocation5 + $0x680] sm:$0xff]
    %v569 = vld [vmem:[#allocation5 + $0x688] sm:$0xff]
    %v570 = vld [vmem:[#allocation5 + $0x690] sm:$0xff]
    %v571 = vld [vmem:[#allocation5 + $0x698] sm:$0xff]
    %v572 = vld [vmem:[#allocation5 + $0x6a0] sm:$0xff]
    %v573 = vld [vmem:[#allocation5 + $0x6a8] sm:$0xff]
    %v574 = vld [vmem:[#allocation5 + $0x6b0] sm:$0xff]
    %v575 = vld [vmem:[#allocation5 + $0x6b8] sm:$0xff]
    %v576 = vld [vmem:[#allocation5 + $0x6c0] sm:$0xff]
    %v577 = vld [vmem:[#allocation5 + $0x6c8] sm:$0xff]
    %v578 = vld [vmem:[#allocation5 + $0x6d0] sm:$0xff]
    %v579 = vld [vmem:[#allocation5 + $0x6d8] sm:$0xff]
    %v580 = vld [vmem:[#allocation5 + $0x6e0] sm:$0xff]
    %v581 = vld [vmem:[#allocation5 + $0x6e8] sm:$0xff]
    %v582 = vld [vmem:[#allocation5 + $0x6f0] sm:$0xff]
    %v583 = vld [vmem:[#allocation5 + $0x6f8] sm:$0xff]
    %v584 = vld [vmem:[#allocation5 + $0x700] sm:$0xff]
    %v585 = vld [vmem:[#allocation5 + $0x708] sm:$0xff]
    %v586 = vld [vmem:[#allocation5 + $0x710] sm:$0xff]
    %v587 = vld [vmem:[#allocation5 + $0x718] sm:$0xff]
    %v588 = vld [vmem:[#allocation5 + $0x720] sm:$0xff]
    %v589 = vld [vmem:[#allocation5 + $0x728] sm:$0xff]
    %v590 = vld [vmem:[#allocation5 + $0x730] sm:$0xff]
    %v591 = vld [vmem:[#allocation5 + $0x738] sm:$0xff]
    %v592 = vld [vmem:[#allocation5 + $0x740] sm:$0xff]
    %v593 = vld [vmem:[#allocation5 + $0x748] sm:$0xff]
    %v594 = vld [vmem:[#allocation5 + $0x750] sm:$0xff]
    %v595 = vld [vmem:[#allocation5 + $0x758] sm:$0xff]
    %v596 = vld [vmem:[#allocation5 + $0x760] sm:$0xff]
    %v597 = vld [vmem:[#allocation5 + $0x768] sm:$0xff]
    %v598 = vld [vmem:[#allocation5 + $0x770] sm:$0xff]
    %v599 = vld [vmem:[#allocation5 + $0x778] sm:$0xff]
    %v600 = vld [vmem:[#allocation5 + $0x780] sm:$0xff]
    %v601 = vld [vmem:[#allocation5 + $0x788] sm:$0xff]
    %v602 = vld [vmem:[#allocation5 + $0x790] sm:$0xff]
    %v603 = vld [vmem:[#allocation5 + $0x798] sm:$0xff]
    %v604 = vld [vmem:[#allocation5 + $0x7a0] sm:$0xff]
    %v605 = vld [vmem:[#allocation5 + $0x7a8] sm:$0xff]
    %v606 = vld [vmem:[#allocation5 + $0x7b0] sm:$0xff]
    %v607 = vld [vmem:[#allocation5 + $0x7b8] sm:$0xff]
    %v608 = vld [vmem:[#allocation5 + $0x7c0] sm:$0xff]
    %v609 = vld [vmem:[#allocation5 + $0x7c8] sm:$0xff]
    %v610 = vld [vmem:[#allocation5 + $0x7d0] sm:$0xff]
    %v611 = vld [vmem:[#allocation5 + $0x7d8] sm:$0xff]
    %v612 = vld [vmem:[#allocation5 + $0x7e0] sm:$0xff]
    %v613 = vld [vmem:[#allocation5 + $0x7e8] sm:$0xff]
    %v614 = vld [vmem:[#allocation5 + $0x7f0] sm:$0xff]
    %v615 = vld [vmem:[#allocation5 + $0x7f8] sm:$0xff]
    %v616 = vld [vmem:[#allocation5 + $0x800] sm:$0xff]
    %v617 = vld [vmem:[#allocation5 + $0x808] sm:$0xff]
    %v618 = vld [vmem:[#allocation5 + $0x810] sm:$0xff]
    %v619 = vld [vmem:[#allocation5 + $0x818] sm:$0xff]
    %v620 = vld [vmem:[#allocation5 + $0x820] sm:$0xff]
    %v621 = vld [vmem:[#allocation5 + $0x828] sm:$0xff]
    %v622 = vld [vmem:[#allocation5 + $0x830] sm:$0xff]
    %v623 = vld [vmem:[#allocation5 + $0x838] sm:$0xff]
    %v624 = vld [vmem:[#allocation5 + $0x840] sm:$0xff]
    %v625 = vld [vmem:[#allocation5 + $0x848] sm:$0xff]
    %v626 = vld [vmem:[#allocation5 + $0x850] sm:$0xff]
    %v627 = vld [vmem:[#allocation5 + $0x858] sm:$0xff]
    %v628 = vld [vmem:[#allocation5 + $0x860] sm:$0xff]
    %v629 = vld [vmem:[#allocation5 + $0x868] sm:$0xff]
    %v630 = vld [vmem:[#allocation5 + $0x870] sm:$0xff]
    %v631 = vld [vmem:[#allocation5 + $0x878] sm:$0xff]
    %v632 = vld [vmem:[#allocation5 + $0x880] sm:$0xff]
    %v633 = vld [vmem:[#allocation5 + $0x888] sm:$0xff]
    %v634 = vld [vmem:[#allocation5 + $0x890] sm:$0xff]
    %v635 = vld [vmem:[#allocation5 + $0x898] sm:$0xff]
    %v636 = vld [vmem:[#allocation5 + $0x8a0] sm:$0xff]
    %v637 = vld [vmem:[#allocation5 + $0x8a8] sm:$0xff]
    %v638 = vld [vmem:[#allocation5 + $0x8b0] sm:$0xff]
    %v639 = vld [vmem:[#allocation5 + $0x8b8] sm:$0xff]
    %v640 = vld [vmem:[#allocation5 + $0x8c0] sm:$0xff]
    %v641 = vld [vmem:[#allocation5 + $0x8c8] sm:$0xff]
    %v642 = vld [vmem:[#allocation5 + $0x8d0] sm:$0xff]
    %v643 = vld [vmem:[#allocation5 + $0x8d8] sm:$0xff]
    %v644 = vld [vmem:[#allocation5 + $0x8e0] sm:$0xff]
    %v645 = vld [vmem:[#allocation5 + $0x8e8] sm:$0xff]
    %v646 = vld [vmem:[#allocation5 + $0x8f0] sm:$0xff]
    %v647 = vld [vmem:[#allocation5 + $0x8f8] sm:$0xff]
    %v648 = vld [vmem:[#allocation5 + $0x900] sm:$0xff]
    %v649 = vld [vmem:[#allocation5 + $0x908] sm:$0xff]
    %v650 = vld [vmem:[#allocation5 + $0x910] sm:$0xff]
    %v651 = vld [vmem:[#allocation5 + $0x918] sm:$0xff]
    %v652 = vld [vmem:[#allocation5 + $0x920] sm:$0xff]
    %v653 = vld [vmem:[#allocation5 + $0x928] sm:$0xff]
    %v654 = vld [vmem:[#allocation5 + $0x930] sm:$0xff]
    %v655 = vld [vmem:[#allocation5 + $0x938] sm:$0xff]
    %v656 = vld [vmem:[#allocation5 + $0x940] sm:$0xff]
    %v657 = vld [vmem:[#allocation5 + $0x948] sm:$0xff]
    %v658 = vld [vmem:[#allocation5 + $0x950] sm:$0xff]
    %v659 = vld [vmem:[#allocation5 + $0x958] sm:$0xff]
    %v660 = vld [vmem:[#allocation5 + $0x960] sm:$0xff]
    %v661 = vld [vmem:[#allocation5 + $0x968] sm:$0xff]
    %v662 = vld [vmem:[#allocation5 + $0x970] sm:$0xff]
    %v663 = vld [vmem:[#allocation5 + $0x978] sm:$0xff]
    %v664 = vld [vmem:[#allocation5 + $0x980] sm:$0xff]
    %v665 = vld [vmem:[#allocation5 + $0x988] sm:$0xff]
    %v666 = vld [vmem:[#allocation5 + $0x990] sm:$0xff]
    %v667 = vld [vmem:[#allocation5 + $0x998] sm:$0xff]
    %v668 = vld [vmem:[#allocation5 + $0x9a0] sm:$0xff]
    %v669 = vld [vmem:[#allocation5 + $0x9a8] sm:$0xff]
    %v670 = vld [vmem:[#allocation5 + $0x9b0] sm:$0xff]
    %v671 = vld [vmem:[#allocation5 + $0x9b8] sm:$0xff]
    %v672 = vld [vmem:[#allocation5 + $0x9c0] sm:$0xff]
    %v673 = vld [vmem:[#allocation5 + $0x9c8] sm:$0xff]
    %v674 = vld [vmem:[#allocation5 + $0x9d0] sm:$0xff]
    %v675 = vld [vmem:[#allocation5 + $0x9d8] sm:$0xff]
    %v676 = vld [vmem:[#allocation5 + $0x9e0] sm:$0xff]
    %v677 = vld [vmem:[#allocation5 + $0x9e8] sm:$0xff]
    %v678 = vld [vmem:[#allocation5 + $0x9f0] sm:$0xff]
    %v679 = vld [vmem:[#allocation5 + $0x9f8] sm:$0xff]
    %v680 = vld [vmem:[#allocation5 + $0xa00] sm:$0xff]
    %v681 = vld [vmem:[#allocation5 + $0xa08] sm:$0xff]
    %v682 = vld [vmem:[#allocation5 + $0xa10] sm:$0xff]
    %v683 = vld [vmem:[#allocation5 + $0xa18] sm:$0xff]
    %v684 = vld [vmem:[#allocation5 + $0xa20] sm:$0xff]
    %v685 = vld [vmem:[#allocation5 + $0xa28] sm:$0xff]
    %v686 = vld [vmem:[#allocation5 + $0xa30] sm:$0xff]
    %v687 = vld [vmem:[#allocation5 + $0xa38] sm:$0xff]
    %v688 = vld [vmem:[#allocation5 + $0xa40] sm:$0xff]
    %v689 = vld [vmem:[#allocation5 + $0xa48] sm:$0xff]
    %v690 = vld [vmem:[#allocation5 + $0xa50] sm:$0xff]
    %v691 = vld [vmem:[#allocation5 + $0xa58] sm:$0xff]
    %v692 = vld [vmem:[#allocation5 + $0xa60] sm:$0xff]
    %v693 = vld [vmem:[#allocation5 + $0xa68] sm:$0xff]
    %v694 = vld [vmem:[#allocation5 + $0xa70] sm:$0xff]
    %v695 = vld [vmem:[#allocation5 + $0xa78] sm:$0xff]
    %v696 = vld [vmem:[#allocation5 + $0xa80] sm:$0xff]
    %v697 = vld [vmem:[#allocation5 + $0xa88] sm:$0xff]
    %v698 = vld [vmem:[#allocation5 + $0xa90] sm:$0xff]
    %v699 = vld [vmem:[#allocation5 + $0xa98] sm:$0xff]
    %v700 = vld [vmem:[#allocation5 + $0xaa0] sm:$0xff]
    %v701 = vld [vmem:[#allocation5 + $0xaa8] sm:$0xff]
    %v702 = vld [vmem:[#allocation5 + $0xab0] sm:$0xff]
    %v703 = vld [vmem:[#allocation5 + $0xab8] sm:$0xff]
    %v704 = vld [vmem:[#allocation5 + $0xac0] sm:$0xff]
    %v705 = vld [vmem:[#allocation5 + $0xac8] sm:$0xff]
    %v706 = vld [vmem:[#allocation5 + $0xad0] sm:$0xff]
    %v707 = vld [vmem:[#allocation5 + $0xad8] sm:$0xff]
    %v708 = vld [vmem:[#allocation5 + $0xae0] sm:$0xff]
    %v709 = vld [vmem:[#allocation5 + $0xae8] sm:$0xff]
    %v710 = vld [vmem:[#allocation5 + $0xaf0] sm:$0xff]
    %v711 = vld [vmem:[#allocation5 + $0xaf8] sm:$0xff]
    %v712 = vld [vmem:[#allocation5 + $0xb00] sm:$0xff]
    %v713 = vld [vmem:[#allocation5 + $0xb08] sm:$0xff]
    %v714 = vld [vmem:[#allocation5 + $0xb10] sm:$0xff]
    %v715 = vld [vmem:[#allocation5 + $0xb18] sm:$0xff]
    %v716 = vld [vmem:[#allocation5 + $0xb20] sm:$0xff]
    %v717 = vld [vmem:[#allocation5 + $0xb28] sm:$0xff]
    %v718 = vld [vmem:[#allocation5 + $0xb30] sm:$0xff]
    %v719 = vld [vmem:[#allocation5 + $0xb38] sm:$0xff]
    %v720 = vld [vmem:[#allocation5 + $0xb40] sm:$0xff]
    %v721 = vld [vmem:[#allocation5 + $0xb48] sm:$0xff]
    %v722 = vld [vmem:[#allocation5 + $0xb50] sm:$0xff]
    %v723 = vld [vmem:[#allocation5 + $0xb58] sm:$0xff]
    %v724 = vld [vmem:[#allocation5 + $0xb60] sm:$0xff]
    %v725 = vld [vmem:[#allocation5 + $0xb68] sm:$0xff]
    %v726 = vld [vmem:[#allocation5 + $0xb70] sm:$0xff]
    %v727 = vld [vmem:[#allocation5 + $0xb78] sm:$0xff]
    %v728 = vld [vmem:[#allocation5 + $0xb80] sm:$0xff]
    %v729 = vld [vmem:[#allocation5 + $0xb88] sm:$0xff]
    %v730 = vld [vmem:[#allocation5 + $0xb90] sm:$0xff]
    %v731 = vld [vmem:[#allocation5 + $0xb98] sm:$0xff]
    %v732 = vld [vmem:[#allocation5 + $0xba0] sm:$0xff]
    %v733 = vld [vmem:[#allocation5 + $0xba8] sm:$0xff]
    %v734 = vld [vmem:[#allocation5 + $0xbb0] sm:$0xff]
    %v735 = vld [vmem:[#allocation5 + $0xbb8] sm:$0xff]
    %v736 = vld [vmem:[#allocation5 + $0xbc0] sm:$0xff]
    %v737 = vld [vmem:[#allocation5 + $0xbc8] sm:$0xff]
    %v738 = vld [vmem:[#allocation5 + $0xbd0] sm:$0xff]
    %v739 = vld [vmem:[#allocation5 + $0xbd8] sm:$0xff]
    %v740 = vld [vmem:[#allocation5 + $0xbe0] sm:$0xff]
    %v741 = vld [vmem:[#allocation5 + $0xbe8] sm:$0xff]
    %v742 = vld [vmem:[#allocation5 + $0xbf0] sm:$0xff]
    %v743 = vld [vmem:[#allocation5 + $0xbf8] sm:$0xff]
    %v744 = vld [vmem:[#allocation5 + $0xc00] sm:$0xff]
    %v745 = vld [vmem:[#allocation5 + $0xc08] sm:$0xff]
    %v746 = vld [vmem:[#allocation5 + $0xc10] sm:$0xff]
    %v747 = vld [vmem:[#allocation5 + $0xc18] sm:$0xff]
    %v748 = vld [vmem:[#allocation5 + $0xc20] sm:$0xff]
    %v749 = vld [vmem:[#allocation5 + $0xc28] sm:$0xff]
    %v750 = vld [vmem:[#allocation5 + $0xc30] sm:$0xff]
    %v751 = vld [vmem:[#allocation5 + $0xc38] sm:$0xff]
    %v752 = vld [vmem:[#allocation5 + $0xc40] sm:$0xff]
    %v753 = vld [vmem:[#allocation5 + $0xc48] sm:$0xff]
    %v754 = vld [vmem:[#allocation5 + $0xc50] sm:$0xff]
    %v755 = vld [vmem:[#allocation5 + $0xc58] sm:$0xff]
    %v756 = vld [vmem:[#allocation5 + $0xc60] sm:$0xff]
    %v757 = vld [vmem:[#allocation5 + $0xc68] sm:$0xff]
    %v758 = vld [vmem:[#allocation5 + $0xc70] sm:$0xff]
    %v759 = vld [vmem:[#allocation5 + $0xc78] sm:$0xff]
    %v760 = vld [vmem:[#allocation5 + $0xc80] sm:$0xff]
    %v761 = vld [vmem:[#allocation5 + $0xc88] sm:$0xff]
    %v762 = vld [vmem:[#allocation5 + $0xc90] sm:$0xff]
    %v763 = vld [vmem:[#allocation5 + $0xc98] sm:$0xff]
    %v764 = vld [vmem:[#allocation5 + $0xca0] sm:$0xff]
    %v765 = vld [vmem:[#allocation5 + $0xca8] sm:$0xff]
    %v766 = vld [vmem:[#allocation5 + $0xcb0] sm:$0xff]
    %v767 = vld [vmem:[#allocation5 + $0xcb8] sm:$0xff]
    %v768 = vld [vmem:[#allocation5 + $0xcc0] sm:$0xff]
    %v769 = vld [vmem:[#allocation5 + $0xcc8] sm:$0xff]
    %v770 = vld [vmem:[#allocation5 + $0xcd0] sm:$0xff]
    %v771 = vld [vmem:[#allocation5 + $0xcd8] sm:$0xff]
    %v772 = vld [vmem:[#allocation5 + $0xce0] sm:$0xff]
    %v773 = vld [vmem:[#allocation5 + $0xce8] sm:$0xff]
    %v774 = vld [vmem:[#allocation5 + $0xcf0] sm:$0xff]
    %v775 = vld [vmem:[#allocation5 + $0xcf8] sm:$0xff]
    %v776 = vld [vmem:[#allocation5 + $0xd00] sm:$0xff]
    %v777 = vld [vmem:[#allocation5 + $0xd08] sm:$0xff]
    %v778 = vld [vmem:[#allocation5 + $0xd10] sm:$0xff]
    %v779 = vld [vmem:[#allocation5 + $0xd18] sm:$0xff]
    %v780 = vld [vmem:[#allocation5 + $0xd20] sm:$0xff]
    %v781 = vld [vmem:[#allocation5 + $0xd28] sm:$0xff]
    %v782 = vld [vmem:[#allocation5 + $0xd30] sm:$0xff]
    %v783 = vld [vmem:[#allocation5 + $0xd38] sm:$0xff]
    %v784 = vld [vmem:[#allocation5 + $0xd40] sm:$0xff]
    %v785 = vld [vmem:[#allocation5 + $0xd48] sm:$0xff]
    %v786 = vld [vmem:[#allocation5 + $0xd50] sm:$0xff]
    %v787 = vld [vmem:[#allocation5 + $0xd58] sm:$0xff]
    %v788 = vld [vmem:[#allocation5 + $0xd60] sm:$0xff]
    %v789 = vld [vmem:[#allocation5 + $0xd68] sm:$0xff]
    %v790 = vld [vmem:[#allocation5 + $0xd70] sm:$0xff]
    %v791 = vld [vmem:[#allocation5 + $0xd78] sm:$0xff]
    %v792 = vld [vmem:[#allocation5 + $0xd80] sm:$0xff]
    %v793 = vld [vmem:[#allocation5 + $0xd88] sm:$0xff]
    %v794 = vld [vmem:[#allocation5 + $0xd90] sm:$0xff]
    %v795 = vld [vmem:[#allocation5 + $0xd98] sm:$0xff]
    %v796 = vld [vmem:[#allocation5 + $0xda0] sm:$0xff]
    %v797 = vld [vmem:[#allocation5 + $0xda8] sm:$0xff]
    %v798 = vld [vmem:[#allocation5 + $0xdb0] sm:$0xff]
    %v799 = vld [vmem:[#allocation5 + $0xdb8] sm:$0xff]
    %v800 = vld [vmem:[#allocation5 + $0xdc0] sm:$0xff]
    %v801 = vld [vmem:[#allocation5 + $0xdc8] sm:$0xff]
    %v802 = vld [vmem:[#allocation5 + $0xdd0] sm:$0xff]
    %v803 = vld [vmem:[#allocation5 + $0xdd8] sm:$0xff]
    %v804 = vld [vmem:[#allocation5 + $0xde0] sm:$0xff]
    %v805 = vld [vmem:[#allocation5 + $0xde8] sm:$0xff]
    %v806 = vld [vmem:[#allocation5 + $0xdf0] sm:$0xff]
    %v807 = vld [vmem:[#allocation5 + $0xdf8] sm:$0xff]
    %v808 = vld [vmem:[#allocation5 + $0xe00] sm:$0xff]
    %v809 = vld [vmem:[#allocation5 + $0xe08] sm:$0xff]
    %v810 = vld [vmem:[#allocation5 + $0xe10] sm:$0xff]
    %v811 = vld [vmem:[#allocation5 + $0xe18] sm:$0xff]
    %v812 = vld [vmem:[#allocation5 + $0xe20] sm:$0xff]
    %v813 = vld [vmem:[#allocation5 + $0xe28] sm:$0xff]
    %v814 = vld [vmem:[#allocation5 + $0xe30] sm:$0xff]
    %v815 = vld [vmem:[#allocation5 + $0xe38] sm:$0xff]
    %v816 = vld [vmem:[#allocation5 + $0xe40] sm:$0xff]
    %v817 = vld [vmem:[#allocation5 + $0xe48] sm:$0xff]
    %v818 = vld [vmem:[#allocation5 + $0xe50] sm:$0xff]
    %v819 = vld [vmem:[#allocation5 + $0xe58] sm:$0xff]
    %v820 = vld [vmem:[#allocation5 + $0xe60] sm:$0xff]
    %v821 = vld [vmem:[#allocation5 + $0xe68] sm:$0xff]
    %v822 = vld [vmem:[#allocation5 + $0xe70] sm:$0xff]
    %v823 = vld [vmem:[#allocation5 + $0xe78] sm:$0xff]
    %v824 = vld [vmem:[#allocation5 + $0xe80] sm:$0xff]
    %v825 = vld [vmem:[#allocation5 + $0xe88] sm:$0xff]
    %v826 = vld [vmem:[#allocation5 + $0xe90] sm:$0xff]
    %v827 = vld [vmem:[#allocation5 + $0xe98] sm:$0xff]
    %v828 = vld [vmem:[#allocation5 + $0xea0] sm:$0xff]
    %v829 = vld [vmem:[#allocation5 + $0xea8] sm:$0xff]
    %v830 = vld [vmem:[#allocation5 + $0xeb0] sm:$0xff]
    %v831 = vld [vmem:[#allocation5 + $0xeb8] sm:$0xff]
    %v832 = vld [vmem:[#allocation5 + $0xec0] sm:$0xff]
    %v833 = vld [vmem:[#allocation5 + $0xec8] sm:$0xff]
    %v834 = vld [vmem:[#allocation5 + $0xed0] sm:$0xff]
    %v835 = vld [vmem:[#allocation5 + $0xed8] sm:$0xff]
    %v836 = vld [vmem:[#allocation5 + $0xee0] sm:$0xff]
    %v837 = vld [vmem:[#allocation5 + $0xee8] sm:$0xff]
    %v838 = vld [vmem:[#allocation5 + $0xef0] sm:$0xff]
    %v839 = vld [vmem:[#allocation5 + $0xef8] sm:$0xff]
    %v840 = vld [vmem:[#allocation5 + $0xf00] sm:$0xff]
    %v841 = vld [vmem:[#allocation5 + $0xf08] sm:$0xff]
    %v842 = vld [vmem:[#allocation5 + $0xf10] sm:$0xff]
    %v843 = vld [vmem:[#allocation5 + $0xf18] sm:$0xff]
    %v844 = vld [vmem:[#allocation5 + $0xf20] sm:$0xff]
    %v845 = vld [vmem:[#allocation5 + $0xf28] sm:$0xff]
    %v846 = vld [vmem:[#allocation5 + $0xf30] sm:$0xff]
    %v847 = vld [vmem:[#allocation5 + $0xf38] sm:$0xff]
    %v848 = vld [vmem:[#allocation5 + $0xf40] sm:$0xff]
    %v849 = vld [vmem:[#allocation5 + $0xf48] sm:$0xff]
    %v850 = vld [vmem:[#allocation5 + $0xf50] sm:$0xff]
    %v851 = vld [vmem:[#allocation5 + $0xf58] sm:$0xff]
    %v852 = vld [vmem:[#allocation5 + $0xf60] sm:$0xff]
    %v853 = vld [vmem:[#allocation5 + $0xf68] sm:$0xff]
    %v854 = vld [vmem:[#allocation5 + $0xf70] sm:$0xff]
    %v855 = vld [vmem:[#allocation5 + $0xf78] sm:$0xff]
    %v856 = vld [vmem:[#allocation5 + $0xf80] sm:$0xff]
    %v857 = vld [vmem:[#allocation5 + $0xf88] sm:$0xff]
    %v858 = vld [vmem:[#allocation5 + $0xf90] sm:$0xff]
    %v859 = vld [vmem:[#allocation5 + $0xf98] sm:$0xff]
    %v860 = vld [vmem:[#allocation5 + $0xfa0] sm:$0xff]
    %v861 = vld [vmem:[#allocation5 + $0xfa8] sm:$0xff]
    %v862 = vld [vmem:[#allocation5 + $0xfb0] sm:$0xff]
    %v863 = vld [vmem:[#allocation5 + $0xfb8] sm:$0xff]
    %v864 = vld [vmem:[#allocation5 + $0xfc0] sm:$0xff]
    %v865 = vld [vmem:[#allocation5 + $0xfc8] sm:$0xff]
    %v866 = vld [vmem:[#allocation5 + $0xfd0] sm:$0xff]
    %v867 = vld [vmem:[#allocation5 + $0xfd8] sm:$0xff]
    %v868 = vld [vmem:[#allocation5 + $0xfe0] sm:$0xff]
    %v869 = vld [vmem:[#allocation5 + $0xfe8] sm:$0xff]
    %v870 = vld [vmem:[#allocation5 + $0xff0] sm:$0xff]
    %v871 = vld [vmem:[#allocation5 + $0xff8] sm:$0xff]
    %v872 = vld [vmem:[#allocation7] sm:$0xff]
    %v874 = vperm.slane %v872, 0
    %v875 = vperm.slane %v872, 1
    %v876 = vperm.slane %v872, 2
    %v877 = vperm.slane %v872, 3
    %v878 = vperm.slane %v872, 4
    %v879 = vperm.slane %v872, 5
    %v880 = vperm.slane %v872, 6
    %v881 = vperm.slane %v872, 7
    %v1402 = vunpack.c.l.b16 %v360
    %v1403 = vunpack.c.h.b16 %v360
    %v1404 = vunpack.c.l.b16 %v361
    %v1405 = vunpack.c.h.b16 %v361
    %v1406 = vunpack.c.l.b16 %v362
    %v1407 = vunpack.c.h.b16 %v362
    %v1408 = vunpack.c.l.b16 %v363
    %v1409 = vunpack.c.h.b16 %v363
    %v1410 = vunpack.c.l.b16 %v364
    %v1411 = vunpack.c.h.b16 %v364
    %v1412 = vunpack.c.l.b16 %v365
    %v1413 = vunpack.c.h.b16 %v365
    %v1414 = vunpack.c.l.b16 %v366
    %v1415 = vunpack.c.h.b16 %v366
    %v1416 = vunpack.c.l.b16 %v367
    %v1417 = vunpack.c.h.b16 %v367
    %v1418 = vunpack.c.l.b16 %v368
    %v1419 = vunpack.c.h.b16 %v368
    %v1420 = vunpack.c.l.b16 %v369
    %v1421 = vunpack.c.h.b16 %v369
    %v1422 = vunpack.c.l.b16 %v370
    %v1423 = vunpack.c.h.b16 %v370
    %v1424 = vunpack.c.l.b16 %v371
    %v1425 = vunpack.c.h.b16 %v371
    %v1426 = vunpack.c.l.b16 %v372
    %v1427 = vunpack.c.h.b16 %v372
    %v1428 = vunpack.c.l.b16 %v373
    %v1429 = vunpack.c.h.b16 %v373
    %v1430 = vunpack.c.l.b16 %v374
    %v1431 = vunpack.c.h.b16 %v374
    %v1432 = vunpack.c.l.b16 %v375
    %v1433 = vunpack.c.h.b16 %v375
    %v1434 = vunpack.c.l.b16 %v376
    %v1435 = vunpack.c.h.b16 %v376
    %v1436 = vunpack.c.l.b16 %v377
    %v1437 = vunpack.c.h.b16 %v377
    %v1438 = vunpack.c.l.b16 %v378
    %v1439 = vunpack.c.h.b16 %v378
    %v1440 = vunpack.c.l.b16 %v379
    %v1441 = vunpack.c.h.b16 %v379
    %v1442 = vunpack.c.l.b16 %v380
    %v1443 = vunpack.c.h.b16 %v380
    %v1444 = vunpack.c.l.b16 %v381
    %v1445 = vunpack.c.h.b16 %v381
    %v1446 = vunpack.c.l.b16 %v382
    %v1447 = vunpack.c.h.b16 %v382
    %v1448 = vunpack.c.l.b16 %v383
    %v1449 = vunpack.c.h.b16 %v383
    %v1450 = vunpack.c.l.b16 %v384
    %v1451 = vunpack.c.h.b16 %v384
    %v1452 = vunpack.c.l.b16 %v385
    %v1453 = vunpack.c.h.b16 %v385
    %v1454 = vunpack.c.l.b16 %v386
    %v1455 = vunpack.c.h.b16 %v386
    %v1456 = vunpack.c.l.b16 %v387
    %v1457 = vunpack.c.h.b16 %v387
    %v1458 = vunpack.c.l.b16 %v388
    %v1459 = vunpack.c.h.b16 %v388
    %v1460 = vunpack.c.l.b16 %v389
    %v1461 = vunpack.c.h.b16 %v389
    %v1462 = vunpack.c.l.b16 %v390
    %v1463 = vunpack.c.h.b16 %v390
    %v1464 = vunpack.c.l.b16 %v391
    %v1465 = vunpack.c.h.b16 %v391
    %v1466 = vunpack.c.l.b16 %v392
    %v1467 = vunpack.c.h.b16 %v392
    %v1468 = vunpack.c.l.b16 %v393
    %v1469 = vunpack.c.h.b16 %v393
    %v1470 = vunpack.c.l.b16 %v394
    %v1471 = vunpack.c.h.b16 %v394
    %v1472 = vunpack.c.l.b16 %v395
    %v1473 = vunpack.c.h.b16 %v395
    %v1474 = vunpack.c.l.b16 %v396
    %v1475 = vunpack.c.h.b16 %v396
    %v1476 = vunpack.c.l.b16 %v397
    %v1477 = vunpack.c.h.b16 %v397
    %v1478 = vunpack.c.l.b16 %v398
    %v1479 = vunpack.c.h.b16 %v398
    %v1480 = vunpack.c.l.b16 %v399
    %v1481 = vunpack.c.h.b16 %v399
    %v1482 = vunpack.c.l.b16 %v400
    %v1483 = vunpack.c.h.b16 %v400
    %v1484 = vunpack.c.l.b16 %v401
    %v1485 = vunpack.c.h.b16 %v401
    %v1486 = vunpack.c.l.b16 %v402
    %v1487 = vunpack.c.h.b16 %v402
    %v1488 = vunpack.c.l.b16 %v403
    %v1489 = vunpack.c.h.b16 %v403
    %v1490 = vunpack.c.l.b16 %v404
    %v1491 = vunpack.c.h.b16 %v404
    %v1492 = vunpack.c.l.b16 %v405
    %v1493 = vunpack.c.h.b16 %v405
    %v1494 = vunpack.c.l.b16 %v406
    %v1495 = vunpack.c.h.b16 %v406
    %v1496 = vunpack.c.l.b16 %v407
    %v1497 = vunpack.c.h.b16 %v407
    %v1498 = vunpack.c.l.b16 %v408
    %v1499 = vunpack.c.h.b16 %v408
    %v1500 = vunpack.c.l.b16 %v409
    %v1501 = vunpack.c.h.b16 %v409
    %v1502 = vunpack.c.l.b16 %v410
    %v1503 = vunpack.c.h.b16 %v410
    %v1504 = vunpack.c.l.b16 %v411
    %v1505 = vunpack.c.h.b16 %v411
    %v1506 = vunpack.c.l.b16 %v412
    %v1507 = vunpack.c.h.b16 %v412
    %v1508 = vunpack.c.l.b16 %v413
    %v1509 = vunpack.c.h.b16 %v413
    %v1510 = vunpack.c.l.b16 %v414
    %v1511 = vunpack.c.h.b16 %v414
    %v1512 = vunpack.c.l.b16 %v415
    %v1513 = vunpack.c.h.b16 %v415
    %v1514 = vunpack.c.l.b16 %v416
    %v1515 = vunpack.c.h.b16 %v416
    %v1516 = vunpack.c.l.b16 %v417
    %v1517 = vunpack.c.h.b16 %v417
    %v1518 = vunpack.c.l.b16 %v418
    %v1519 = vunpack.c.h.b16 %v418
    %v1520 = vunpack.c.l.b16 %v419
    %v1521 = vunpack.c.h.b16 %v419
    %v1522 = vunpack.c.l.b16 %v420
    %v1523 = vunpack.c.h.b16 %v420
    %v1524 = vunpack.c.l.b16 %v421
    %v1525 = vunpack.c.h.b16 %v421
    %v1526 = vunpack.c.l.b16 %v422
    %v1527 = vunpack.c.h.b16 %v422
    %v1528 = vunpack.c.l.b16 %v423
    %v1529 = vunpack.c.h.b16 %v423
    %v1530 = vunpack.c.l.b16 %v424
    %v1531 = vunpack.c.h.b16 %v424
    %v1532 = vunpack.c.l.b16 %v425
    %v1533 = vunpack.c.h.b16 %v425
    %v1534 = vunpack.c.l.b16 %v426
    %v1535 = vunpack.c.h.b16 %v426
    %v1536 = vunpack.c.l.b16 %v427
    %v1537 = vunpack.c.h.b16 %v427
    %v1538 = vunpack.c.l.b16 %v428
    %v1539 = vunpack.c.h.b16 %v428
    %v1540 = vunpack.c.l.b16 %v429
    %v1541 = vunpack.c.h.b16 %v429
    %v1542 = vunpack.c.l.b16 %v430
    %v1543 = vunpack.c.h.b16 %v430
    %v1544 = vunpack.c.l.b16 %v431
    %v1545 = vunpack.c.h.b16 %v431
    %v1546 = vunpack.c.l.b16 %v432
    %v1547 = vunpack.c.h.b16 %v432
    %v1548 = vunpack.c.l.b16 %v433
    %v1549 = vunpack.c.h.b16 %v433
    %v1550 = vunpack.c.l.b16 %v434
    %v1551 = vunpack.c.h.b16 %v434
    %v1552 = vunpack.c.l.b16 %v435
    %v1553 = vunpack.c.h.b16 %v435
    %v1554 = vunpack.c.l.b16 %v436
    %v1555 = vunpack.c.h.b16 %v436
    %v1556 = vunpack.c.l.b16 %v437
    %v1557 = vunpack.c.h.b16 %v437
    %v1558 = vunpack.c.l.b16 %v438
    %v1559 = vunpack.c.h.b16 %v438
    %v1560 = vunpack.c.l.b16 %v439
    %v1561 = vunpack.c.h.b16 %v439
    %v1562 = vunpack.c.l.b16 %v440
    %v1563 = vunpack.c.h.b16 %v440
    %v1564 = vunpack.c.l.b16 %v441
    %v1565 = vunpack.c.h.b16 %v441
    %v1566 = vunpack.c.l.b16 %v442
    %v1567 = vunpack.c.h.b16 %v442
    %v1568 = vunpack.c.l.b16 %v443
    %v1569 = vunpack.c.h.b16 %v443
    %v1570 = vunpack.c.l.b16 %v444
    %v1571 = vunpack.c.h.b16 %v444
    %v1572 = vunpack.c.l.b16 %v445
    %v1573 = vunpack.c.h.b16 %v445
    %v1574 = vunpack.c.l.b16 %v446
    %v1575 = vunpack.c.h.b16 %v446
    %v1576 = vunpack.c.l.b16 %v447
    %v1577 = vunpack.c.h.b16 %v447
    %v1578 = vunpack.c.l.b16 %v448
    %v1579 = vunpack.c.h.b16 %v448
    %v1580 = vunpack.c.l.b16 %v449
    %v1581 = vunpack.c.h.b16 %v449
    %v1582 = vunpack.c.l.b16 %v450
    %v1583 = vunpack.c.h.b16 %v450
    %v1584 = vunpack.c.l.b16 %v451
    %v1585 = vunpack.c.h.b16 %v451
    %v1586 = vunpack.c.l.b16 %v452
    %v1587 = vunpack.c.h.b16 %v452
    %v1588 = vunpack.c.l.b16 %v453
    %v1589 = vunpack.c.h.b16 %v453
    %v1590 = vunpack.c.l.b16 %v454
    %v1591 = vunpack.c.h.b16 %v454
    %v1592 = vunpack.c.l.b16 %v455
    %v1593 = vunpack.c.h.b16 %v455
    %v1594 = vunpack.c.l.b16 %v456
    %v1595 = vunpack.c.h.b16 %v456
    %v1596 = vunpack.c.l.b16 %v457
    %v1597 = vunpack.c.h.b16 %v457
    %v1598 = vunpack.c.l.b16 %v458
    %v1599 = vunpack.c.h.b16 %v458
    %v1600 = vunpack.c.l.b16 %v459
    %v1601 = vunpack.c.h.b16 %v459
    %v1602 = vunpack.c.l.b16 %v460
    %v1603 = vunpack.c.h.b16 %v460
    %v1604 = vunpack.c.l.b16 %v461
    %v1605 = vunpack.c.h.b16 %v461
    %v1606 = vunpack.c.l.b16 %v462
    %v1607 = vunpack.c.h.b16 %v462
    %v1608 = vunpack.c.l.b16 %v463
    %v1609 = vunpack.c.h.b16 %v463
    %v1610 = vunpack.c.l.b16 %v464
    %v1611 = vunpack.c.h.b16 %v464
    %v1612 = vunpack.c.l.b16 %v465
    %v1613 = vunpack.c.h.b16 %v465
    %v1614 = vunpack.c.l.b16 %v466
    %v1615 = vunpack.c.h.b16 %v466
    %v1616 = vunpack.c.l.b16 %v467
    %v1617 = vunpack.c.h.b16 %v467
    %v1618 = vunpack.c.l.b16 %v468
    %v1619 = vunpack.c.h.b16 %v468
    %v1620 = vunpack.c.l.b16 %v469
    %v1621 = vunpack.c.h.b16 %v469
    %v1622 = vunpack.c.l.b16 %v470
    %v1623 = vunpack.c.h.b16 %v470
    %v1624 = vunpack.c.l.b16 %v471
    %v1625 = vunpack.c.h.b16 %v471
    %v1626 = vunpack.c.l.b16 %v472
    %v1627 = vunpack.c.h.b16 %v472
    %v1628 = vunpack.c.l.b16 %v473
    %v1629 = vunpack.c.h.b16 %v473
    %v1630 = vunpack.c.l.b16 %v474
    %v1631 = vunpack.c.h.b16 %v474
    %v1632 = vunpack.c.l.b16 %v475
    %v1633 = vunpack.c.h.b16 %v475
    %v1634 = vunpack.c.l.b16 %v476
    %v1635 = vunpack.c.h.b16 %v476
    %v1636 = vunpack.c.l.b16 %v477
    %v1637 = vunpack.c.h.b16 %v477
    %v1638 = vunpack.c.l.b16 %v478
    %v1639 = vunpack.c.h.b16 %v478
    %v1640 = vunpack.c.l.b16 %v479
    %v1641 = vunpack.c.h.b16 %v479
    %v1642 = vunpack.c.l.b16 %v480
    %v1643 = vunpack.c.h.b16 %v480
    %v1644 = vunpack.c.l.b16 %v481
    %v1645 = vunpack.c.h.b16 %v481
    %v1646 = vunpack.c.l.b16 %v482
    %v1647 = vunpack.c.h.b16 %v482
    %v1648 = vunpack.c.l.b16 %v483
    %v1649 = vunpack.c.h.b16 %v483
    %v1650 = vunpack.c.l.b16 %v484
    %v1651 = vunpack.c.h.b16 %v484
    %v1652 = vunpack.c.l.b16 %v485
    %v1653 = vunpack.c.h.b16 %v485
    %v1654 = vunpack.c.l.b16 %v486
    %v1655 = vunpack.c.h.b16 %v486
    %v1656 = vunpack.c.l.b16 %v487
    %v1657 = vunpack.c.h.b16 %v487
    %v1658 = vunpack.c.l.b16 %v488
    %v1659 = vunpack.c.h.b16 %v488
    %v1660 = vunpack.c.l.b16 %v489
    %v1661 = vunpack.c.h.b16 %v489
    %v1662 = vunpack.c.l.b16 %v490
    %v1663 = vunpack.c.h.b16 %v490
    %v1664 = vunpack.c.l.b16 %v491
    %v1665 = vunpack.c.h.b16 %v491
    %v1666 = vunpack.c.l.b16 %v492
    %v1667 = vunpack.c.h.b16 %v492
    %v1668 = vunpack.c.l.b16 %v493
    %v1669 = vunpack.c.h.b16 %v493
    %v1670 = vunpack.c.l.b16 %v494
    %v1671 = vunpack.c.h.b16 %v494
    %v1672 = vunpack.c.l.b16 %v495
    %v1673 = vunpack.c.h.b16 %v495
    %v1674 = vunpack.c.l.b16 %v496
    %v1675 = vunpack.c.h.b16 %v496
    %v1676 = vunpack.c.l.b16 %v497
    %v1677 = vunpack.c.h.b16 %v497
    %v1678 = vunpack.c.l.b16 %v498
    %v1679 = vunpack.c.h.b16 %v498
    %v1680 = vunpack.c.l.b16 %v499
    %v1681 = vunpack.c.h.b16 %v499
    %v1682 = vunpack.c.l.b16 %v500
    %v1683 = vunpack.c.h.b16 %v500
    %v1684 = vunpack.c.l.b16 %v501
    %v1685 = vunpack.c.h.b16 %v501
    %v1686 = vunpack.c.l.b16 %v502
    %v1687 = vunpack.c.h.b16 %v502
    %v1688 = vunpack.c.l.b16 %v503
    %v1689 = vunpack.c.h.b16 %v503
    %v1690 = vunpack.c.l.b16 %v504
    %v1691 = vunpack.c.h.b16 %v504
    %v1692 = vunpack.c.l.b16 %v505
    %v1693 = vunpack.c.h.b16 %v505
    %v1694 = vunpack.c.l.b16 %v506
    %v1695 = vunpack.c.h.b16 %v506
    %v1696 = vunpack.c.l.b16 %v507
    %v1697 = vunpack.c.h.b16 %v507
    %v1698 = vunpack.c.l.b16 %v508
    %v1699 = vunpack.c.h.b16 %v508
    %v1700 = vunpack.c.l.b16 %v509
    %v1701 = vunpack.c.h.b16 %v509
    %v1702 = vunpack.c.l.b16 %v510
    %v1703 = vunpack.c.h.b16 %v510
    %v1704 = vunpack.c.l.b16 %v511
    %v1705 = vunpack.c.h.b16 %v511
    %v1706 = vunpack.c.l.b16 %v512
    %v1707 = vunpack.c.h.b16 %v512
    %v1708 = vunpack.c.l.b16 %v513
    %v1709 = vunpack.c.h.b16 %v513
    %v1710 = vunpack.c.l.b16 %v514
    %v1711 = vunpack.c.h.b16 %v514
    %v1712 = vunpack.c.l.b16 %v515
    %v1713 = vunpack.c.h.b16 %v515
    %v1714 = vunpack.c.l.b16 %v516
    %v1715 = vunpack.c.h.b16 %v516
    %v1716 = vunpack.c.l.b16 %v517
    %v1717 = vunpack.c.h.b16 %v517
    %v1718 = vunpack.c.l.b16 %v518
    %v1719 = vunpack.c.h.b16 %v518
    %v1720 = vunpack.c.l.b16 %v519
    %v1721 = vunpack.c.h.b16 %v519
    %v1722 = vunpack.c.l.b16 %v520
    %v1723 = vunpack.c.h.b16 %v520
    %v1724 = vunpack.c.l.b16 %v521
    %v1725 = vunpack.c.h.b16 %v521
    %v1726 = vunpack.c.l.b16 %v522
    %v1727 = vunpack.c.h.b16 %v522
    %v1728 = vunpack.c.l.b16 %v523
    %v1729 = vunpack.c.h.b16 %v523
    %v1730 = vunpack.c.l.b16 %v524
    %v1731 = vunpack.c.h.b16 %v524
    %v1732 = vunpack.c.l.b16 %v525
    %v1733 = vunpack.c.h.b16 %v525
    %v1734 = vunpack.c.l.b16 %v526
    %v1735 = vunpack.c.h.b16 %v526
    %v1736 = vunpack.c.l.b16 %v527
    %v1737 = vunpack.c.h.b16 %v527
    %v1738 = vunpack.c.l.b16 %v528
    %v1739 = vunpack.c.h.b16 %v528
    %v1740 = vunpack.c.l.b16 %v529
    %v1741 = vunpack.c.h.b16 %v529
    %v1742 = vunpack.c.l.b16 %v530
    %v1743 = vunpack.c.h.b16 %v530
    %v1744 = vunpack.c.l.b16 %v531
    %v1745 = vunpack.c.h.b16 %v531
    %v1746 = vunpack.c.l.b16 %v532
    %v1747 = vunpack.c.h.b16 %v532
    %v1748 = vunpack.c.l.b16 %v533
    %v1749 = vunpack.c.h.b16 %v533
    %v1750 = vunpack.c.l.b16 %v534
    %v1751 = vunpack.c.h.b16 %v534
    %v1752 = vunpack.c.l.b16 %v535
    %v1753 = vunpack.c.h.b16 %v535
    %v1754 = vunpack.c.l.b16 %v536
    %v1755 = vunpack.c.h.b16 %v536
    %v1756 = vunpack.c.l.b16 %v537
    %v1757 = vunpack.c.h.b16 %v537
    %v1758 = vunpack.c.l.b16 %v538
    %v1759 = vunpack.c.h.b16 %v538
    %v1760 = vunpack.c.l.b16 %v539
    %v1761 = vunpack.c.h.b16 %v539
    %v1762 = vunpack.c.l.b16 %v540
    %v1763 = vunpack.c.h.b16 %v540
    %v1764 = vunpack.c.l.b16 %v541
    %v1765 = vunpack.c.h.b16 %v541
    %v1766 = vunpack.c.l.b16 %v542
    %v1767 = vunpack.c.h.b16 %v542
    %v1768 = vunpack.c.l.b16 %v543
    %v1769 = vunpack.c.h.b16 %v543
    %v1770 = vunpack.c.l.b16 %v544
    %v1771 = vunpack.c.h.b16 %v544
    %v1772 = vunpack.c.l.b16 %v545
    %v1773 = vunpack.c.h.b16 %v545
    %v1774 = vunpack.c.l.b16 %v546
    %v1775 = vunpack.c.h.b16 %v546
    %v1776 = vunpack.c.l.b16 %v547
    %v1777 = vunpack.c.h.b16 %v547
    %v1778 = vunpack.c.l.b16 %v548
    %v1779 = vunpack.c.h.b16 %v548
    %v1780 = vunpack.c.l.b16 %v549
    %v1781 = vunpack.c.h.b16 %v549
    %v1782 = vunpack.c.l.b16 %v550
    %v1783 = vunpack.c.h.b16 %v550
    %v1784 = vunpack.c.l.b16 %v551
    %v1785 = vunpack.c.h.b16 %v551
    %v1786 = vunpack.c.l.b16 %v552
    %v1787 = vunpack.c.h.b16 %v552
    %v1788 = vunpack.c.l.b16 %v553
    %v1789 = vunpack.c.h.b16 %v553
    %v1790 = vunpack.c.l.b16 %v554
    %v1791 = vunpack.c.h.b16 %v554
    %v1792 = vunpack.c.l.b16 %v555
    %v1793 = vunpack.c.h.b16 %v555
    %v1794 = vunpack.c.l.b16 %v556
    %v1795 = vunpack.c.h.b16 %v556
    %v1796 = vunpack.c.l.b16 %v557
    %v1797 = vunpack.c.h.b16 %v557
    %v1798 = vunpack.c.l.b16 %v558
    %v1799 = vunpack.c.h.b16 %v558
    %v1800 = vunpack.c.l.b16 %v559
    %v1801 = vunpack.c.h.b16 %v559
    %v1802 = vunpack.c.l.b16 %v560
    %v1803 = vunpack.c.h.b16 %v560
    %v1804 = vunpack.c.l.b16 %v561
    %v1805 = vunpack.c.h.b16 %v561
    %v1806 = vunpack.c.l.b16 %v562
    %v1807 = vunpack.c.h.b16 %v562
    %v1808 = vunpack.c.l.b16 %v563
    %v1809 = vunpack.c.h.b16 %v563
    %v1810 = vunpack.c.l.b16 %v564
    %v1811 = vunpack.c.h.b16 %v564
    %v1812 = vunpack.c.l.b16 %v565
    %v1813 = vunpack.c.h.b16 %v565
    %v1814 = vunpack.c.l.b16 %v566
    %v1815 = vunpack.c.h.b16 %v566
    %v1816 = vunpack.c.l.b16 %v567
    %v1817 = vunpack.c.h.b16 %v567
    %v1818 = vunpack.c.l.b16 %v568
    %v1819 = vunpack.c.h.b16 %v568
    %v1820 = vunpack.c.l.b16 %v569
    %v1821 = vunpack.c.h.b16 %v569
    %v1822 = vunpack.c.l.b16 %v570
    %v1823 = vunpack.c.h.b16 %v570
    %v1824 = vunpack.c.l.b16 %v571
    %v1825 = vunpack.c.h.b16 %v571
    %v1826 = vunpack.c.l.b16 %v572
    %v1827 = vunpack.c.h.b16 %v572
    %v1828 = vunpack.c.l.b16 %v573
    %v1829 = vunpack.c.h.b16 %v573
    %v1830 = vunpack.c.l.b16 %v574
    %v1831 = vunpack.c.h.b16 %v574
    %v1832 = vunpack.c.l.b16 %v575
    %v1833 = vunpack.c.h.b16 %v575
    %v1834 = vunpack.c.l.b16 %v576
    %v1835 = vunpack.c.h.b16 %v576
    %v1836 = vunpack.c.l.b16 %v577
    %v1837 = vunpack.c.h.b16 %v577
    %v1838 = vunpack.c.l.b16 %v578
    %v1839 = vunpack.c.h.b16 %v578
    %v1840 = vunpack.c.l.b16 %v579
    %v1841 = vunpack.c.h.b16 %v579
    %v1842 = vunpack.c.l.b16 %v580
    %v1843 = vunpack.c.h.b16 %v580
    %v1844 = vunpack.c.l.b16 %v581
    %v1845 = vunpack.c.h.b16 %v581
    %v1846 = vunpack.c.l.b16 %v582
    %v1847 = vunpack.c.h.b16 %v582
    %v1848 = vunpack.c.l.b16 %v583
    %v1849 = vunpack.c.h.b16 %v583
    %v1850 = vunpack.c.l.b16 %v584
    %v1851 = vunpack.c.h.b16 %v584
    %v1852 = vunpack.c.l.b16 %v585
    %v1853 = vunpack.c.h.b16 %v585
    %v1854 = vunpack.c.l.b16 %v586
    %v1855 = vunpack.c.h.b16 %v586
    %v1856 = vunpack.c.l.b16 %v587
    %v1857 = vunpack.c.h.b16 %v587
    %v1858 = vunpack.c.l.b16 %v588
    %v1859 = vunpack.c.h.b16 %v588
    %v1860 = vunpack.c.l.b16 %v589
    %v1861 = vunpack.c.h.b16 %v589
    %v1862 = vunpack.c.l.b16 %v590
    %v1863 = vunpack.c.h.b16 %v590
    %v1864 = vunpack.c.l.b16 %v591
    %v1865 = vunpack.c.h.b16 %v591
    %v1866 = vunpack.c.l.b16 %v592
    %v1867 = vunpack.c.h.b16 %v592
    %v1868 = vunpack.c.l.b16 %v593
    %v1869 = vunpack.c.h.b16 %v593
    %v1870 = vunpack.c.l.b16 %v594
    %v1871 = vunpack.c.h.b16 %v594
    %v1872 = vunpack.c.l.b16 %v595
    %v1873 = vunpack.c.h.b16 %v595
    %v1874 = vunpack.c.l.b16 %v596
    %v1875 = vunpack.c.h.b16 %v596
    %v1876 = vunpack.c.l.b16 %v597
    %v1877 = vunpack.c.h.b16 %v597
    %v1878 = vunpack.c.l.b16 %v598
    %v1879 = vunpack.c.h.b16 %v598
    %v1880 = vunpack.c.l.b16 %v599
    %v1881 = vunpack.c.h.b16 %v599
    %v1882 = vunpack.c.l.b16 %v600
    %v1883 = vunpack.c.h.b16 %v600
    %v1884 = vunpack.c.l.b16 %v601
    %v1885 = vunpack.c.h.b16 %v601
    %v1886 = vunpack.c.l.b16 %v602
    %v1887 = vunpack.c.h.b16 %v602
    %v1888 = vunpack.c.l.b16 %v603
    %v1889 = vunpack.c.h.b16 %v603
    %v1890 = vunpack.c.l.b16 %v604
    %v1891 = vunpack.c.h.b16 %v604
    %v1892 = vunpack.c.l.b16 %v605
    %v1893 = vunpack.c.h.b16 %v605
    %v1894 = vunpack.c.l.b16 %v606
    %v1895 = vunpack.c.h.b16 %v606
    %v1896 = vunpack.c.l.b16 %v607
    %v1897 = vunpack.c.h.b16 %v607
    %v1898 = vunpack.c.l.b16 %v608
    %v1899 = vunpack.c.h.b16 %v608
    %v1900 = vunpack.c.l.b16 %v609
    %v1901 = vunpack.c.h.b16 %v609
    %v1902 = vunpack.c.l.b16 %v610
    %v1903 = vunpack.c.h.b16 %v610
    %v1904 = vunpack.c.l.b16 %v611
    %v1905 = vunpack.c.h.b16 %v611
    %v1906 = vunpack.c.l.b16 %v612
    %v1907 = vunpack.c.h.b16 %v612
    %v1908 = vunpack.c.l.b16 %v613
    %v1909 = vunpack.c.h.b16 %v613
    %v1910 = vunpack.c.l.b16 %v614
    %v1911 = vunpack.c.h.b16 %v614
    %v1912 = vunpack.c.l.b16 %v615
    %v1913 = vunpack.c.h.b16 %v615
    %v1914 = vunpack.c.l.b16 %v616
    %v1915 = vunpack.c.h.b16 %v616
    %v1916 = vunpack.c.l.b16 %v617
    %v1917 = vunpack.c.h.b16 %v617
    %v1918 = vunpack.c.l.b16 %v618
    %v1919 = vunpack.c.h.b16 %v618
    %v1920 = vunpack.c.l.b16 %v619
    %v1921 = vunpack.c.h.b16 %v619
    %v1922 = vunpack.c.l.b16 %v620
    %v1923 = vunpack.c.h.b16 %v620
    %v1924 = vunpack.c.l.b16 %v621
    %v1925 = vunpack.c.h.b16 %v621
    %v1926 = vunpack.c.l.b16 %v622
    %v1927 = vunpack.c.h.b16 %v622
    %v1928 = vunpack.c.l.b16 %v623
    %v1929 = vunpack.c.h.b16 %v623
    %v1930 = vunpack.c.l.b16 %v624
    %v1931 = vunpack.c.h.b16 %v624
    %v1932 = vunpack.c.l.b16 %v625
    %v1933 = vunpack.c.h.b16 %v625
    %v1934 = vunpack.c.l.b16 %v626
    %v1935 = vunpack.c.h.b16 %v626
    %v1936 = vunpack.c.l.b16 %v627
    %v1937 = vunpack.c.h.b16 %v627
    %v1938 = vunpack.c.l.b16 %v628
    %v1939 = vunpack.c.h.b16 %v628
    %v1940 = vunpack.c.l.b16 %v629
    %v1941 = vunpack.c.h.b16 %v629
    %v1942 = vunpack.c.l.b16 %v630
    %v1943 = vunpack.c.h.b16 %v630
    %v1944 = vunpack.c.l.b16 %v631
    %v1945 = vunpack.c.h.b16 %v631
    %v1946 = vunpack.c.l.b16 %v632
    %v1947 = vunpack.c.h.b16 %v632
    %v1948 = vunpack.c.l.b16 %v633
    %v1949 = vunpack.c.h.b16 %v633
    %v1950 = vunpack.c.l.b16 %v634
    %v1951 = vunpack.c.h.b16 %v634
    %v1952 = vunpack.c.l.b16 %v635
    %v1953 = vunpack.c.h.b16 %v635
    %v1954 = vunpack.c.l.b16 %v636
    %v1955 = vunpack.c.h.b16 %v636
    %v1956 = vunpack.c.l.b16 %v637
    %v1957 = vunpack.c.h.b16 %v637
    %v1958 = vunpack.c.l.b16 %v638
    %v1959 = vunpack.c.h.b16 %v638
    %v1960 = vunpack.c.l.b16 %v639
    %v1961 = vunpack.c.h.b16 %v639
    %v1962 = vunpack.c.l.b16 %v640
    %v1963 = vunpack.c.h.b16 %v640
    %v1964 = vunpack.c.l.b16 %v641
    %v1965 = vunpack.c.h.b16 %v641
    %v1966 = vunpack.c.l.b16 %v642
    %v1967 = vunpack.c.h.b16 %v642
    %v1968 = vunpack.c.l.b16 %v643
    %v1969 = vunpack.c.h.b16 %v643
    %v1970 = vunpack.c.l.b16 %v644
    %v1971 = vunpack.c.h.b16 %v644
    %v1972 = vunpack.c.l.b16 %v645
    %v1973 = vunpack.c.h.b16 %v645
    %v1974 = vunpack.c.l.b16 %v646
    %v1975 = vunpack.c.h.b16 %v646
    %v1976 = vunpack.c.l.b16 %v647
    %v1977 = vunpack.c.h.b16 %v647
    %v1978 = vunpack.c.l.b16 %v648
    %v1979 = vunpack.c.h.b16 %v648
    %v1980 = vunpack.c.l.b16 %v649
    %v1981 = vunpack.c.h.b16 %v649
    %v1982 = vunpack.c.l.b16 %v650
    %v1983 = vunpack.c.h.b16 %v650
    %v1984 = vunpack.c.l.b16 %v651
    %v1985 = vunpack.c.h.b16 %v651
    %v1986 = vunpack.c.l.b16 %v652
    %v1987 = vunpack.c.h.b16 %v652
    %v1988 = vunpack.c.l.b16 %v653
    %v1989 = vunpack.c.h.b16 %v653
    %v1990 = vunpack.c.l.b16 %v654
    %v1991 = vunpack.c.h.b16 %v654
    %v1992 = vunpack.c.l.b16 %v655
    %v1993 = vunpack.c.h.b16 %v655
    %v1994 = vunpack.c.l.b16 %v656
    %v1995 = vunpack.c.h.b16 %v656
    %v1996 = vunpack.c.l.b16 %v657
    %v1997 = vunpack.c.h.b16 %v657
    %v1998 = vunpack.c.l.b16 %v658
    %v1999 = vunpack.c.h.b16 %v658
    %v2000 = vunpack.c.l.b16 %v659
    %v2001 = vunpack.c.h.b16 %v659
    %v2002 = vunpack.c.l.b16 %v660
    %v2003 = vunpack.c.h.b16 %v660
    %v2004 = vunpack.c.l.b16 %v661
    %v2005 = vunpack.c.h.b16 %v661
    %v2006 = vunpack.c.l.b16 %v662
    %v2007 = vunpack.c.h.b16 %v662
    %v2008 = vunpack.c.l.b16 %v663
    %v2009 = vunpack.c.h.b16 %v663
    %v2010 = vunpack.c.l.b16 %v664
    %v2011 = vunpack.c.h.b16 %v664
    %v2012 = vunpack.c.l.b16 %v665
    %v2013 = vunpack.c.h.b16 %v665
    %v2014 = vunpack.c.l.b16 %v666
    %v2015 = vunpack.c.h.b16 %v666
    %v2016 = vunpack.c.l.b16 %v667
    %v2017 = vunpack.c.h.b16 %v667
    %v2018 = vunpack.c.l.b16 %v668
    %v2019 = vunpack.c.h.b16 %v668
    %v2020 = vunpack.c.l.b16 %v669
    %v2021 = vunpack.c.h.b16 %v669
    %v2022 = vunpack.c.l.b16 %v670
    %v2023 = vunpack.c.h.b16 %v670
    %v2024 = vunpack.c.l.b16 %v671
    %v2025 = vunpack.c.h.b16 %v671
    %v2026 = vunpack.c.l.b16 %v672
    %v2027 = vunpack.c.h.b16 %v672
    %v2028 = vunpack.c.l.b16 %v673
    %v2029 = vunpack.c.h.b16 %v673
    %v2030 = vunpack.c.l.b16 %v674
    %v2031 = vunpack.c.h.b16 %v674
    %v2032 = vunpack.c.l.b16 %v675
    %v2033 = vunpack.c.h.b16 %v675
    %v2034 = vunpack.c.l.b16 %v676
    %v2035 = vunpack.c.h.b16 %v676
    %v2036 = vunpack.c.l.b16 %v677
    %v2037 = vunpack.c.h.b16 %v677
    %v2038 = vunpack.c.l.b16 %v678
    %v2039 = vunpack.c.h.b16 %v678
    %v2040 = vunpack.c.l.b16 %v679
    %v2041 = vunpack.c.h.b16 %v679
    %v2042 = vunpack.c.l.b16 %v680
    %v2043 = vunpack.c.h.b16 %v680
    %v2044 = vunpack.c.l.b16 %v681
    %v2045 = vunpack.c.h.b16 %v681
    %v2046 = vunpack.c.l.b16 %v682
    %v2047 = vunpack.c.h.b16 %v682
    %v2048 = vunpack.c.l.b16 %v683
    %v2049 = vunpack.c.h.b16 %v683
    %v2050 = vunpack.c.l.b16 %v684
    %v2051 = vunpack.c.h.b16 %v684
    %v2052 = vunpack.c.l.b16 %v685
    %v2053 = vunpack.c.h.b16 %v685
    %v2054 = vunpack.c.l.b16 %v686
    %v2055 = vunpack.c.h.b16 %v686
    %v2056 = vunpack.c.l.b16 %v687
    %v2057 = vunpack.c.h.b16 %v687
    %v2058 = vunpack.c.l.b16 %v688
    %v2059 = vunpack.c.h.b16 %v688
    %v2060 = vunpack.c.l.b16 %v689
    %v2061 = vunpack.c.h.b16 %v689
    %v2062 = vunpack.c.l.b16 %v690
    %v2063 = vunpack.c.h.b16 %v690
    %v2064 = vunpack.c.l.b16 %v691
    %v2065 = vunpack.c.h.b16 %v691
    %v2066 = vunpack.c.l.b16 %v692
    %v2067 = vunpack.c.h.b16 %v692
    %v2068 = vunpack.c.l.b16 %v693
    %v2069 = vunpack.c.h.b16 %v693
    %v2070 = vunpack.c.l.b16 %v694
    %v2071 = vunpack.c.h.b16 %v694
    %v2072 = vunpack.c.l.b16 %v695
    %v2073 = vunpack.c.h.b16 %v695
    %v2074 = vunpack.c.l.b16 %v696
    %v2075 = vunpack.c.h.b16 %v696
    %v2076 = vunpack.c.l.b16 %v697
    %v2077 = vunpack.c.h.b16 %v697
    %v2078 = vunpack.c.l.b16 %v698
    %v2079 = vunpack.c.h.b16 %v698
    %v2080 = vunpack.c.l.b16 %v699
    %v2081 = vunpack.c.h.b16 %v699
    %v2082 = vunpack.c.l.b16 %v700
    %v2083 = vunpack.c.h.b16 %v700
    %v2084 = vunpack.c.l.b16 %v701
    %v2085 = vunpack.c.h.b16 %v701
    %v2086 = vunpack.c.l.b16 %v702
    %v2087 = vunpack.c.h.b16 %v702
    %v2088 = vunpack.c.l.b16 %v703
    %v2089 = vunpack.c.h.b16 %v703
    %v2090 = vunpack.c.l.b16 %v704
    %v2091 = vunpack.c.h.b16 %v704
    %v2092 = vunpack.c.l.b16 %v705
    %v2093 = vunpack.c.h.b16 %v705
    %v2094 = vunpack.c.l.b16 %v706
    %v2095 = vunpack.c.h.b16 %v706
    %v2096 = vunpack.c.l.b16 %v707
    %v2097 = vunpack.c.h.b16 %v707
    %v2098 = vunpack.c.l.b16 %v708
    %v2099 = vunpack.c.h.b16 %v708
    %v2100 = vunpack.c.l.b16 %v709
    %v2101 = vunpack.c.h.b16 %v709
    %v2102 = vunpack.c.l.b16 %v710
    %v2103 = vunpack.c.h.b16 %v710
    %v2104 = vunpack.c.l.b16 %v711
    %v2105 = vunpack.c.h.b16 %v711
    %v2106 = vunpack.c.l.b16 %v712
    %v2107 = vunpack.c.h.b16 %v712
    %v2108 = vunpack.c.l.b16 %v713
    %v2109 = vunpack.c.h.b16 %v713
    %v2110 = vunpack.c.l.b16 %v714
    %v2111 = vunpack.c.h.b16 %v714
    %v2112 = vunpack.c.l.b16 %v715
    %v2113 = vunpack.c.h.b16 %v715
    %v2114 = vunpack.c.l.b16 %v716
    %v2115 = vunpack.c.h.b16 %v716
    %v2116 = vunpack.c.l.b16 %v717
    %v2117 = vunpack.c.h.b16 %v717
    %v2118 = vunpack.c.l.b16 %v718
    %v2119 = vunpack.c.h.b16 %v718
    %v2120 = vunpack.c.l.b16 %v719
    %v2121 = vunpack.c.h.b16 %v719
    %v2122 = vunpack.c.l.b16 %v720
    %v2123 = vunpack.c.h.b16 %v720
    %v2124 = vunpack.c.l.b16 %v721
    %v2125 = vunpack.c.h.b16 %v721
    %v2126 = vunpack.c.l.b16 %v722
    %v2127 = vunpack.c.h.b16 %v722
    %v2128 = vunpack.c.l.b16 %v723
    %v2129 = vunpack.c.h.b16 %v723
    %v2130 = vunpack.c.l.b16 %v724
    %v2131 = vunpack.c.h.b16 %v724
    %v2132 = vunpack.c.l.b16 %v725
    %v2133 = vunpack.c.h.b16 %v725
    %v2134 = vunpack.c.l.b16 %v726
    %v2135 = vunpack.c.h.b16 %v726
    %v2136 = vunpack.c.l.b16 %v727
    %v2137 = vunpack.c.h.b16 %v727
    %v2138 = vunpack.c.l.b16 %v728
    %v2139 = vunpack.c.h.b16 %v728
    %v2140 = vunpack.c.l.b16 %v729
    %v2141 = vunpack.c.h.b16 %v729
    %v2142 = vunpack.c.l.b16 %v730
    %v2143 = vunpack.c.h.b16 %v730
    %v2144 = vunpack.c.l.b16 %v731
    %v2145 = vunpack.c.h.b16 %v731
    %v2146 = vunpack.c.l.b16 %v732
    %v2147 = vunpack.c.h.b16 %v732
    %v2148 = vunpack.c.l.b16 %v733
    %v2149 = vunpack.c.h.b16 %v733
    %v2150 = vunpack.c.l.b16 %v734
    %v2151 = vunpack.c.h.b16 %v734
    %v2152 = vunpack.c.l.b16 %v735
    %v2153 = vunpack.c.h.b16 %v735
    %v2154 = vunpack.c.l.b16 %v736
    %v2155 = vunpack.c.h.b16 %v736
    %v2156 = vunpack.c.l.b16 %v737
    %v2157 = vunpack.c.h.b16 %v737
    %v2158 = vunpack.c.l.b16 %v738
    %v2159 = vunpack.c.h.b16 %v738
    %v2160 = vunpack.c.l.b16 %v739
    %v2161 = vunpack.c.h.b16 %v739
    %v2162 = vunpack.c.l.b16 %v740
    %v2163 = vunpack.c.h.b16 %v740
    %v2164 = vunpack.c.l.b16 %v741
    %v2165 = vunpack.c.h.b16 %v741
    %v2166 = vunpack.c.l.b16 %v742
    %v2167 = vunpack.c.h.b16 %v742
    %v2168 = vunpack.c.l.b16 %v743
    %v2169 = vunpack.c.h.b16 %v743
    %v2170 = vunpack.c.l.b16 %v744
    %v2171 = vunpack.c.h.b16 %v744
    %v2172 = vunpack.c.l.b16 %v745
    %v2173 = vunpack.c.h.b16 %v745
    %v2174 = vunpack.c.l.b16 %v746
    %v2175 = vunpack.c.h.b16 %v746
    %v2176 = vunpack.c.l.b16 %v747
    %v2177 = vunpack.c.h.b16 %v747
    %v2178 = vunpack.c.l.b16 %v748
    %v2179 = vunpack.c.h.b16 %v748
    %v2180 = vunpack.c.l.b16 %v749
    %v2181 = vunpack.c.h.b16 %v749
    %v2182 = vunpack.c.l.b16 %v750
    %v2183 = vunpack.c.h.b16 %v750
    %v2184 = vunpack.c.l.b16 %v751
    %v2185 = vunpack.c.h.b16 %v751
    %v2186 = vunpack.c.l.b16 %v752
    %v2187 = vunpack.c.h.b16 %v752
    %v2188 = vunpack.c.l.b16 %v753
    %v2189 = vunpack.c.h.b16 %v753
    %v2190 = vunpack.c.l.b16 %v754
    %v2191 = vunpack.c.h.b16 %v754
    %v2192 = vunpack.c.l.b16 %v755
    %v2193 = vunpack.c.h.b16 %v755
    %v2194 = vunpack.c.l.b16 %v756
    %v2195 = vunpack.c.h.b16 %v756
    %v2196 = vunpack.c.l.b16 %v757
    %v2197 = vunpack.c.h.b16 %v757
    %v2198 = vunpack.c.l.b16 %v758
    %v2199 = vunpack.c.h.b16 %v758
    %v2200 = vunpack.c.l.b16 %v759
    %v2201 = vunpack.c.h.b16 %v759
    %v2202 = vunpack.c.l.b16 %v760
    %v2203 = vunpack.c.h.b16 %v760
    %v2204 = vunpack.c.l.b16 %v761
    %v2205 = vunpack.c.h.b16 %v761
    %v2206 = vunpack.c.l.b16 %v762
    %v2207 = vunpack.c.h.b16 %v762
    %v2208 = vunpack.c.l.b16 %v763
    %v2209 = vunpack.c.h.b16 %v763
    %v2210 = vunpack.c.l.b16 %v764
    %v2211 = vunpack.c.h.b16 %v764
    %v2212 = vunpack.c.l.b16 %v765
    %v2213 = vunpack.c.h.b16 %v765
    %v2214 = vunpack.c.l.b16 %v766
    %v2215 = vunpack.c.h.b16 %v766
    %v2216 = vunpack.c.l.b16 %v767
    %v2217 = vunpack.c.h.b16 %v767
    %v2218 = vunpack.c.l.b16 %v768
    %v2219 = vunpack.c.h.b16 %v768
    %v2220 = vunpack.c.l.b16 %v769
    %v2221 = vunpack.c.h.b16 %v769
    %v2222 = vunpack.c.l.b16 %v770
    %v2223 = vunpack.c.h.b16 %v770
    %v2224 = vunpack.c.l.b16 %v771
    %v2225 = vunpack.c.h.b16 %v771
    %v2226 = vunpack.c.l.b16 %v772
    %v2227 = vunpack.c.h.b16 %v772
    %v2228 = vunpack.c.l.b16 %v773
    %v2229 = vunpack.c.h.b16 %v773
    %v2230 = vunpack.c.l.b16 %v774
    %v2231 = vunpack.c.h.b16 %v774
    %v2232 = vunpack.c.l.b16 %v775
    %v2233 = vunpack.c.h.b16 %v775
    %v2234 = vunpack.c.l.b16 %v776
    %v2235 = vunpack.c.h.b16 %v776
    %v2236 = vunpack.c.l.b16 %v777
    %v2237 = vunpack.c.h.b16 %v777
    %v2238 = vunpack.c.l.b16 %v778
    %v2239 = vunpack.c.h.b16 %v778
    %v2240 = vunpack.c.l.b16 %v779
    %v2241 = vunpack.c.h.b16 %v779
    %v2242 = vunpack.c.l.b16 %v780
    %v2243 = vunpack.c.h.b16 %v780
    %v2244 = vunpack.c.l.b16 %v781
    %v2245 = vunpack.c.h.b16 %v781
    %v2246 = vunpack.c.l.b16 %v782
    %v2247 = vunpack.c.h.b16 %v782
    %v2248 = vunpack.c.l.b16 %v783
    %v2249 = vunpack.c.h.b16 %v783
    %v2250 = vunpack.c.l.b16 %v784
    %v2251 = vunpack.c.h.b16 %v784
    %v2252 = vunpack.c.l.b16 %v785
    %v2253 = vunpack.c.h.b16 %v785
    %v2254 = vunpack.c.l.b16 %v786
    %v2255 = vunpack.c.h.b16 %v786
    %v2256 = vunpack.c.l.b16 %v787
    %v2257 = vunpack.c.h.b16 %v787
    %v2258 = vunpack.c.l.b16 %v788
    %v2259 = vunpack.c.h.b16 %v788
    %v2260 = vunpack.c.l.b16 %v789
    %v2261 = vunpack.c.h.b16 %v789
    %v2262 = vunpack.c.l.b16 %v790
    %v2263 = vunpack.c.h.b16 %v790
    %v2264 = vunpack.c.l.b16 %v791
    %v2265 = vunpack.c.h.b16 %v791
    %v2266 = vunpack.c.l.b16 %v792
    %v2267 = vunpack.c.h.b16 %v792
    %v2268 = vunpack.c.l.b16 %v793
    %v2269 = vunpack.c.h.b16 %v793
    %v2270 = vunpack.c.l.b16 %v794
    %v2271 = vunpack.c.h.b16 %v794
    %v2272 = vunpack.c.l.b16 %v795
    %v2273 = vunpack.c.h.b16 %v795
    %v2274 = vunpack.c.l.b16 %v796
    %v2275 = vunpack.c.h.b16 %v796
    %v2276 = vunpack.c.l.b16 %v797
    %v2277 = vunpack.c.h.b16 %v797
    %v2278 = vunpack.c.l.b16 %v798
    %v2279 = vunpack.c.h.b16 %v798
    %v2280 = vunpack.c.l.b16 %v799
    %v2281 = vunpack.c.h.b16 %v799
    %v2282 = vunpack.c.l.b16 %v800
    %v2283 = vunpack.c.h.b16 %v800
    %v2284 = vunpack.c.l.b16 %v801
    %v2285 = vunpack.c.h.b16 %v801
    %v2286 = vunpack.c.l.b16 %v802
    %v2287 = vunpack.c.h.b16 %v802
    %v2288 = vunpack.c.l.b16 %v803
    %v2289 = vunpack.c.h.b16 %v803
    %v2290 = vunpack.c.l.b16 %v804
    %v2291 = vunpack.c.h.b16 %v804
    %v2292 = vunpack.c.l.b16 %v805
    %v2293 = vunpack.c.h.b16 %v805
    %v2294 = vunpack.c.l.b16 %v806
    %v2295 = vunpack.c.h.b16 %v806
    %v2296 = vunpack.c.l.b16 %v807
    %v2297 = vunpack.c.h.b16 %v807
    %v2298 = vunpack.c.l.b16 %v808
    %v2299 = vunpack.c.h.b16 %v808
    %v2300 = vunpack.c.l.b16 %v809
    %v2301 = vunpack.c.h.b16 %v809
    %v2302 = vunpack.c.l.b16 %v810
    %v2303 = vunpack.c.h.b16 %v810
    %v2304 = vunpack.c.l.b16 %v811
    %v2305 = vunpack.c.h.b16 %v811
    %v2306 = vunpack.c.l.b16 %v812
    %v2307 = vunpack.c.h.b16 %v812
    %v2308 = vunpack.c.l.b16 %v813
    %v2309 = vunpack.c.h.b16 %v813
    %v2310 = vunpack.c.l.b16 %v814
    %v2311 = vunpack.c.h.b16 %v814
    %v2312 = vunpack.c.l.b16 %v815
    %v2313 = vunpack.c.h.b16 %v815
    %v2314 = vunpack.c.l.b16 %v816
    %v2315 = vunpack.c.h.b16 %v816
    %v2316 = vunpack.c.l.b16 %v817
    %v2317 = vunpack.c.h.b16 %v817
    %v2318 = vunpack.c.l.b16 %v818
    %v2319 = vunpack.c.h.b16 %v818
    %v2320 = vunpack.c.l.b16 %v819
    %v2321 = vunpack.c.h.b16 %v819
    %v2322 = vunpack.c.l.b16 %v820
    %v2323 = vunpack.c.h.b16 %v820
    %v2324 = vunpack.c.l.b16 %v821
    %v2325 = vunpack.c.h.b16 %v821
    %v2326 = vunpack.c.l.b16 %v822
    %v2327 = vunpack.c.h.b16 %v822
    %v2328 = vunpack.c.l.b16 %v823
    %v2329 = vunpack.c.h.b16 %v823
    %v2330 = vunpack.c.l.b16 %v824
    %v2331 = vunpack.c.h.b16 %v824
    %v2332 = vunpack.c.l.b16 %v825
    %v2333 = vunpack.c.h.b16 %v825
    %v2334 = vunpack.c.l.b16 %v826
    %v2335 = vunpack.c.h.b16 %v826
    %v2336 = vunpack.c.l.b16 %v827
    %v2337 = vunpack.c.h.b16 %v827
    %v2338 = vunpack.c.l.b16 %v828
    %v2339 = vunpack.c.h.b16 %v828
    %v2340 = vunpack.c.l.b16 %v829
    %v2341 = vunpack.c.h.b16 %v829
    %v2342 = vunpack.c.l.b16 %v830
    %v2343 = vunpack.c.h.b16 %v830
    %v2344 = vunpack.c.l.b16 %v831
    %v2345 = vunpack.c.h.b16 %v831
    %v2346 = vunpack.c.l.b16 %v832
    %v2347 = vunpack.c.h.b16 %v832
    %v2348 = vunpack.c.l.b16 %v833
    %v2349 = vunpack.c.h.b16 %v833
    %v2350 = vunpack.c.l.b16 %v834
    %v2351 = vunpack.c.h.b16 %v834
    %v2352 = vunpack.c.l.b16 %v835
    %v2353 = vunpack.c.h.b16 %v835
    %v2354 = vunpack.c.l.b16 %v836
    %v2355 = vunpack.c.h.b16 %v836
    %v2356 = vunpack.c.l.b16 %v837
    %v2357 = vunpack.c.h.b16 %v837
    %v2358 = vunpack.c.l.b16 %v838
    %v2359 = vunpack.c.h.b16 %v838
    %v2360 = vunpack.c.l.b16 %v839
    %v2361 = vunpack.c.h.b16 %v839
    %v2362 = vunpack.c.l.b16 %v840
    %v2363 = vunpack.c.h.b16 %v840
    %v2364 = vunpack.c.l.b16 %v841
    %v2365 = vunpack.c.h.b16 %v841
    %v2366 = vunpack.c.l.b16 %v842
    %v2367 = vunpack.c.h.b16 %v842
    %v2368 = vunpack.c.l.b16 %v843
    %v2369 = vunpack.c.h.b16 %v843
    %v2370 = vunpack.c.l.b16 %v844
    %v2371 = vunpack.c.h.b16 %v844
    %v2372 = vunpack.c.l.b16 %v845
    %v2373 = vunpack.c.h.b16 %v845
    %v2374 = vunpack.c.l.b16 %v846
    %v2375 = vunpack.c.h.b16 %v846
    %v2376 = vunpack.c.l.b16 %v847
    %v2377 = vunpack.c.h.b16 %v847
    %v2378 = vunpack.c.l.b16 %v848
    %v2379 = vunpack.c.h.b16 %v848
    %v2380 = vunpack.c.l.b16 %v849
    %v2381 = vunpack.c.h.b16 %v849
    %v2382 = vunpack.c.l.b16 %v850
    %v2383 = vunpack.c.h.b16 %v850
    %v2384 = vunpack.c.l.b16 %v851
    %v2385 = vunpack.c.h.b16 %v851
    %v2386 = vunpack.c.l.b16 %v852
    %v2387 = vunpack.c.h.b16 %v852
    %v2388 = vunpack.c.l.b16 %v853
    %v2389 = vunpack.c.h.b16 %v853
    %v2390 = vunpack.c.l.b16 %v854
    %v2391 = vunpack.c.h.b16 %v854
    %v2392 = vunpack.c.l.b16 %v855
    %v2393 = vunpack.c.h.b16 %v855
    %v2394 = vunpack.c.l.b16 %v856
    %v2395 = vunpack.c.h.b16 %v856
    %v2396 = vunpack.c.l.b16 %v857
    %v2397 = vunpack.c.h.b16 %v857
    %v2398 = vunpack.c.l.b16 %v858
    %v2399 = vunpack.c.h.b16 %v858
    %v2400 = vunpack.c.l.b16 %v859
    %v2401 = vunpack.c.h.b16 %v859
    %v2402 = vunpack.c.l.b16 %v860
    %v2403 = vunpack.c.h.b16 %v860
    %v2404 = vunpack.c.l.b16 %v861
    %v2405 = vunpack.c.h.b16 %v861
    %v2406 = vunpack.c.l.b16 %v862
    %v2407 = vunpack.c.h.b16 %v862
    %v2408 = vunpack.c.l.b16 %v863
    %v2409 = vunpack.c.h.b16 %v863
    %v2410 = vunpack.c.l.b16 %v864
    %v2411 = vunpack.c.h.b16 %v864
    %v2412 = vunpack.c.l.b16 %v865
    %v2413 = vunpack.c.h.b16 %v865
    %v2414 = vunpack.c.l.b16 %v866
    %v2415 = vunpack.c.h.b16 %v866
    %v2416 = vunpack.c.l.b16 %v867
    %v2417 = vunpack.c.h.b16 %v867
    %v2418 = vunpack.c.l.b16 %v868
    %v2419 = vunpack.c.h.b16 %v868
    %v2420 = vunpack.c.l.b16 %v869
    %v2421 = vunpack.c.h.b16 %v869
    %v2422 = vunpack.c.l.b16 %v870
    %v2423 = vunpack.c.h.b16 %v870
    %v2424 = vunpack.c.l.b16 %v871
    %v2425 = vunpack.c.h.b16 %v871
    %v2426 = vpack.c.b16 %v1410, %v1402
    %v2427 = vpack.c.b16 %v1411, %v1403
    %v2428 = vpack.c.b16 %v1412, %v1404
    %v2429 = vpack.c.b16 %v1413, %v1405
    %v2430 = vpack.c.b16 %v1414, %v1406
    %v2431 = vpack.c.b16 %v1415, %v1407
    %v2432 = vpack.c.b16 %v1416, %v1408
    %v2433 = vpack.c.b16 %v1417, %v1409
    %v2434 = vpack.c.b16 %v1426, %v1418
    %v2435 = vpack.c.b16 %v1427, %v1419
    %v2436 = vpack.c.b16 %v1428, %v1420
    %v2437 = vpack.c.b16 %v1429, %v1421
    %v2438 = vpack.c.b16 %v1430, %v1422
    %v2439 = vpack.c.b16 %v1431, %v1423
    %v2440 = vpack.c.b16 %v1432, %v1424
    %v2441 = vpack.c.b16 %v1433, %v1425
    %v2442 = vpack.c.b16 %v1442, %v1434
    %v2443 = vpack.c.b16 %v1443, %v1435
    %v2444 = vpack.c.b16 %v1444, %v1436
    %v2445 = vpack.c.b16 %v1445, %v1437
    %v2446 = vpack.c.b16 %v1446, %v1438
    %v2447 = vpack.c.b16 %v1447, %v1439
    %v2448 = vpack.c.b16 %v1448, %v1440
    %v2449 = vpack.c.b16 %v1449, %v1441
    %v2450 = vpack.c.b16 %v1458, %v1450
    %v2451 = vpack.c.b16 %v1459, %v1451
    %v2452 = vpack.c.b16 %v1460, %v1452
    %v2453 = vpack.c.b16 %v1461, %v1453
    %v2454 = vpack.c.b16 %v1462, %v1454
    %v2455 = vpack.c.b16 %v1463, %v1455
    %v2456 = vpack.c.b16 %v1464, %v1456
    %v2457 = vpack.c.b16 %v1465, %v1457
    %v2458 = vpack.c.b16 %v1474, %v1466
    %v2459 = vpack.c.b16 %v1475, %v1467
    %v2460 = vpack.c.b16 %v1476, %v1468
    %v2461 = vpack.c.b16 %v1477, %v1469
    %v2462 = vpack.c.b16 %v1478, %v1470
    %v2463 = vpack.c.b16 %v1479, %v1471
    %v2464 = vpack.c.b16 %v1480, %v1472
    %v2465 = vpack.c.b16 %v1481, %v1473
    %v2466 = vpack.c.b16 %v1490, %v1482
    %v2467 = vpack.c.b16 %v1491, %v1483
    %v2468 = vpack.c.b16 %v1492, %v1484
    %v2469 = vpack.c.b16 %v1493, %v1485
    %v2470 = vpack.c.b16 %v1494, %v1486
    %v2471 = vpack.c.b16 %v1495, %v1487
    %v2472 = vpack.c.b16 %v1496, %v1488
    %v2473 = vpack.c.b16 %v1497, %v1489
    %v2474 = vpack.c.b16 %v1506, %v1498
    %v2475 = vpack.c.b16 %v1507, %v1499
    %v2476 = vpack.c.b16 %v1508, %v1500
    %v2477 = vpack.c.b16 %v1509, %v1501
    %v2478 = vpack.c.b16 %v1510, %v1502
    %v2479 = vpack.c.b16 %v1511, %v1503
    %v2480 = vpack.c.b16 %v1512, %v1504
    %v2481 = vpack.c.b16 %v1513, %v1505
    %v2482 = vpack.c.b16 %v1522, %v1514
    %v2483 = vpack.c.b16 %v1523, %v1515
    %v2484 = vpack.c.b16 %v1524, %v1516
    %v2485 = vpack.c.b16 %v1525, %v1517
    %v2486 = vpack.c.b16 %v1526, %v1518
    %v2487 = vpack.c.b16 %v1527, %v1519
    %v2488 = vpack.c.b16 %v1528, %v1520
    %v2489 = vpack.c.b16 %v1529, %v1521
    %v2490 = vpack.c.b16 %v1538, %v1530
    %v2491 = vpack.c.b16 %v1539, %v1531
    %v2492 = vpack.c.b16 %v1540, %v1532
    %v2493 = vpack.c.b16 %v1541, %v1533
    %v2494 = vpack.c.b16 %v1542, %v1534
    %v2495 = vpack.c.b16 %v1543, %v1535
    %v2496 = vpack.c.b16 %v1544, %v1536
    %v2497 = vpack.c.b16 %v1545, %v1537
    %v2498 = vpack.c.b16 %v1554, %v1546
    %v2499 = vpack.c.b16 %v1555, %v1547
    %v2500 = vpack.c.b16 %v1556, %v1548
    %v2501 = vpack.c.b16 %v1557, %v1549
    %v2502 = vpack.c.b16 %v1558, %v1550
    %v2503 = vpack.c.b16 %v1559, %v1551
    %v2504 = vpack.c.b16 %v1560, %v1552
    %v2505 = vpack.c.b16 %v1561, %v1553
    %v2506 = vpack.c.b16 %v1570, %v1562
    %v2507 = vpack.c.b16 %v1571, %v1563
    %v2508 = vpack.c.b16 %v1572, %v1564
    %v2509 = vpack.c.b16 %v1573, %v1565
    %v2510 = vpack.c.b16 %v1574, %v1566
    %v2511 = vpack.c.b16 %v1575, %v1567
    %v2512 = vpack.c.b16 %v1576, %v1568
    %v2513 = vpack.c.b16 %v1577, %v1569
    %v2514 = vpack.c.b16 %v1586, %v1578
    %v2515 = vpack.c.b16 %v1587, %v1579
    %v2516 = vpack.c.b16 %v1588, %v1580
    %v2517 = vpack.c.b16 %v1589, %v1581
    %v2518 = vpack.c.b16 %v1590, %v1582
    %v2519 = vpack.c.b16 %v1591, %v1583
    %v2520 = vpack.c.b16 %v1592, %v1584
    %v2521 = vpack.c.b16 %v1593, %v1585
    %v2522 = vpack.c.b16 %v1602, %v1594
    %v2523 = vpack.c.b16 %v1603, %v1595
    %v2524 = vpack.c.b16 %v1604, %v1596
    %v2525 = vpack.c.b16 %v1605, %v1597
    %v2526 = vpack.c.b16 %v1606, %v1598
    %v2527 = vpack.c.b16 %v1607, %v1599
    %v2528 = vpack.c.b16 %v1608, %v1600
    %v2529 = vpack.c.b16 %v1609, %v1601
    %v2530 = vpack.c.b16 %v1618, %v1610
    %v2531 = vpack.c.b16 %v1619, %v1611
    %v2532 = vpack.c.b16 %v1620, %v1612
    %v2533 = vpack.c.b16 %v1621, %v1613
    %v2534 = vpack.c.b16 %v1622, %v1614
    %v2535 = vpack.c.b16 %v1623, %v1615
    %v2536 = vpack.c.b16 %v1624, %v1616
    %v2537 = vpack.c.b16 %v1625, %v1617
    %v2538 = vpack.c.b16 %v1634, %v1626
    %v2539 = vpack.c.b16 %v1635, %v1627
    %v2540 = vpack.c.b16 %v1636, %v1628
    %v2541 = vpack.c.b16 %v1637, %v1629
    %v2542 = vpack.c.b16 %v1638, %v1630
    %v2543 = vpack.c.b16 %v1639, %v1631
    %v2544 = vpack.c.b16 %v1640, %v1632
    %v2545 = vpack.c.b16 %v1641, %v1633
    %v2546 = vpack.c.b16 %v1650, %v1642
    %v2547 = vpack.c.b16 %v1651, %v1643
    %v2548 = vpack.c.b16 %v1652, %v1644
    %v2549 = vpack.c.b16 %v1653, %v1645
    %v2550 = vpack.c.b16 %v1654, %v1646
    %v2551 = vpack.c.b16 %v1655, %v1647
    %v2552 = vpack.c.b16 %v1656, %v1648
    %v2553 = vpack.c.b16 %v1657, %v1649
    %v2554 = vpack.c.b16 %v1666, %v1658
    %v2555 = vpack.c.b16 %v1667, %v1659
    %v2556 = vpack.c.b16 %v1668, %v1660
    %v2557 = vpack.c.b16 %v1669, %v1661
    %v2558 = vpack.c.b16 %v1670, %v1662
    %v2559 = vpack.c.b16 %v1671, %v1663
    %v2560 = vpack.c.b16 %v1672, %v1664
    %v2561 = vpack.c.b16 %v1673, %v1665
    %v2562 = vpack.c.b16 %v1682, %v1674
    %v2563 = vpack.c.b16 %v1683, %v1675
    %v2564 = vpack.c.b16 %v1684, %v1676
    %v2565 = vpack.c.b16 %v1685, %v1677
    %v2566 = vpack.c.b16 %v1686, %v1678
    %v2567 = vpack.c.b16 %v1687, %v1679
    %v2568 = vpack.c.b16 %v1688, %v1680
    %v2569 = vpack.c.b16 %v1689, %v1681
    %v2570 = vpack.c.b16 %v1698, %v1690
    %v2571 = vpack.c.b16 %v1699, %v1691
    %v2572 = vpack.c.b16 %v1700, %v1692
    %v2573 = vpack.c.b16 %v1701, %v1693
    %v2574 = vpack.c.b16 %v1702, %v1694
    %v2575 = vpack.c.b16 %v1703, %v1695
    %v2576 = vpack.c.b16 %v1704, %v1696
    %v2577 = vpack.c.b16 %v1705, %v1697
    %v2578 = vpack.c.b16 %v1714, %v1706
    %v2579 = vpack.c.b16 %v1715, %v1707
    %v2580 = vpack.c.b16 %v1716, %v1708
    %v2581 = vpack.c.b16 %v1717, %v1709
    %v2582 = vpack.c.b16 %v1718, %v1710
    %v2583 = vpack.c.b16 %v1719, %v1711
    %v2584 = vpack.c.b16 %v1720, %v1712
    %v2585 = vpack.c.b16 %v1721, %v1713
    %v2586 = vpack.c.b16 %v1730, %v1722
    %v2587 = vpack.c.b16 %v1731, %v1723
    %v2588 = vpack.c.b16 %v1732, %v1724
    %v2589 = vpack.c.b16 %v1733, %v1725
    %v2590 = vpack.c.b16 %v1734, %v1726
    %v2591 = vpack.c.b16 %v1735, %v1727
    %v2592 = vpack.c.b16 %v1736, %v1728
    %v2593 = vpack.c.b16 %v1737, %v1729
    %v2594 = vpack.c.b16 %v1746, %v1738
    %v2595 = vpack.c.b16 %v1747, %v1739
    %v2596 = vpack.c.b16 %v1748, %v1740
    %v2597 = vpack.c.b16 %v1749, %v1741
    %v2598 = vpack.c.b16 %v1750, %v1742
    %v2599 = vpack.c.b16 %v1751, %v1743
    %v2600 = vpack.c.b16 %v1752, %v1744
    %v2601 = vpack.c.b16 %v1753, %v1745
    %v2602 = vpack.c.b16 %v1762, %v1754
    %v2603 = vpack.c.b16 %v1763, %v1755
    %v2604 = vpack.c.b16 %v1764, %v1756
    %v2605 = vpack.c.b16 %v1765, %v1757
    %v2606 = vpack.c.b16 %v1766, %v1758
    %v2607 = vpack.c.b16 %v1767, %v1759
    %v2608 = vpack.c.b16 %v1768, %v1760
    %v2609 = vpack.c.b16 %v1769, %v1761
    %v2610 = vpack.c.b16 %v1778, %v1770
    %v2611 = vpack.c.b16 %v1779, %v1771
    %v2612 = vpack.c.b16 %v1780, %v1772
    %v2613 = vpack.c.b16 %v1781, %v1773
    %v2614 = vpack.c.b16 %v1782, %v1774
    %v2615 = vpack.c.b16 %v1783, %v1775
    %v2616 = vpack.c.b16 %v1784, %v1776
    %v2617 = vpack.c.b16 %v1785, %v1777
    %v2618 = vpack.c.b16 %v1794, %v1786
    %v2619 = vpack.c.b16 %v1795, %v1787
    %v2620 = vpack.c.b16 %v1796, %v1788
    %v2621 = vpack.c.b16 %v1797, %v1789
    %v2622 = vpack.c.b16 %v1798, %v1790
    %v2623 = vpack.c.b16 %v1799, %v1791
    %v2624 = vpack.c.b16 %v1800, %v1792
    %v2625 = vpack.c.b16 %v1801, %v1793
    %v2626 = vpack.c.b16 %v1810, %v1802
    %v2627 = vpack.c.b16 %v1811, %v1803
    %v2628 = vpack.c.b16 %v1812, %v1804
    %v2629 = vpack.c.b16 %v1813, %v1805
    %v2630 = vpack.c.b16 %v1814, %v1806
    %v2631 = vpack.c.b16 %v1815, %v1807
    %v2632 = vpack.c.b16 %v1816, %v1808
    %v2633 = vpack.c.b16 %v1817, %v1809
    %v2634 = vpack.c.b16 %v1826, %v1818
    %v2635 = vpack.c.b16 %v1827, %v1819
    %v2636 = vpack.c.b16 %v1828, %v1820
    %v2637 = vpack.c.b16 %v1829, %v1821
    %v2638 = vpack.c.b16 %v1830, %v1822
    %v2639 = vpack.c.b16 %v1831, %v1823
    %v2640 = vpack.c.b16 %v1832, %v1824
    %v2641 = vpack.c.b16 %v1833, %v1825
    %v2642 = vpack.c.b16 %v1842, %v1834
    %v2643 = vpack.c.b16 %v1843, %v1835
    %v2644 = vpack.c.b16 %v1844, %v1836
    %v2645 = vpack.c.b16 %v1845, %v1837
    %v2646 = vpack.c.b16 %v1846, %v1838
    %v2647 = vpack.c.b16 %v1847, %v1839
    %v2648 = vpack.c.b16 %v1848, %v1840
    %v2649 = vpack.c.b16 %v1849, %v1841
    %v2650 = vpack.c.b16 %v1858, %v1850
    %v2651 = vpack.c.b16 %v1859, %v1851
    %v2652 = vpack.c.b16 %v1860, %v1852
    %v2653 = vpack.c.b16 %v1861, %v1853
    %v2654 = vpack.c.b16 %v1862, %v1854
    %v2655 = vpack.c.b16 %v1863, %v1855
    %v2656 = vpack.c.b16 %v1864, %v1856
    %v2657 = vpack.c.b16 %v1865, %v1857
    %v2658 = vpack.c.b16 %v1874, %v1866
    %v2659 = vpack.c.b16 %v1875, %v1867
    %v2660 = vpack.c.b16 %v1876, %v1868
    %v2661 = vpack.c.b16 %v1877, %v1869
    %v2662 = vpack.c.b16 %v1878, %v1870
    %v2663 = vpack.c.b16 %v1879, %v1871
    %v2664 = vpack.c.b16 %v1880, %v1872
    %v2665 = vpack.c.b16 %v1881, %v1873
    %v2666 = vpack.c.b16 %v1890, %v1882
    %v2667 = vpack.c.b16 %v1891, %v1883
    %v2668 = vpack.c.b16 %v1892, %v1884
    %v2669 = vpack.c.b16 %v1893, %v1885
    %v2670 = vpack.c.b16 %v1894, %v1886
    %v2671 = vpack.c.b16 %v1895, %v1887
    %v2672 = vpack.c.b16 %v1896, %v1888
    %v2673 = vpack.c.b16 %v1897, %v1889
    %v2674 = vpack.c.b16 %v1906, %v1898
    %v2675 = vpack.c.b16 %v1907, %v1899
    %v2676 = vpack.c.b16 %v1908, %v1900
    %v2677 = vpack.c.b16 %v1909, %v1901
    %v2678 = vpack.c.b16 %v1910, %v1902
    %v2679 = vpack.c.b16 %v1911, %v1903
    %v2680 = vpack.c.b16 %v1912, %v1904
    %v2681 = vpack.c.b16 %v1913, %v1905
    %v2682 = vpack.c.b16 %v1922, %v1914
    %v2683 = vpack.c.b16 %v1923, %v1915
    %v2684 = vpack.c.b16 %v1924, %v1916
    %v2685 = vpack.c.b16 %v1925, %v1917
    %v2686 = vpack.c.b16 %v1926, %v1918
    %v2687 = vpack.c.b16 %v1927, %v1919
    %v2688 = vpack.c.b16 %v1928, %v1920
    %v2689 = vpack.c.b16 %v1929, %v1921
    %v2690 = vpack.c.b16 %v1938, %v1930
    %v2691 = vpack.c.b16 %v1939, %v1931
    %v2692 = vpack.c.b16 %v1940, %v1932
    %v2693 = vpack.c.b16 %v1941, %v1933
    %v2694 = vpack.c.b16 %v1942, %v1934
    %v2695 = vpack.c.b16 %v1943, %v1935
    %v2696 = vpack.c.b16 %v1944, %v1936
    %v2697 = vpack.c.b16 %v1945, %v1937
    %v2698 = vpack.c.b16 %v1954, %v1946
    %v2699 = vpack.c.b16 %v1955, %v1947
    %v2700 = vpack.c.b16 %v1956, %v1948
    %v2701 = vpack.c.b16 %v1957, %v1949
    %v2702 = vpack.c.b16 %v1958, %v1950
    %v2703 = vpack.c.b16 %v1959, %v1951
    %v2704 = vpack.c.b16 %v1960, %v1952
    %v2705 = vpack.c.b16 %v1961, %v1953
    %v2706 = vpack.c.b16 %v1970, %v1962
    %v2707 = vpack.c.b16 %v1971, %v1963
    %v2708 = vpack.c.b16 %v1972, %v1964
    %v2709 = vpack.c.b16 %v1973, %v1965
    %v2710 = vpack.c.b16 %v1974, %v1966
    %v2711 = vpack.c.b16 %v1975, %v1967
    %v2712 = vpack.c.b16 %v1976, %v1968
    %v2713 = vpack.c.b16 %v1977, %v1969
    %v2714 = vpack.c.b16 %v1986, %v1978
    %v2715 = vpack.c.b16 %v1987, %v1979
    %v2716 = vpack.c.b16 %v1988, %v1980
    %v2717 = vpack.c.b16 %v1989, %v1981
    %v2718 = vpack.c.b16 %v1990, %v1982
    %v2719 = vpack.c.b16 %v1991, %v1983
    %v2720 = vpack.c.b16 %v1992, %v1984
    %v2721 = vpack.c.b16 %v1993, %v1985
    %v2722 = vpack.c.b16 %v2002, %v1994
    %v2723 = vpack.c.b16 %v2003, %v1995
    %v2724 = vpack.c.b16 %v2004, %v1996
    %v2725 = vpack.c.b16 %v2005, %v1997
    %v2726 = vpack.c.b16 %v2006, %v1998
    %v2727 = vpack.c.b16 %v2007, %v1999
    %v2728 = vpack.c.b16 %v2008, %v2000
    %v2729 = vpack.c.b16 %v2009, %v2001
    %v2730 = vpack.c.b16 %v2018, %v2010
    %v2731 = vpack.c.b16 %v2019, %v2011
    %v2732 = vpack.c.b16 %v2020, %v2012
    %v2733 = vpack.c.b16 %v2021, %v2013
    %v2734 = vpack.c.b16 %v2022, %v2014
    %v2735 = vpack.c.b16 %v2023, %v2015
    %v2736 = vpack.c.b16 %v2024, %v2016
    %v2737 = vpack.c.b16 %v2025, %v2017
    %v2738 = vpack.c.b16 %v2034, %v2026
    %v2739 = vpack.c.b16 %v2035, %v2027
    %v2740 = vpack.c.b16 %v2036, %v2028
    %v2741 = vpack.c.b16 %v2037, %v2029
    %v2742 = vpack.c.b16 %v2038, %v2030
    %v2743 = vpack.c.b16 %v2039, %v2031
    %v2744 = vpack.c.b16 %v2040, %v2032
    %v2745 = vpack.c.b16 %v2041, %v2033
    %v2746 = vpack.c.b16 %v2050, %v2042
    %v2747 = vpack.c.b16 %v2051, %v2043
    %v2748 = vpack.c.b16 %v2052, %v2044
    %v2749 = vpack.c.b16 %v2053, %v2045
    %v2750 = vpack.c.b16 %v2054, %v2046
    %v2751 = vpack.c.b16 %v2055, %v2047
    %v2752 = vpack.c.b16 %v2056, %v2048
    %v2753 = vpack.c.b16 %v2057, %v2049
    %v2754 = vpack.c.b16 %v2066, %v2058
    %v2755 = vpack.c.b16 %v2067, %v2059
    %v2756 = vpack.c.b16 %v2068, %v2060
    %v2757 = vpack.c.b16 %v2069, %v2061
    %v2758 = vpack.c.b16 %v2070, %v2062
    %v2759 = vpack.c.b16 %v2071, %v2063
    %v2760 = vpack.c.b16 %v2072, %v2064
    %v2761 = vpack.c.b16 %v2073, %v2065
    %v2762 = vpack.c.b16 %v2082, %v2074
    %v2763 = vpack.c.b16 %v2083, %v2075
    %v2764 = vpack.c.b16 %v2084, %v2076
    %v2765 = vpack.c.b16 %v2085, %v2077
    %v2766 = vpack.c.b16 %v2086, %v2078
    %v2767 = vpack.c.b16 %v2087, %v2079
    %v2768 = vpack.c.b16 %v2088, %v2080
    %v2769 = vpack.c.b16 %v2089, %v2081
    %v2770 = vpack.c.b16 %v2098, %v2090
    %v2771 = vpack.c.b16 %v2099, %v2091
    %v2772 = vpack.c.b16 %v2100, %v2092
    %v2773 = vpack.c.b16 %v2101, %v2093
    %v2774 = vpack.c.b16 %v2102, %v2094
    %v2775 = vpack.c.b16 %v2103, %v2095
    %v2776 = vpack.c.b16 %v2104, %v2096
    %v2777 = vpack.c.b16 %v2105, %v2097
    %v2778 = vpack.c.b16 %v2114, %v2106
    %v2779 = vpack.c.b16 %v2115, %v2107
    %v2780 = vpack.c.b16 %v2116, %v2108
    %v2781 = vpack.c.b16 %v2117, %v2109
    %v2782 = vpack.c.b16 %v2118, %v2110
    %v2783 = vpack.c.b16 %v2119, %v2111
    %v2784 = vpack.c.b16 %v2120, %v2112
    %v2785 = vpack.c.b16 %v2121, %v2113
    %v2786 = vpack.c.b16 %v2130, %v2122
    %v2787 = vpack.c.b16 %v2131, %v2123
    %v2788 = vpack.c.b16 %v2132, %v2124
    %v2789 = vpack.c.b16 %v2133, %v2125
    %v2790 = vpack.c.b16 %v2134, %v2126
    %v2791 = vpack.c.b16 %v2135, %v2127
    %v2792 = vpack.c.b16 %v2136, %v2128
    %v2793 = vpack.c.b16 %v2137, %v2129
    %v2794 = vpack.c.b16 %v2146, %v2138
    %v2795 = vpack.c.b16 %v2147, %v2139
    %v2796 = vpack.c.b16 %v2148, %v2140
    %v2797 = vpack.c.b16 %v2149, %v2141
    %v2798 = vpack.c.b16 %v2150, %v2142
    %v2799 = vpack.c.b16 %v2151, %v2143
    %v2800 = vpack.c.b16 %v2152, %v2144
    %v2801 = vpack.c.b16 %v2153, %v2145
    %v2802 = vpack.c.b16 %v2162, %v2154
    %v2803 = vpack.c.b16 %v2163, %v2155
    %v2804 = vpack.c.b16 %v2164, %v2156
    %v2805 = vpack.c.b16 %v2165, %v2157
    %v2806 = vpack.c.b16 %v2166, %v2158
    %v2807 = vpack.c.b16 %v2167, %v2159
    %v2808 = vpack.c.b16 %v2168, %v2160
    %v2809 = vpack.c.b16 %v2169, %v2161
    %v2810 = vpack.c.b16 %v2178, %v2170
    %v2811 = vpack.c.b16 %v2179, %v2171
    %v2812 = vpack.c.b16 %v2180, %v2172
    %v2813 = vpack.c.b16 %v2181, %v2173
    %v2814 = vpack.c.b16 %v2182, %v2174
    %v2815 = vpack.c.b16 %v2183, %v2175
    %v2816 = vpack.c.b16 %v2184, %v2176
    %v2817 = vpack.c.b16 %v2185, %v2177
    %v2818 = vpack.c.b16 %v2194, %v2186
    %v2819 = vpack.c.b16 %v2195, %v2187
    %v2820 = vpack.c.b16 %v2196, %v2188
    %v2821 = vpack.c.b16 %v2197, %v2189
    %v2822 = vpack.c.b16 %v2198, %v2190
    %v2823 = vpack.c.b16 %v2199, %v2191
    %v2824 = vpack.c.b16 %v2200, %v2192
    %v2825 = vpack.c.b16 %v2201, %v2193
    %v2826 = vpack.c.b16 %v2210, %v2202
    %v2827 = vpack.c.b16 %v2211, %v2203
    %v2828 = vpack.c.b16 %v2212, %v2204
    %v2829 = vpack.c.b16 %v2213, %v2205
    %v2830 = vpack.c.b16 %v2214, %v2206
    %v2831 = vpack.c.b16 %v2215, %v2207
    %v2832 = vpack.c.b16 %v2216, %v2208
    %v2833 = vpack.c.b16 %v2217, %v2209
    %v2834 = vpack.c.b16 %v2226, %v2218
    %v2835 = vpack.c.b16 %v2227, %v2219
    %v2836 = vpack.c.b16 %v2228, %v2220
    %v2837 = vpack.c.b16 %v2229, %v2221
    %v2838 = vpack.c.b16 %v2230, %v2222
    %v2839 = vpack.c.b16 %v2231, %v2223
    %v2840 = vpack.c.b16 %v2232, %v2224
    %v2841 = vpack.c.b16 %v2233, %v2225
    %v2842 = vpack.c.b16 %v2242, %v2234
    %v2843 = vpack.c.b16 %v2243, %v2235
    %v2844 = vpack.c.b16 %v2244, %v2236
    %v2845 = vpack.c.b16 %v2245, %v2237
    %v2846 = vpack.c.b16 %v2246, %v2238
    %v2847 = vpack.c.b16 %v2247, %v2239
    %v2848 = vpack.c.b16 %v2248, %v2240
    %v2849 = vpack.c.b16 %v2249, %v2241
    %v2850 = vpack.c.b16 %v2258, %v2250
    %v2851 = vpack.c.b16 %v2259, %v2251
    %v2852 = vpack.c.b16 %v2260, %v2252
    %v2853 = vpack.c.b16 %v2261, %v2253
    %v2854 = vpack.c.b16 %v2262, %v2254
    %v2855 = vpack.c.b16 %v2263, %v2255
    %v2856 = vpack.c.b16 %v2264, %v2256
    %v2857 = vpack.c.b16 %v2265, %v2257
    %v2858 = vpack.c.b16 %v2274, %v2266
    %v2859 = vpack.c.b16 %v2275, %v2267
    %v2860 = vpack.c.b16 %v2276, %v2268
    %v2861 = vpack.c.b16 %v2277, %v2269
    %v2862 = vpack.c.b16 %v2278, %v2270
    %v2863 = vpack.c.b16 %v2279, %v2271
    %v2864 = vpack.c.b16 %v2280, %v2272
    %v2865 = vpack.c.b16 %v2281, %v2273
    %v2866 = vpack.c.b16 %v2290, %v2282
    %v2867 = vpack.c.b16 %v2291, %v2283
    %v2868 = vpack.c.b16 %v2292, %v2284
    %v2869 = vpack.c.b16 %v2293, %v2285
    %v2870 = vpack.c.b16 %v2294, %v2286
    %v2871 = vpack.c.b16 %v2295, %v2287
    %v2872 = vpack.c.b16 %v2296, %v2288
    %v2873 = vpack.c.b16 %v2297, %v2289
    %v2874 = vpack.c.b16 %v2306, %v2298
    %v2875 = vpack.c.b16 %v2307, %v2299
    %v2876 = vpack.c.b16 %v2308, %v2300
    %v2877 = vpack.c.b16 %v2309, %v2301
    %v2878 = vpack.c.b16 %v2310, %v2302
    %v2879 = vpack.c.b16 %v2311, %v2303
    %v2880 = vpack.c.b16 %v2312, %v2304
    %v2881 = vpack.c.b16 %v2313, %v2305
    %v2882 = vpack.c.b16 %v2322, %v2314
    %v2883 = vpack.c.b16 %v2323, %v2315
    %v2884 = vpack.c.b16 %v2324, %v2316
    %v2885 = vpack.c.b16 %v2325, %v2317
    %v2886 = vpack.c.b16 %v2326, %v2318
    %v2887 = vpack.c.b16 %v2327, %v2319
    %v2888 = vpack.c.b16 %v2328, %v2320
    %v2889 = vpack.c.b16 %v2329, %v2321
    %v2890 = vpack.c.b16 %v2338, %v2330
    %v2891 = vpack.c.b16 %v2339, %v2331
    %v2892 = vpack.c.b16 %v2340, %v2332
    %v2893 = vpack.c.b16 %v2341, %v2333
    %v2894 = vpack.c.b16 %v2342, %v2334
    %v2895 = vpack.c.b16 %v2343, %v2335
    %v2896 = vpack.c.b16 %v2344, %v2336
    %v2897 = vpack.c.b16 %v2345, %v2337
    %v2898 = vpack.c.b16 %v2354, %v2346
    %v2899 = vpack.c.b16 %v2355, %v2347
    %v2900 = vpack.c.b16 %v2356, %v2348
    %v2901 = vpack.c.b16 %v2357, %v2349
    %v2902 = vpack.c.b16 %v2358, %v2350
    %v2903 = vpack.c.b16 %v2359, %v2351
    %v2904 = vpack.c.b16 %v2360, %v2352
    %v2905 = vpack.c.b16 %v2361, %v2353
    %v2906 = vpack.c.b16 %v2370, %v2362
    %v2907 = vpack.c.b16 %v2371, %v2363
    %v2908 = vpack.c.b16 %v2372, %v2364
    %v2909 = vpack.c.b16 %v2373, %v2365
    %v2910 = vpack.c.b16 %v2374, %v2366
    %v2911 = vpack.c.b16 %v2375, %v2367
    %v2912 = vpack.c.b16 %v2376, %v2368
    %v2913 = vpack.c.b16 %v2377, %v2369
    %v2914 = vpack.c.b16 %v2386, %v2378
    %v2915 = vpack.c.b16 %v2387, %v2379
    %v2916 = vpack.c.b16 %v2388, %v2380
    %v2917 = vpack.c.b16 %v2389, %v2381
    %v2918 = vpack.c.b16 %v2390, %v2382
    %v2919 = vpack.c.b16 %v2391, %v2383
    %v2920 = vpack.c.b16 %v2392, %v2384
    %v2921 = vpack.c.b16 %v2393, %v2385
    %v2922 = vpack.c.b16 %v2402, %v2394
    %v2923 = vpack.c.b16 %v2403, %v2395
    %v2924 = vpack.c.b16 %v2404, %v2396
    %v2925 = vpack.c.b16 %v2405, %v2397
    %v2926 = vpack.c.b16 %v2406, %v2398
    %v2927 = vpack.c.b16 %v2407, %v2399
    %v2928 = vpack.c.b16 %v2408, %v2400
    %v2929 = vpack.c.b16 %v2409, %v2401
    %v2930 = vpack.c.b16 %v2418, %v2410
    %v2931 = vpack.c.b16 %v2419, %v2411
    %v2932 = vpack.c.b16 %v2420, %v2412
    %v2933 = vpack.c.b16 %v2421, %v2413
    %v2934 = vpack.c.b16 %v2422, %v2414
    %v2935 = vpack.c.b16 %v2423, %v2415
    %v2936 = vpack.c.b16 %v2424, %v2416
    %v2937 = vpack.c.b16 %v2425, %v2417
    %3450 = vmatpush.bf16.msra.mxu0 %v2482
    %3451 = vmatpush.bf16.msra.mxu0 %v2474
    %3452 = vmatpush.bf16.msra.mxu0 %v2466
    %3453 = vmatpush.bf16.msra.mxu0 %v2458
    %3454 = vmatpush.bf16.msra.mxu0 %v2450
    %3455 = vmatpush.bf16.msra.mxu0 %v2442
    %3456 = vmatpush.bf16.msra.mxu0 %v2434
    %3457 = vmatpush.bf16.msra.mxu0 %v2426
    %3458 = vmatmul.bf16.gmra.mxu0 %v352
    %v3459 = vpop.f32.mrf.mxu0
    %v3460 = vadd.f32 %v874, %v3459
    %v3461 = vpop.f32.mrf.mxu0
    %v3462 = vadd.f32 %v874, %v3461
    %3463 = vdwg.mxu0
    %3464 = vmatpush.bf16.msra.mxu0 %v2546
    %3465 = vmatpush.bf16.msra.mxu0 %v2538
    %3466 = vmatpush.bf16.msra.mxu0 %v2530
    %3467 = vmatpush.bf16.msra.mxu0 %v2522
    %3468 = vmatpush.bf16.msra.mxu0 %v2514
    %3469 = vmatpush.bf16.msra.mxu0 %v2506
    %3470 = vmatpush.bf16.msra.mxu0 %v2498
    %3471 = vmatpush.bf16.msra.mxu0 %v2490
    %3472 = vmatmul.bf16.gmra.mxu0 %v353
    %v3473 = vpop.f32.mrf.mxu0
    %v3474 = vadd.f32 %v3460, %v3473
    %v3475 = vpop.f32.mrf.mxu0
    %v3476 = vadd.f32 %v3462, %v3475
    %3477 = vdwg.mxu0
    %3478 = vmatpush.bf16.msra.mxu0 %v2610
    %3479 = vmatpush.bf16.msra.mxu0 %v2602
    %3480 = vmatpush.bf16.msra.mxu0 %v2594
    %3481 = vmatpush.bf16.msra.mxu0 %v2586
    %3482 = vmatpush.bf16.msra.mxu0 %v2578
    %3483 = vmatpush.bf16.msra.mxu0 %v2570
    %3484 = vmatpush.bf16.msra.mxu0 %v2562
    %3485 = vmatpush.bf16.msra.mxu0 %v2554
    %3486 = vmatmul.bf16.gmra.mxu0 %v354
    %v3487 = vpop.f32.mrf.mxu0
    %v3488 = vadd.f32 %v3474, %v3487
    %v3489 = vpop.f32.mrf.mxu0
    %v3490 = vadd.f32 %v3476, %v3489
    %3491 = vdwg.mxu0
    %3492 = vmatpush.bf16.msra.mxu0 %v2674
    %3493 = vmatpush.bf16.msra.mxu0 %v2666
    %3494 = vmatpush.bf16.msra.mxu0 %v2658
    %3495 = vmatpush.bf16.msra.mxu0 %v2650
    %3496 = vmatpush.bf16.msra.mxu0 %v2642
    %3497 = vmatpush.bf16.msra.mxu0 %v2634
    %3498 = vmatpush.bf16.msra.mxu0 %v2626
    %3499 = vmatpush.bf16.msra.mxu0 %v2618
    %3500 = vmatmul.bf16.gmra.mxu0 %v355
    %v3501 = vpop.f32.mrf.mxu0
    %v3502 = vadd.f32 %v3488, %v3501
    %v3503 = vpop.f32.mrf.mxu0
    %v3504 = vadd.f32 %v3490, %v3503
    %3505 = vdwg.mxu0
    %3506 = vmatpush.bf16.msra.mxu0 %v2738
    %3507 = vmatpush.bf16.msra.mxu0 %v2730
    %3508 = vmatpush.bf16.msra.mxu0 %v2722
    %3509 = vmatpush.bf16.msra.mxu0 %v2714
    %3510 = vmatpush.bf16.msra.mxu0 %v2706
    %3511 = vmatpush.bf16.msra.mxu0 %v2698
    %3512 = vmatpush.bf16.msra.mxu0 %v2690
    %3513 = vmatpush.bf16.msra.mxu0 %v2682
    %3514 = vmatmul.bf16.gmra.mxu0 %v356
    %v3515 = vpop.f32.mrf.mxu0
    %v3516 = vadd.f32 %v3502, %v3515
    %v3517 = vpop.f32.mrf.mxu0
    %v3518 = vadd.f32 %v3504, %v3517
    %3519 = vdwg.mxu0
    %3520 = vmatpush.bf16.msra.mxu0 %v2802
    %3521 = vmatpush.bf16.msra.mxu0 %v2794
    %3522 = vmatpush.bf16.msra.mxu0 %v2786
    %3523 = vmatpush.bf16.msra.mxu0 %v2778
    %3524 = vmatpush.bf16.msra.mxu0 %v2770
    %3525 = vmatpush.bf16.msra.mxu0 %v2762
    %3526 = vmatpush.bf16.msra.mxu0 %v2754
    %3527 = vmatpush.bf16.msra.mxu0 %v2746
    %3528 = vmatmul.bf16.gmra.mxu0 %v357
    %v3529 = vpop.f32.mrf.mxu0
    %v3530 = vadd.f32 %v3516, %v3529
    %v3531 = vpop.f32.mrf.mxu0
    %v3532 = vadd.f32 %v3518, %v3531
    %3533 = vdwg.mxu0
    %3534 = vmatpush.bf16.msra.mxu0 %v2866
    %3535 = vmatpush.bf16.msra.mxu0 %v2858
    %3536 = vmatpush.bf16.msra.mxu0 %v2850
    %3537 = vmatpush.bf16.msra.mxu0 %v2842
    %3538 = vmatpush.bf16.msra.mxu0 %v2834
    %3539 = vmatpush.bf16.msra.mxu0 %v2826
    %3540 = vmatpush.bf16.msra.mxu0 %v2818
    %3541 = vmatpush.bf16.msra.mxu0 %v2810
    %3542 = vmatmul.bf16.gmra.mxu0 %v358
    %v3543 = vpop.f32.mrf.mxu0
    %v3544 = vadd.f32 %v3530, %v3543
    %v3545 = vpop.f32.mrf.mxu0
    %v3546 = vadd.f32 %v3532, %v3545
    %3547 = vdwg.mxu0
    %3548 = vmatpush.bf16.msra.mxu0 %v2930
    %3549 = vmatpush.bf16.msra.mxu0 %v2922
    %3550 = vmatpush.bf16.msra.mxu0 %v2914
    %3551 = vmatpush.bf16.msra.mxu0 %v2906
    %3552 = vmatpush.bf16.msra.mxu0 %v2898
    %3553 = vmatpush.bf16.msra.mxu0 %v2890
    %3554 = vmatpush.bf16.msra.mxu0 %v2882
    %3555 = vmatpush.bf16.msra.mxu0 %v2874
    %3556 = vmatmul.bf16.gmra.mxu0 %v359
    %v3557 = vpop.f32.mrf.mxu0
    %v3558 = vadd.f32 %v3544, %v3557
    %v3559 = vpop.f32.mrf.mxu0
    %v3560 = vadd.f32 %v3546, %v3559
    %3561 = vdwg.mxu0
    %3562 = vmatpush.bf16.msra.mxu0 %v2483
    %3563 = vmatpush.bf16.msra.mxu0 %v2475
    %3564 = vmatpush.bf16.msra.mxu0 %v2467
    %3565 = vmatpush.bf16.msra.mxu0 %v2459
    %3566 = vmatpush.bf16.msra.mxu0 %v2451
    %3567 = vmatpush.bf16.msra.mxu0 %v2443
    %3568 = vmatpush.bf16.msra.mxu0 %v2435
    %3569 = vmatpush.bf16.msra.mxu0 %v2427
    %3570 = vmatmul.bf16.gmra.mxu0 %v352
    %v3571 = vpop.f32.mrf.mxu0
    %v3572 = vadd.f32 %v875, %v3571
    %v3573 = vpop.f32.mrf.mxu0
    %v3574 = vadd.f32 %v875, %v3573
    %3575 = vdwg.mxu0
    %3576 = vmatpush.bf16.msra.mxu0 %v2547
    %3577 = vmatpush.bf16.msra.mxu0 %v2539
    %3578 = vmatpush.bf16.msra.mxu0 %v2531
    %3579 = vmatpush.bf16.msra.mxu0 %v2523
    %3580 = vmatpush.bf16.msra.mxu0 %v2515
    %3581 = vmatpush.bf16.msra.mxu0 %v2507
    %3582 = vmatpush.bf16.msra.mxu0 %v2499
    %3583 = vmatpush.bf16.msra.mxu0 %v2491
    %3584 = vmatmul.bf16.gmra.mxu0 %v353
    %v3585 = vpop.f32.mrf.mxu0
    %v3586 = vadd.f32 %v3572, %v3585
    %v3587 = vpop.f32.mrf.mxu0
    %v3588 = vadd.f32 %v3574, %v3587
    %3589 = vdwg.mxu0
    %3590 = vmatpush.bf16.msra.mxu0 %v2611
    %3591 = vmatpush.bf16.msra.mxu0 %v2603
    %3592 = vmatpush.bf16.msra.mxu0 %v2595
    %3593 = vmatpush.bf16.msra.mxu0 %v2587
    %3594 = vmatpush.bf16.msra.mxu0 %v2579
    %3595 = vmatpush.bf16.msra.mxu0 %v2571
    %3596 = vmatpush.bf16.msra.mxu0 %v2563
    %3597 = vmatpush.bf16.msra.mxu0 %v2555
    %3598 = vmatmul.bf16.gmra.mxu0 %v354
    %v3599 = vpop.f32.mrf.mxu0
    %v3600 = vadd.f32 %v3586, %v3599
    %v3601 = vpop.f32.mrf.mxu0
    %v3602 = vadd.f32 %v3588, %v3601
    %3603 = vdwg.mxu0
    %3604 = vmatpush.bf16.msra.mxu0 %v2675
    %3605 = vmatpush.bf16.msra.mxu0 %v2667
    %3606 = vmatpush.bf16.msra.mxu0 %v2659
    %3607 = vmatpush.bf16.msra.mxu0 %v2651
    %3608 = vmatpush.bf16.msra.mxu0 %v2643
    %3609 = vmatpush.bf16.msra.mxu0 %v2635
    %3610 = vmatpush.bf16.msra.mxu0 %v2627
    %3611 = vmatpush.bf16.msra.mxu0 %v2619
    %3612 = vmatmul.bf16.gmra.mxu0 %v355
    %v3613 = vpop.f32.mrf.mxu0
    %v3614 = vadd.f32 %v3600, %v3613
    %v3615 = vpop.f32.mrf.mxu0
    %v3616 = vadd.f32 %v3602, %v3615
    %3617 = vdwg.mxu0
    %3618 = vmatpush.bf16.msra.mxu0 %v2739
    %3619 = vmatpush.bf16.msra.mxu0 %v2731
    %3620 = vmatpush.bf16.msra.mxu0 %v2723
    %3621 = vmatpush.bf16.msra.mxu0 %v2715
    %3622 = vmatpush.bf16.msra.mxu0 %v2707
    %3623 = vmatpush.bf16.msra.mxu0 %v2699
    %3624 = vmatpush.bf16.msra.mxu0 %v2691
    %3625 = vmatpush.bf16.msra.mxu0 %v2683
    %3626 = vmatmul.bf16.gmra.mxu0 %v356
    %v3627 = vpop.f32.mrf.mxu0
    %v3628 = vadd.f32 %v3614, %v3627
    %v3629 = vpop.f32.mrf.mxu0
    %v3630 = vadd.f32 %v3616, %v3629
    %3631 = vdwg.mxu0
    %3632 = vmatpush.bf16.msra.mxu0 %v2803
    %3633 = vmatpush.bf16.msra.mxu0 %v2795
    %3634 = vmatpush.bf16.msra.mxu0 %v2787
    %3635 = vmatpush.bf16.msra.mxu0 %v2779
    %3636 = vmatpush.bf16.msra.mxu0 %v2771
    %3637 = vmatpush.bf16.msra.mxu0 %v2763
    %3638 = vmatpush.bf16.msra.mxu0 %v2755
    %3639 = vmatpush.bf16.msra.mxu0 %v2747
    %3640 = vmatmul.bf16.gmra.mxu0 %v357
    %v3641 = vpop.f32.mrf.mxu0
    %v3642 = vadd.f32 %v3628, %v3641
    %v3643 = vpop.f32.mrf.mxu0
    %v3644 = vadd.f32 %v3630, %v3643
    %3645 = vdwg.mxu0
    %3646 = vmatpush.bf16.msra.mxu0 %v2867
    %3647 = vmatpush.bf16.msra.mxu0 %v2859
    %3648 = vmatpush.bf16.msra.mxu0 %v2851
    %3649 = vmatpush.bf16.msra.mxu0 %v2843
    %3650 = vmatpush.bf16.msra.mxu0 %v2835
    %3651 = vmatpush.bf16.msra.mxu0 %v2827
    %3652 = vmatpush.bf16.msra.mxu0 %v2819
    %3653 = vmatpush.bf16.msra.mxu0 %v2811
    %3654 = vmatmul.bf16.gmra.mxu0 %v358
    %v3655 = vpop.f32.mrf.mxu0
    %v3656 = vadd.f32 %v3642, %v3655
    %v3657 = vpop.f32.mrf.mxu0
    %v3658 = vadd.f32 %v3644, %v3657
    %3659 = vdwg.mxu0
    %3660 = vmatpush.bf16.msra.mxu0 %v2931
    %3661 = vmatpush.bf16.msra.mxu0 %v2923
    %3662 = vmatpush.bf16.msra.mxu0 %v2915
    %3663 = vmatpush.bf16.msra.mxu0 %v2907
    %3664 = vmatpush.bf16.msra.mxu0 %v2899
    %3665 = vmatpush.bf16.msra.mxu0 %v2891
    %3666 = vmatpush.bf16.msra.mxu0 %v2883
    %3667 = vmatpush.bf16.msra.mxu0 %v2875
    %3668 = vmatmul.bf16.gmra.mxu0 %v359
    %v3669 = vpop.f32.mrf.mxu0
    %v3670 = vadd.f32 %v3656, %v3669
    %v3671 = vpop.f32.mrf.mxu0
    %v3672 = vadd.f32 %v3658, %v3671
    %3673 = vdwg.mxu0
    %3674 = vmatpush.bf16.msra.mxu0 %v2484
    %3675 = vmatpush.bf16.msra.mxu0 %v2476
    %3676 = vmatpush.bf16.msra.mxu0 %v2468
    %3677 = vmatpush.bf16.msra.mxu0 %v2460
    %3678 = vmatpush.bf16.msra.mxu0 %v2452
    %3679 = vmatpush.bf16.msra.mxu0 %v2444
    %3680 = vmatpush.bf16.msra.mxu0 %v2436
    %3681 = vmatpush.bf16.msra.mxu0 %v2428
    %3682 = vmatmul.bf16.gmra.mxu0 %v352
    %v3683 = vpop.f32.mrf.mxu0
    %v3684 = vadd.f32 %v876, %v3683
    %v3685 = vpop.f32.mrf.mxu0
    %v3686 = vadd.f32 %v876, %v3685
    %3687 = vdwg.mxu0
    %3688 = vmatpush.bf16.msra.mxu0 %v2548
    %3689 = vmatpush.bf16.msra.mxu0 %v2540
    %3690 = vmatpush.bf16.msra.mxu0 %v2532
    %3691 = vmatpush.bf16.msra.mxu0 %v2524
    %3692 = vmatpush.bf16.msra.mxu0 %v2516
    %3693 = vmatpush.bf16.msra.mxu0 %v2508
    %3694 = vmatpush.bf16.msra.mxu0 %v2500
    %3695 = vmatpush.bf16.msra.mxu0 %v2492
    %3696 = vmatmul.bf16.gmra.mxu0 %v353
    %v3697 = vpop.f32.mrf.mxu0
    %v3698 = vadd.f32 %v3684, %v3697
    %v3699 = vpop.f32.mrf.mxu0
    %v3700 = vadd.f32 %v3686, %v3699
    %3701 = vdwg.mxu0
    %3702 = vmatpush.bf16.msra.mxu0 %v2612
    %3703 = vmatpush.bf16.msra.mxu0 %v2604
    %3704 = vmatpush.bf16.msra.mxu0 %v2596
    %3705 = vmatpush.bf16.msra.mxu0 %v2588
    %3706 = vmatpush.bf16.msra.mxu0 %v2580
    %3707 = vmatpush.bf16.msra.mxu0 %v2572
    %3708 = vmatpush.bf16.msra.mxu0 %v2564
    %3709 = vmatpush.bf16.msra.mxu0 %v2556
    %3710 = vmatmul.bf16.gmra.mxu0 %v354
    %v3711 = vpop.f32.mrf.mxu0
    %v3712 = vadd.f32 %v3698, %v3711
    %v3713 = vpop.f32.mrf.mxu0
    %v3714 = vadd.f32 %v3700, %v3713
    %3715 = vdwg.mxu0
    %3716 = vmatpush.bf16.msra.mxu0 %v2676
    %3717 = vmatpush.bf16.msra.mxu0 %v2668
    %3718 = vmatpush.bf16.msra.mxu0 %v2660
    %3719 = vmatpush.bf16.msra.mxu0 %v2652
    %3720 = vmatpush.bf16.msra.mxu0 %v2644
    %3721 = vmatpush.bf16.msra.mxu0 %v2636
    %3722 = vmatpush.bf16.msra.mxu0 %v2628
    %3723 = vmatpush.bf16.msra.mxu0 %v2620
    %3724 = vmatmul.bf16.gmra.mxu0 %v355
    %v3725 = vpop.f32.mrf.mxu0
    %v3726 = vadd.f32 %v3712, %v3725
    %v3727 = vpop.f32.mrf.mxu0
    %v3728 = vadd.f32 %v3714, %v3727
    %3729 = vdwg.mxu0
    %3730 = vmatpush.bf16.msra.mxu0 %v2740
    %3731 = vmatpush.bf16.msra.mxu0 %v2732
    %3732 = vmatpush.bf16.msra.mxu0 %v2724
    %3733 = vmatpush.bf16.msra.mxu0 %v2716
    %3734 = vmatpush.bf16.msra.mxu0 %v2708
    %3735 = vmatpush.bf16.msra.mxu0 %v2700
    %3736 = vmatpush.bf16.msra.mxu0 %v2692
    %3737 = vmatpush.bf16.msra.mxu0 %v2684
    %3738 = vmatmul.bf16.gmra.mxu0 %v356
    %v3739 = vpop.f32.mrf.mxu0
    %v3740 = vadd.f32 %v3726, %v3739
    %v3741 = vpop.f32.mrf.mxu0
    %v3742 = vadd.f32 %v3728, %v3741
    %3743 = vdwg.mxu0
    %3744 = vmatpush.bf16.msra.mxu0 %v2804
    %3745 = vmatpush.bf16.msra.mxu0 %v2796
    %3746 = vmatpush.bf16.msra.mxu0 %v2788
    %3747 = vmatpush.bf16.msra.mxu0 %v2780
    %3748 = vmatpush.bf16.msra.mxu0 %v2772
    %3749 = vmatpush.bf16.msra.mxu0 %v2764
    %3750 = vmatpush.bf16.msra.mxu0 %v2756
    %3751 = vmatpush.bf16.msra.mxu0 %v2748
    %3752 = vmatmul.bf16.gmra.mxu0 %v357
    %v3753 = vpop.f32.mrf.mxu0
    %v3754 = vadd.f32 %v3740, %v3753
    %v3755 = vpop.f32.mrf.mxu0
    %v3756 = vadd.f32 %v3742, %v3755
    %3757 = vdwg.mxu0
    %3758 = vmatpush.bf16.msra.mxu0 %v2868
    %3759 = vmatpush.bf16.msra.mxu0 %v2860
    %3760 = vmatpush.bf16.msra.mxu0 %v2852
    %3761 = vmatpush.bf16.msra.mxu0 %v2844
    %3762 = vmatpush.bf16.msra.mxu0 %v2836
    %3763 = vmatpush.bf16.msra.mxu0 %v2828
    %3764 = vmatpush.bf16.msra.mxu0 %v2820
    %3765 = vmatpush.bf16.msra.mxu0 %v2812
    %3766 = vmatmul.bf16.gmra.mxu0 %v358
    %v3767 = vpop.f32.mrf.mxu0
    %v3768 = vadd.f32 %v3754, %v3767
    %v3769 = vpop.f32.mrf.mxu0
    %v3770 = vadd.f32 %v3756, %v3769
    %3771 = vdwg.mxu0
    %3772 = vmatpush.bf16.msra.mxu0 %v2932
    %3773 = vmatpush.bf16.msra.mxu0 %v2924
    %3774 = vmatpush.bf16.msra.mxu0 %v2916
    %3775 = vmatpush.bf16.msra.mxu0 %v2908
    %3776 = vmatpush.bf16.msra.mxu0 %v2900
    %3777 = vmatpush.bf16.msra.mxu0 %v2892
    %3778 = vmatpush.bf16.msra.mxu0 %v2884
    %3779 = vmatpush.bf16.msra.mxu0 %v2876
    %3780 = vmatmul.bf16.gmra.mxu0 %v359
    %v3781 = vpop.f32.mrf.mxu0
    %v3782 = vadd.f32 %v3768, %v3781
    %v3783 = vpop.f32.mrf.mxu0
    %v3784 = vadd.f32 %v3770, %v3783
    %3785 = vdwg.mxu0
    %3786 = vmatpush.bf16.msra.mxu0 %v2485
    %3787 = vmatpush.bf16.msra.mxu0 %v2477
    %3788 = vmatpush.bf16.msra.mxu0 %v2469
    %3789 = vmatpush.bf16.msra.mxu0 %v2461
    %3790 = vmatpush.bf16.msra.mxu0 %v2453
    %3791 = vmatpush.bf16.msra.mxu0 %v2445
    %3792 = vmatpush.bf16.msra.mxu0 %v2437
    %3793 = vmatpush.bf16.msra.mxu0 %v2429
    %3794 = vmatmul.bf16.gmra.mxu0 %v352
    %v3795 = vpop.f32.mrf.mxu0
    %v3796 = vadd.f32 %v877, %v3795
    %v3797 = vpop.f32.mrf.mxu0
    %v3798 = vadd.f32 %v877, %v3797
    %3799 = vdwg.mxu0
    %3800 = vmatpush.bf16.msra.mxu0 %v2549
    %3801 = vmatpush.bf16.msra.mxu0 %v2541
    %3802 = vmatpush.bf16.msra.mxu0 %v2533
    %3803 = vmatpush.bf16.msra.mxu0 %v2525
    %3804 = vmatpush.bf16.msra.mxu0 %v2517
    %3805 = vmatpush.bf16.msra.mxu0 %v2509
    %3806 = vmatpush.bf16.msra.mxu0 %v2501
    %3807 = vmatpush.bf16.msra.mxu0 %v2493
    %3808 = vmatmul.bf16.gmra.mxu0 %v353
    %v3809 = vpop.f32.mrf.mxu0
    %v3810 = vadd.f32 %v3796, %v3809
    %v3811 = vpop.f32.mrf.mxu0
    %v3812 = vadd.f32 %v3798, %v3811
    %3813 = vdwg.mxu0
    %3814 = vmatpush.bf16.msra.mxu0 %v2613
    %3815 = vmatpush.bf16.msra.mxu0 %v2605
    %3816 = vmatpush.bf16.msra.mxu0 %v2597
    %3817 = vmatpush.bf16.msra.mxu0 %v2589
    %3818 = vmatpush.bf16.msra.mxu0 %v2581
    %3819 = vmatpush.bf16.msra.mxu0 %v2573
    %3820 = vmatpush.bf16.msra.mxu0 %v2565
    %3821 = vmatpush.bf16.msra.mxu0 %v2557
    %3822 = vmatmul.bf16.gmra.mxu0 %v354
    %v3823 = vpop.f32.mrf.mxu0
    %v3824 = vadd.f32 %v3810, %v3823
    %v3825 = vpop.f32.mrf.mxu0
    %v3826 = vadd.f32 %v3812, %v3825
    %3827 = vdwg.mxu0
    %3828 = vmatpush.bf16.msra.mxu0 %v2677
    %3829 = vmatpush.bf16.msra.mxu0 %v2669
    %3830 = vmatpush.bf16.msra.mxu0 %v2661
    %3831 = vmatpush.bf16.msra.mxu0 %v2653
    %3832 = vmatpush.bf16.msra.mxu0 %v2645
    %3833 = vmatpush.bf16.msra.mxu0 %v2637
    %3834 = vmatpush.bf16.msra.mxu0 %v2629
    %3835 = vmatpush.bf16.msra.mxu0 %v2621
    %3836 = vmatmul.bf16.gmra.mxu0 %v355
    %v3837 = vpop.f32.mrf.mxu0
    %v3838 = vadd.f32 %v3824, %v3837
    %v3839 = vpop.f32.mrf.mxu0
    %v3840 = vadd.f32 %v3826, %v3839
    %3841 = vdwg.mxu0
    %3842 = vmatpush.bf16.msra.mxu0 %v2741
    %3843 = vmatpush.bf16.msra.mxu0 %v2733
    %3844 = vmatpush.bf16.msra.mxu0 %v2725
    %3845 = vmatpush.bf16.msra.mxu0 %v2717
    %3846 = vmatpush.bf16.msra.mxu0 %v2709
    %3847 = vmatpush.bf16.msra.mxu0 %v2701
    %3848 = vmatpush.bf16.msra.mxu0 %v2693
    %3849 = vmatpush.bf16.msra.mxu0 %v2685
    %3850 = vmatmul.bf16.gmra.mxu0 %v356
    %v3851 = vpop.f32.mrf.mxu0
    %v3852 = vadd.f32 %v3838, %v3851
    %v3853 = vpop.f32.mrf.mxu0
    %v3854 = vadd.f32 %v3840, %v3853
    %3855 = vdwg.mxu0
    %3856 = vmatpush.bf16.msra.mxu0 %v2805
    %3857 = vmatpush.bf16.msra.mxu0 %v2797
    %3858 = vmatpush.bf16.msra.mxu0 %v2789
    %3859 = vmatpush.bf16.msra.mxu0 %v2781
    %3860 = vmatpush.bf16.msra.mxu0 %v2773
    %3861 = vmatpush.bf16.msra.mxu0 %v2765
    %3862 = vmatpush.bf16.msra.mxu0 %v2757
    %3863 = vmatpush.bf16.msra.mxu0 %v2749
    %3864 = vmatmul.bf16.gmra.mxu0 %v357
    %v3865 = vpop.f32.mrf.mxu0
    %v3866 = vadd.f32 %v3852, %v3865
    %v3867 = vpop.f32.mrf.mxu0
    %v3868 = vadd.f32 %v3854, %v3867
    %3869 = vdwg.mxu0
    %3870 = vmatpush.bf16.msra.mxu0 %v2869
    %3871 = vmatpush.bf16.msra.mxu0 %v2861
    %3872 = vmatpush.bf16.msra.mxu0 %v2853
    %3873 = vmatpush.bf16.msra.mxu0 %v2845
    %3874 = vmatpush.bf16.msra.mxu0 %v2837
    %3875 = vmatpush.bf16.msra.mxu0 %v2829
    %3876 = vmatpush.bf16.msra.mxu0 %v2821
    %3877 = vmatpush.bf16.msra.mxu0 %v2813
    %3878 = vmatmul.bf16.gmra.mxu0 %v358
    %v3879 = vpop.f32.mrf.mxu0
    %v3880 = vadd.f32 %v3866, %v3879
    %v3881 = vpop.f32.mrf.mxu0
    %v3882 = vadd.f32 %v3868, %v3881
    %3883 = vdwg.mxu0
    %3884 = vmatpush.bf16.msra.mxu0 %v2933
    %3885 = vmatpush.bf16.msra.mxu0 %v2925
    %3886 = vmatpush.bf16.msra.mxu0 %v2917
    %3887 = vmatpush.bf16.msra.mxu0 %v2909
    %3888 = vmatpush.bf16.msra.mxu0 %v2901
    %3889 = vmatpush.bf16.msra.mxu0 %v2893
    %3890 = vmatpush.bf16.msra.mxu0 %v2885
    %3891 = vmatpush.bf16.msra.mxu0 %v2877
    %3892 = vmatmul.bf16.gmra.mxu0 %v359
    %v3893 = vpop.f32.mrf.mxu0
    %v3894 = vadd.f32 %v3880, %v3893
    %v3895 = vpop.f32.mrf.mxu0
    %v3896 = vadd.f32 %v3882, %v3895
    %3897 = vdwg.mxu0
    %3898 = vmatpush.bf16.msra.mxu0 %v2486
    %3899 = vmatpush.bf16.msra.mxu0 %v2478
    %3900 = vmatpush.bf16.msra.mxu0 %v2470
    %3901 = vmatpush.bf16.msra.mxu0 %v2462
    %3902 = vmatpush.bf16.msra.mxu0 %v2454
    %3903 = vmatpush.bf16.msra.mxu0 %v2446
    %3904 = vmatpush.bf16.msra.mxu0 %v2438
    %3905 = vmatpush.bf16.msra.mxu0 %v2430
    %3906 = vmatmul.bf16.gmra.mxu0 %v352
    %v3907 = vpop.f32.mrf.mxu0
    %v3908 = vadd.f32 %v878, %v3907
    %v3909 = vpop.f32.mrf.mxu0
    %v3910 = vadd.f32 %v878, %v3909
    %3911 = vdwg.mxu0
    %3912 = vmatpush.bf16.msra.mxu0 %v2550
    %3913 = vmatpush.bf16.msra.mxu0 %v2542
    %3914 = vmatpush.bf16.msra.mxu0 %v2534
    %3915 = vmatpush.bf16.msra.mxu0 %v2526
    %3916 = vmatpush.bf16.msra.mxu0 %v2518
    %3917 = vmatpush.bf16.msra.mxu0 %v2510
    %3918 = vmatpush.bf16.msra.mxu0 %v2502
    %3919 = vmatpush.bf16.msra.mxu0 %v2494
    %3920 = vmatmul.bf16.gmra.mxu0 %v353
    %v3921 = vpop.f32.mrf.mxu0
    %v3922 = vadd.f32 %v3908, %v3921
    %v3923 = vpop.f32.mrf.mxu0
    %v3924 = vadd.f32 %v3910, %v3923
    %3925 = vdwg.mxu0
    %3926 = vmatpush.bf16.msra.mxu0 %v2614
    %3927 = vmatpush.bf16.msra.mxu0 %v2606
    %3928 = vmatpush.bf16.msra.mxu0 %v2598
    %3929 = vmatpush.bf16.msra.mxu0 %v2590
    %3930 = vmatpush.bf16.msra.mxu0 %v2582
    %3931 = vmatpush.bf16.msra.mxu0 %v2574
    %3932 = vmatpush.bf16.msra.mxu0 %v2566
    %3933 = vmatpush.bf16.msra.mxu0 %v2558
    %3934 = vmatmul.bf16.gmra.mxu0 %v354
    %v3935 = vpop.f32.mrf.mxu0
    %v3936 = vadd.f32 %v3922, %v3935
    %v3937 = vpop.f32.mrf.mxu0
    %v3938 = vadd.f32 %v3924, %v3937
    %3939 = vdwg.mxu0
    %3940 = vmatpush.bf16.msra.mxu0 %v2678
    %3941 = vmatpush.bf16.msra.mxu0 %v2670
    %3942 = vmatpush.bf16.msra.mxu0 %v2662
    %3943 = vmatpush.bf16.msra.mxu0 %v2654
    %3944 = vmatpush.bf16.msra.mxu0 %v2646
    %3945 = vmatpush.bf16.msra.mxu0 %v2638
    %3946 = vmatpush.bf16.msra.mxu0 %v2630
    %3947 = vmatpush.bf16.msra.mxu0 %v2622
    %3948 = vmatmul.bf16.gmra.mxu0 %v355
    %v3949 = vpop.f32.mrf.mxu0
    %v3950 = vadd.f32 %v3936, %v3949
    %v3951 = vpop.f32.mrf.mxu0
    %v3952 = vadd.f32 %v3938, %v3951
    %3953 = vdwg.mxu0
    %3954 = vmatpush.bf16.msra.mxu0 %v2742
    %3955 = vmatpush.bf16.msra.mxu0 %v2734
    %3956 = vmatpush.bf16.msra.mxu0 %v2726
    %3957 = vmatpush.bf16.msra.mxu0 %v2718
    %3958 = vmatpush.bf16.msra.mxu0 %v2710
    %3959 = vmatpush.bf16.msra.mxu0 %v2702
    %3960 = vmatpush.bf16.msra.mxu0 %v2694
    %3961 = vmatpush.bf16.msra.mxu0 %v2686
    %3962 = vmatmul.bf16.gmra.mxu0 %v356
    %v3963 = vpop.f32.mrf.mxu0
    %v3964 = vadd.f32 %v3950, %v3963
    %v3965 = vpop.f32.mrf.mxu0
    %v3966 = vadd.f32 %v3952, %v3965
    %3967 = vdwg.mxu0
    %3968 = vmatpush.bf16.msra.mxu0 %v2806
    %3969 = vmatpush.bf16.msra.mxu0 %v2798
    %3970 = vmatpush.bf16.msra.mxu0 %v2790
    %3971 = vmatpush.bf16.msra.mxu0 %v2782
    %3972 = vmatpush.bf16.msra.mxu0 %v2774
    %3973 = vmatpush.bf16.msra.mxu0 %v2766
    %3974 = vmatpush.bf16.msra.mxu0 %v2758
    %3975 = vmatpush.bf16.msra.mxu0 %v2750
    %3976 = vmatmul.bf16.gmra.mxu0 %v357
    %v3977 = vpop.f32.mrf.mxu0
    %v3978 = vadd.f32 %v3964, %v3977
    %v3979 = vpop.f32.mrf.mxu0
    %v3980 = vadd.f32 %v3966, %v3979
    %3981 = vdwg.mxu0
    %3982 = vmatpush.bf16.msra.mxu0 %v2870
    %3983 = vmatpush.bf16.msra.mxu0 %v2862
    %3984 = vmatpush.bf16.msra.mxu0 %v2854
    %3985 = vmatpush.bf16.msra.mxu0 %v2846
    %3986 = vmatpush.bf16.msra.mxu0 %v2838
    %3987 = vmatpush.bf16.msra.mxu0 %v2830
    %3988 = vmatpush.bf16.msra.mxu0 %v2822
    %3989 = vmatpush.bf16.msra.mxu0 %v2814
    %3990 = vmatmul.bf16.gmra.mxu0 %v358
    %v3991 = vpop.f32.mrf.mxu0
    %v3992 = vadd.f32 %v3978, %v3991
    %v3993 = vpop.f32.mrf.mxu0
    %v3994 = vadd.f32 %v3980, %v3993
    %3995 = vdwg.mxu0
    %3996 = vmatpush.bf16.msra.mxu0 %v2934
    %3997 = vmatpush.bf16.msra.mxu0 %v2926
    %3998 = vmatpush.bf16.msra.mxu0 %v2918
    %3999 = vmatpush.bf16.msra.mxu0 %v2910
    %4000 = vmatpush.bf16.msra.mxu0 %v2902
    %4001 = vmatpush.bf16.msra.mxu0 %v2894
    %4002 = vmatpush.bf16.msra.mxu0 %v2886
    %4003 = vmatpush.bf16.msra.mxu0 %v2878
    %4004 = vmatmul.bf16.gmra.mxu0 %v359
    %v4005 = vpop.f32.mrf.mxu0
    %v4006 = vadd.f32 %v3992, %v4005
    %v4007 = vpop.f32.mrf.mxu0
    %v4008 = vadd.f32 %v3994, %v4007
    %4009 = vdwg.mxu0
    %4010 = vmatpush.bf16.msra.mxu0 %v2487
    %4011 = vmatpush.bf16.msra.mxu0 %v2479
    %4012 = vmatpush.bf16.msra.mxu0 %v2471
    %4013 = vmatpush.bf16.msra.mxu0 %v2463
    %4014 = vmatpush.bf16.msra.mxu0 %v2455
    %4015 = vmatpush.bf16.msra.mxu0 %v2447
    %4016 = vmatpush.bf16.msra.mxu0 %v2439
    %4017 = vmatpush.bf16.msra.mxu0 %v2431
    %4018 = vmatmul.bf16.gmra.mxu0 %v352
    %v4019 = vpop.f32.mrf.mxu0
    %v4020 = vadd.f32 %v879, %v4019
    %v4021 = vpop.f32.mrf.mxu0
    %v4022 = vadd.f32 %v879, %v4021
    %4023 = vdwg.mxu0
    %4024 = vmatpush.bf16.msra.mxu0 %v2551
    %4025 = vmatpush.bf16.msra.mxu0 %v2543
    %4026 = vmatpush.bf16.msra.mxu0 %v2535
    %4027 = vmatpush.bf16.msra.mxu0 %v2527
    %4028 = vmatpush.bf16.msra.mxu0 %v2519
    %4029 = vmatpush.bf16.msra.mxu0 %v2511
    %4030 = vmatpush.bf16.msra.mxu0 %v2503
    %4031 = vmatpush.bf16.msra.mxu0 %v2495
    %4032 = vmatmul.bf16.gmra.mxu0 %v353
    %v4033 = vpop.f32.mrf.mxu0
    %v4034 = vadd.f32 %v4020, %v4033
    %v4035 = vpop.f32.mrf.mxu0
    %v4036 = vadd.f32 %v4022, %v4035
    %4037 = vdwg.mxu0
    %4038 = vmatpush.bf16.msra.mxu0 %v2615
    %4039 = vmatpush.bf16.msra.mxu0 %v2607
    %4040 = vmatpush.bf16.msra.mxu0 %v2599
    %4041 = vmatpush.bf16.msra.mxu0 %v2591
    %4042 = vmatpush.bf16.msra.mxu0 %v2583
    %4043 = vmatpush.bf16.msra.mxu0 %v2575
    %4044 = vmatpush.bf16.msra.mxu0 %v2567
    %4045 = vmatpush.bf16.msra.mxu0 %v2559
    %4046 = vmatmul.bf16.gmra.mxu0 %v354
    %v4047 = vpop.f32.mrf.mxu0
    %v4048 = vadd.f32 %v4034, %v4047
    %v4049 = vpop.f32.mrf.mxu0
    %v4050 = vadd.f32 %v4036, %v4049
    %4051 = vdwg.mxu0
    %4052 = vmatpush.bf16.msra.mxu0 %v2679
    %4053 = vmatpush.bf16.msra.mxu0 %v2671
    %4054 = vmatpush.bf16.msra.mxu0 %v2663
    %4055 = vmatpush.bf16.msra.mxu0 %v2655
    %4056 = vmatpush.bf16.msra.mxu0 %v2647
    %4057 = vmatpush.bf16.msra.mxu0 %v2639
    %4058 = vmatpush.bf16.msra.mxu0 %v2631
    %4059 = vmatpush.bf16.msra.mxu0 %v2623
    %4060 = vmatmul.bf16.gmra.mxu0 %v355
    %v4061 = vpop.f32.mrf.mxu0
    %v4062 = vadd.f32 %v4048, %v4061
    %v4063 = vpop.f32.mrf.mxu0
    %v4064 = vadd.f32 %v4050, %v4063
    %4065 = vdwg.mxu0
    %4066 = vmatpush.bf16.msra.mxu0 %v2743
    %4067 = vmatpush.bf16.msra.mxu0 %v2735
    %4068 = vmatpush.bf16.msra.mxu0 %v2727
    %4069 = vmatpush.bf16.msra.mxu0 %v2719
    %4070 = vmatpush.bf16.msra.mxu0 %v2711
    %4071 = vmatpush.bf16.msra.mxu0 %v2703
    %4072 = vmatpush.bf16.msra.mxu0 %v2695
    %4073 = vmatpush.bf16.msra.mxu0 %v2687
    %4074 = vmatmul.bf16.gmra.mxu0 %v356
    %v4075 = vpop.f32.mrf.mxu0
    %v4076 = vadd.f32 %v4062, %v4075
    %v4077 = vpop.f32.mrf.mxu0
    %v4078 = vadd.f32 %v4064, %v4077
    %4079 = vdwg.mxu0
    %4080 = vmatpush.bf16.msra.mxu0 %v2807
    %4081 = vmatpush.bf16.msra.mxu0 %v2799
    %4082 = vmatpush.bf16.msra.mxu0 %v2791
    %4083 = vmatpush.bf16.msra.mxu0 %v2783
    %4084 = vmatpush.bf16.msra.mxu0 %v2775
    %4085 = vmatpush.bf16.msra.mxu0 %v2767
    %4086 = vmatpush.bf16.msra.mxu0 %v2759
    %4087 = vmatpush.bf16.msra.mxu0 %v2751
    %4088 = vmatmul.bf16.gmra.mxu0 %v357
    %v4089 = vpop.f32.mrf.mxu0
    %v4090 = vadd.f32 %v4076, %v4089
    %v4091 = vpop.f32.mrf.mxu0
    %v4092 = vadd.f32 %v4078, %v4091
    %4093 = vdwg.mxu0
    %4094 = vmatpush.bf16.msra.mxu0 %v2871
    %4095 = vmatpush.bf16.msra.mxu0 %v2863
    %4096 = vmatpush.bf16.msra.mxu0 %v2855
    %4097 = vmatpush.bf16.msra.mxu0 %v2847
    %4098 = vmatpush.bf16.msra.mxu0 %v2839
    %4099 = vmatpush.bf16.msra.mxu0 %v2831
    %4100 = vmatpush.bf16.msra.mxu0 %v2823
    %4101 = vmatpush.bf16.msra.mxu0 %v2815
    %4102 = vmatmul.bf16.gmra.mxu0 %v358
    %v4103 = vpop.f32.mrf.mxu0
    %v4104 = vadd.f32 %v4090, %v4103
    %v4105 = vpop.f32.mrf.mxu0
    %v4106 = vadd.f32 %v4092, %v4105
    %4107 = vdwg.mxu0
    %4108 = vmatpush.bf16.msra.mxu0 %v2935
    %4109 = vmatpush.bf16.msra.mxu0 %v2927
    %4110 = vmatpush.bf16.msra.mxu0 %v2919
    %4111 = vmatpush.bf16.msra.mxu0 %v2911
    %4112 = vmatpush.bf16.msra.mxu0 %v2903
    %4113 = vmatpush.bf16.msra.mxu0 %v2895
    %4114 = vmatpush.bf16.msra.mxu0 %v2887
    %4115 = vmatpush.bf16.msra.mxu0 %v2879
    %4116 = vmatmul.bf16.gmra.mxu0 %v359
    %v4117 = vpop.f32.mrf.mxu0
    %v4118 = vadd.f32 %v4104, %v4117
    %v4119 = vpop.f32.mrf.mxu0
    %v4120 = vadd.f32 %v4106, %v4119
    %4121 = vdwg.mxu0
    %4122 = vmatpush.bf16.msra.mxu0 %v2488
    %4123 = vmatpush.bf16.msra.mxu0 %v2480
    %4124 = vmatpush.bf16.msra.mxu0 %v2472
    %4125 = vmatpush.bf16.msra.mxu0 %v2464
    %4126 = vmatpush.bf16.msra.mxu0 %v2456
    %4127 = vmatpush.bf16.msra.mxu0 %v2448
    %4128 = vmatpush.bf16.msra.mxu0 %v2440
    %4129 = vmatpush.bf16.msra.mxu0 %v2432
    %4130 = vmatmul.bf16.gmra.mxu0 %v352
    %v4131 = vpop.f32.mrf.mxu0
    %v4132 = vadd.f32 %v880, %v4131
    %v4133 = vpop.f32.mrf.mxu0
    %v4134 = vadd.f32 %v880, %v4133
    %4135 = vdwg.mxu0
    %4136 = vmatpush.bf16.msra.mxu0 %v2552
    %4137 = vmatpush.bf16.msra.mxu0 %v2544
    %4138 = vmatpush.bf16.msra.mxu0 %v2536
    %4139 = vmatpush.bf16.msra.mxu0 %v2528
    %4140 = vmatpush.bf16.msra.mxu0 %v2520
    %4141 = vmatpush.bf16.msra.mxu0 %v2512
    %4142 = vmatpush.bf16.msra.mxu0 %v2504
    %4143 = vmatpush.bf16.msra.mxu0 %v2496
    %4144 = vmatmul.bf16.gmra.mxu0 %v353
    %v4145 = vpop.f32.mrf.mxu0
    %v4146 = vadd.f32 %v4132, %v4145
    %v4147 = vpop.f32.mrf.mxu0
    %v4148 = vadd.f32 %v4134, %v4147
    %4149 = vdwg.mxu0
    %4150 = vmatpush.bf16.msra.mxu0 %v2616
    %4151 = vmatpush.bf16.msra.mxu0 %v2608
    %4152 = vmatpush.bf16.msra.mxu0 %v2600
    %4153 = vmatpush.bf16.msra.mxu0 %v2592
    %4154 = vmatpush.bf16.msra.mxu0 %v2584
    %4155 = vmatpush.bf16.msra.mxu0 %v2576
    %4156 = vmatpush.bf16.msra.mxu0 %v2568
    %4157 = vmatpush.bf16.msra.mxu0 %v2560
    %4158 = vmatmul.bf16.gmra.mxu0 %v354
    %v4159 = vpop.f32.mrf.mxu0
    %v4160 = vadd.f32 %v4146, %v4159
    %v4161 = vpop.f32.mrf.mxu0
    %v4162 = vadd.f32 %v4148, %v4161
    %4163 = vdwg.mxu0
    %4164 = vmatpush.bf16.msra.mxu0 %v2680
    %4165 = vmatpush.bf16.msra.mxu0 %v2672
    %4166 = vmatpush.bf16.msra.mxu0 %v2664
    %4167 = vmatpush.bf16.msra.mxu0 %v2656
    %4168 = vmatpush.bf16.msra.mxu0 %v2648
    %4169 = vmatpush.bf16.msra.mxu0 %v2640
    %4170 = vmatpush.bf16.msra.mxu0 %v2632
    %4171 = vmatpush.bf16.msra.mxu0 %v2624
    %4172 = vmatmul.bf16.gmra.mxu0 %v355
    %v4173 = vpop.f32.mrf.mxu0
    %v4174 = vadd.f32 %v4160, %v4173
    %v4175 = vpop.f32.mrf.mxu0
    %v4176 = vadd.f32 %v4162, %v4175
    %4177 = vdwg.mxu0
    %4178 = vmatpush.bf16.msra.mxu0 %v2744
    %4179 = vmatpush.bf16.msra.mxu0 %v2736
    %4180 = vmatpush.bf16.msra.mxu0 %v2728
    %4181 = vmatpush.bf16.msra.mxu0 %v2720
    %4182 = vmatpush.bf16.msra.mxu0 %v2712
    %4183 = vmatpush.bf16.msra.mxu0 %v2704
    %4184 = vmatpush.bf16.msra.mxu0 %v2696
    %4185 = vmatpush.bf16.msra.mxu0 %v2688
    %4186 = vmatmul.bf16.gmra.mxu0 %v356
    %v4187 = vpop.f32.mrf.mxu0
    %v4188 = vadd.f32 %v4174, %v4187
    %v4189 = vpop.f32.mrf.mxu0
    %v4190 = vadd.f32 %v4176, %v4189
    %4191 = vdwg.mxu0
    %4192 = vmatpush.bf16.msra.mxu0 %v2808
    %4193 = vmatpush.bf16.msra.mxu0 %v2800
    %4194 = vmatpush.bf16.msra.mxu0 %v2792
    %4195 = vmatpush.bf16.msra.mxu0 %v2784
    %4196 = vmatpush.bf16.msra.mxu0 %v2776
    %4197 = vmatpush.bf16.msra.mxu0 %v2768
    %4198 = vmatpush.bf16.msra.mxu0 %v2760
    %4199 = vmatpush.bf16.msra.mxu0 %v2752
    %4200 = vmatmul.bf16.gmra.mxu0 %v357
    %v4201 = vpop.f32.mrf.mxu0
    %v4202 = vadd.f32 %v4188, %v4201
    %v4203 = vpop.f32.mrf.mxu0
    %v4204 = vadd.f32 %v4190, %v4203
    %4205 = vdwg.mxu0
    %4206 = vmatpush.bf16.msra.mxu0 %v2872
    %4207 = vmatpush.bf16.msra.mxu0 %v2864
    %4208 = vmatpush.bf16.msra.mxu0 %v2856
    %4209 = vmatpush.bf16.msra.mxu0 %v2848
    %4210 = vmatpush.bf16.msra.mxu0 %v2840
    %4211 = vmatpush.bf16.msra.mxu0 %v2832
    %4212 = vmatpush.bf16.msra.mxu0 %v2824
    %4213 = vmatpush.bf16.msra.mxu0 %v2816
    %4214 = vmatmul.bf16.gmra.mxu0 %v358
    %v4215 = vpop.f32.mrf.mxu0
    %v4216 = vadd.f32 %v4202, %v4215
    %v4217 = vpop.f32.mrf.mxu0
    %v4218 = vadd.f32 %v4204, %v4217
    %4219 = vdwg.mxu0
    %4220 = vmatpush.bf16.msra.mxu0 %v2936
    %4221 = vmatpush.bf16.msra.mxu0 %v2928
    %4222 = vmatpush.bf16.msra.mxu0 %v2920
    %4223 = vmatpush.bf16.msra.mxu0 %v2912
    %4224 = vmatpush.bf16.msra.mxu0 %v2904
    %4225 = vmatpush.bf16.msra.mxu0 %v2896
    %4226 = vmatpush.bf16.msra.mxu0 %v2888
    %4227 = vmatpush.bf16.msra.mxu0 %v2880
    %4228 = vmatmul.bf16.gmra.mxu0 %v359
    %v4229 = vpop.f32.mrf.mxu0
    %v4230 = vadd.f32 %v4216, %v4229
    %v4231 = vpop.f32.mrf.mxu0
    %v4232 = vadd.f32 %v4218, %v4231
    %4233 = vdwg.mxu0
    %4234 = vmatpush.bf16.msra.mxu0 %v2489
    %4235 = vmatpush.bf16.msra.mxu0 %v2481
    %4236 = vmatpush.bf16.msra.mxu0 %v2473
    %4237 = vmatpush.bf16.msra.mxu0 %v2465
    %4238 = vmatpush.bf16.msra.mxu0 %v2457
    %4239 = vmatpush.bf16.msra.mxu0 %v2449
    %4240 = vmatpush.bf16.msra.mxu0 %v2441
    %4241 = vmatpush.bf16.msra.mxu0 %v2433
    %4242 = vmatmul.bf16.gmra.mxu0 %v352
    %v4243 = vpop.f32.mrf.mxu0
    %v4244 = vadd.f32 %v881, %v4243
    %v4245 = vpop.f32.mrf.mxu0
    %v4246 = vadd.f32 %v881, %v4245
    %4247 = vdwg.mxu0
    %4248 = vmatpush.bf16.msra.mxu0 %v2553
    %4249 = vmatpush.bf16.msra.mxu0 %v2545
    %4250 = vmatpush.bf16.msra.mxu0 %v2537
    %4251 = vmatpush.bf16.msra.mxu0 %v2529
    %4252 = vmatpush.bf16.msra.mxu0 %v2521
    %4253 = vmatpush.bf16.msra.mxu0 %v2513
    %4254 = vmatpush.bf16.msra.mxu0 %v2505
    %4255 = vmatpush.bf16.msra.mxu0 %v2497
    %4256 = vmatmul.bf16.gmra.mxu0 %v353
    %v4257 = vpop.f32.mrf.mxu0
    %v4258 = vadd.f32 %v4244, %v4257
    %v4259 = vpop.f32.mrf.mxu0
    %v4260 = vadd.f32 %v4246, %v4259
    %4261 = vdwg.mxu0
    %4262 = vmatpush.bf16.msra.mxu0 %v2617
    %4263 = vmatpush.bf16.msra.mxu0 %v2609
    %4264 = vmatpush.bf16.msra.mxu0 %v2601
    %4265 = vmatpush.bf16.msra.mxu0 %v2593
    %4266 = vmatpush.bf16.msra.mxu0 %v2585
    %4267 = vmatpush.bf16.msra.mxu0 %v2577
    %4268 = vmatpush.bf16.msra.mxu0 %v2569
    %4269 = vmatpush.bf16.msra.mxu0 %v2561
    %4270 = vmatmul.bf16.gmra.mxu0 %v354
    %v4271 = vpop.f32.mrf.mxu0
    %v4272 = vadd.f32 %v4258, %v4271
    %v4273 = vpop.f32.mrf.mxu0
    %v4274 = vadd.f32 %v4260, %v4273
    %4275 = vdwg.mxu0
    %4276 = vmatpush.bf16.msra.mxu0 %v2681
    %4277 = vmatpush.bf16.msra.mxu0 %v2673
    %4278 = vmatpush.bf16.msra.mxu0 %v2665
    %4279 = vmatpush.bf16.msra.mxu0 %v2657
    %4280 = vmatpush.bf16.msra.mxu0 %v2649
    %4281 = vmatpush.bf16.msra.mxu0 %v2641
    %4282 = vmatpush.bf16.msra.mxu0 %v2633
    %4283 = vmatpush.bf16.msra.mxu0 %v2625
    %4284 = vmatmul.bf16.gmra.mxu0 %v355
    %v4285 = vpop.f32.mrf.mxu0
    %v4286 = vadd.f32 %v4272, %v4285
    %v4287 = vpop.f32.mrf.mxu0
    %v4288 = vadd.f32 %v4274, %v4287
    %4289 = vdwg.mxu0
    %4290 = vmatpush.bf16.msra.mxu0 %v2745
    %4291 = vmatpush.bf16.msra.mxu0 %v2737
    %4292 = vmatpush.bf16.msra.mxu0 %v2729
    %4293 = vmatpush.bf16.msra.mxu0 %v2721
    %4294 = vmatpush.bf16.msra.mxu0 %v2713
    %4295 = vmatpush.bf16.msra.mxu0 %v2705
    %4296 = vmatpush.bf16.msra.mxu0 %v2697
    %4297 = vmatpush.bf16.msra.mxu0 %v2689
    %4298 = vmatmul.bf16.gmra.mxu0 %v356
    %v4299 = vpop.f32.mrf.mxu0
    %v4300 = vadd.f32 %v4286, %v4299
    %v4301 = vpop.f32.mrf.mxu0
    %v4302 = vadd.f32 %v4288, %v4301
    %4303 = vdwg.mxu0
    %4304 = vmatpush.bf16.msra.mxu0 %v2809
    %4305 = vmatpush.bf16.msra.mxu0 %v2801
    %4306 = vmatpush.bf16.msra.mxu0 %v2793
    %4307 = vmatpush.bf16.msra.mxu0 %v2785
    %4308 = vmatpush.bf16.msra.mxu0 %v2777
    %4309 = vmatpush.bf16.msra.mxu0 %v2769
    %4310 = vmatpush.bf16.msra.mxu0 %v2761
    %4311 = vmatpush.bf16.msra.mxu0 %v2753
    %4312 = vmatmul.bf16.gmra.mxu0 %v357
    %v4313 = vpop.f32.mrf.mxu0
    %v4314 = vadd.f32 %v4300, %v4313
    %v4315 = vpop.f32.mrf.mxu0
    %v4316 = vadd.f32 %v4302, %v4315
    %4317 = vdwg.mxu0
    %4318 = vmatpush.bf16.msra.mxu0 %v2873
    %4319 = vmatpush.bf16.msra.mxu0 %v2865
    %4320 = vmatpush.bf16.msra.mxu0 %v2857
    %4321 = vmatpush.bf16.msra.mxu0 %v2849
    %4322 = vmatpush.bf16.msra.mxu0 %v2841
    %4323 = vmatpush.bf16.msra.mxu0 %v2833
    %4324 = vmatpush.bf16.msra.mxu0 %v2825
    %4325 = vmatpush.bf16.msra.mxu0 %v2817
    %4326 = vmatmul.bf16.gmra.mxu0 %v358
    %v4327 = vpop.f32.mrf.mxu0
    %v4328 = vadd.f32 %v4314, %v4327
    %v4329 = vpop.f32.mrf.mxu0
    %v4330 = vadd.f32 %v4316, %v4329
    %4331 = vdwg.mxu0
    %4332 = vmatpush.bf16.msra.mxu0 %v2937
    %4333 = vmatpush.bf16.msra.mxu0 %v2929
    %4334 = vmatpush.bf16.msra.mxu0 %v2921
    %4335 = vmatpush.bf16.msra.mxu0 %v2913
    %4336 = vmatpush.bf16.msra.mxu0 %v2905
    %4337 = vmatpush.bf16.msra.mxu0 %v2897
    %4338 = vmatpush.bf16.msra.mxu0 %v2889
    %4339 = vmatpush.bf16.msra.mxu0 %v2881
    %4340 = vmatmul.bf16.gmra.mxu0 %v359
    %v4341 = vpop.f32.mrf.mxu0
    %v4342 = vadd.f32 %v4328, %v4341
    %v4343 = vpop.f32.mrf.mxu0
    %v4344 = vadd.f32 %v4330, %v4343
    %4345 = vdwg.mxu0
    %v4346 = vmax.f32 %v3558, 0.0
    %v4347 = vmax.f32 %v3670, 0.0
    %v4348 = vmax.f32 %v3782, 0.0
    %v4349 = vmax.f32 %v3894, 0.0
    %v4350 = vmax.f32 %v4006, 0.0
    %v4351 = vmax.f32 %v4118, 0.0
    %v4352 = vmax.f32 %v4230, 0.0
    %v4353 = vmax.f32 %v4342, 0.0
    %v4354 = vmax.f32 %v3560, 0.0
    %v4355 = vmax.f32 %v3672, 0.0
    %v4356 = vmax.f32 %v3784, 0.0
    %v4357 = vmax.f32 %v3896, 0.0
    %v4358 = vmax.f32 %v4008, 0.0
    %v4359 = vmax.f32 %v4120, 0.0
    %v4360 = vmax.f32 %v4232, 0.0
    %v4361 = vmax.f32 %v4344, 0.0
    %v4362 = vpack.c.bf16 %v4354, %v4346
    %v4363 = vpack.c.bf16 %v4355, %v4347
    %v4364 = vpack.c.bf16 %v4356, %v4348
    %v4365 = vpack.c.bf16 %v4357, %v4349
    %v4366 = vpack.c.bf16 %v4358, %v4350
    %v4367 = vpack.c.bf16 %v4359, %v4351
    %v4368 = vpack.c.bf16 %v4360, %v4352
    %v4369 = vpack.c.bf16 %v4361, %v4353
    %v4370 = vld [vmem:[#allocation8] sm:$0xf]
    %v4371 = vld [vmem:[#allocation8 + $0x4] sm:$0xf]
    %v4372 = vld [vmem:[#allocation8 + $0x8] sm:$0xf]
    %v4373 = vld [vmem:[#allocation8 + $0xc] sm:$0xf]
    %v4374 = vld [vmem:[#allocation8 + $0x10] sm:$0xf]
    %v4375 = vld [vmem:[#allocation8 + $0x14] sm:$0xf]
    %v4376 = vld [vmem:[#allocation8 + $0x18] sm:$0xf]
    %v4377 = vld [vmem:[#allocation8 + $0x1c] sm:$0xf]
    %v4378 = vld [vmem:[#allocation8 + $0x20] sm:$0xf]
    %v4379 = vld [vmem:[#allocation8 + $0x24] sm:$0xf]
    %v4380 = vld [vmem:[#allocation8 + $0x28] sm:$0xf]
    %v4381 = vld [vmem:[#allocation8 + $0x2c] sm:$0xf]
    %v4382 = vld [vmem:[#allocation8 + $0x30] sm:$0xf]
    %v4383 = vld [vmem:[#allocation8 + $0x34] sm:$0xf]
    %v4384 = vld [vmem:[#allocation8 + $0x38] sm:$0xf]
    %v4385 = vld [vmem:[#allocation8 + $0x3c] sm:$0xf]
    %v4386 = vld [vmem:[#allocation8 + $0x40] sm:$0xf]
    %v4387 = vld [vmem:[#allocation8 + $0x44] sm:$0xf]
    %v4388 = vld [vmem:[#allocation8 + $0x48] sm:$0xf]
    %v4389 = vld [vmem:[#allocation8 + $0x4c] sm:$0xf]
    %v4390 = vld [vmem:[#allocation8 + $0x50] sm:$0xf]
    %v4391 = vld [vmem:[#allocation8 + $0x54] sm:$0xf]
    %v4392 = vld [vmem:[#allocation8 + $0x58] sm:$0xf]
    %v4393 = vld [vmem:[#allocation8 + $0x5c] sm:$0xf]
    %v4394 = vld [vmem:[#allocation8 + $0x60] sm:$0xf]
    %v4395 = vld [vmem:[#allocation8 + $0x64] sm:$0xf]
    %v4396 = vld [vmem:[#allocation8 + $0x68] sm:$0xf]
    %v4397 = vld [vmem:[#allocation8 + $0x6c] sm:$0xf]
    %v4398 = vld [vmem:[#allocation8 + $0x70] sm:$0xf]
    %v4399 = vld [vmem:[#allocation8 + $0x74] sm:$0xf]
    %v4400 = vld [vmem:[#allocation8 + $0x78] sm:$0xf]
    %v4401 = vld [vmem:[#allocation8 + $0x7c] sm:$0xf]
    %v4402 = vld [vmem:[#allocation8 + $0x80] sm:$0xf]
    %v4403 = vld [vmem:[#allocation8 + $0x84] sm:$0xf]
    %v4404 = vld [vmem:[#allocation8 + $0x88] sm:$0xf]
    %v4405 = vld [vmem:[#allocation8 + $0x8c] sm:$0xf]
    %v4406 = vld [vmem:[#allocation8 + $0x90] sm:$0xf]
    %v4407 = vld [vmem:[#allocation8 + $0x94] sm:$0xf]
    %v4408 = vld [vmem:[#allocation8 + $0x98] sm:$0xf]
    %v4409 = vld [vmem:[#allocation8 + $0x9c] sm:$0xf]
    %v4410 = vld [vmem:[#allocation8 + $0xa0] sm:$0xf]
    %v4411 = vld [vmem:[#allocation8 + $0xa4] sm:$0xf]
    %v4412 = vld [vmem:[#allocation8 + $0xa8] sm:$0xf]
    %v4413 = vld [vmem:[#allocation8 + $0xac] sm:$0xf]
    %v4414 = vld [vmem:[#allocation8 + $0xb0] sm:$0xf]
    %v4415 = vld [vmem:[#allocation8 + $0xb4] sm:$0xf]
    %v4416 = vld [vmem:[#allocation8 + $0xb8] sm:$0xf]
    %v4417 = vld [vmem:[#allocation8 + $0xbc] sm:$0xf]
    %v4418 = vld [vmem:[#allocation8 + $0xc0] sm:$0xf]
    %v4419 = vld [vmem:[#allocation8 + $0xc4] sm:$0xf]
    %v4420 = vld [vmem:[#allocation8 + $0xc8] sm:$0xf]
    %v4421 = vld [vmem:[#allocation8 + $0xcc] sm:$0xf]
    %v4422 = vld [vmem:[#allocation8 + $0xd0] sm:$0xf]
    %v4423 = vld [vmem:[#allocation8 + $0xd4] sm:$0xf]
    %v4424 = vld [vmem:[#allocation8 + $0xd8] sm:$0xf]
    %v4425 = vld [vmem:[#allocation8 + $0xdc] sm:$0xf]
    %v4426 = vld [vmem:[#allocation8 + $0xe0] sm:$0xf]
    %v4427 = vld [vmem:[#allocation8 + $0xe4] sm:$0xf]
    %v4428 = vld [vmem:[#allocation8 + $0xe8] sm:$0xf]
    %v4429 = vld [vmem:[#allocation8 + $0xec] sm:$0xf]
    %v4430 = vld [vmem:[#allocation8 + $0xf0] sm:$0xf]
    %v4431 = vld [vmem:[#allocation8 + $0xf4] sm:$0xf]
    %v4432 = vld [vmem:[#allocation8 + $0xf8] sm:$0xf]
    %v4433 = vld [vmem:[#allocation8 + $0xfc] sm:$0xf]
    %v4434 = vld [vmem:[#allocation8 + $0x100] sm:$0xf]
    %v4435 = vld [vmem:[#allocation8 + $0x104] sm:$0xf]
    %v4436 = vld [vmem:[#allocation8 + $0x108] sm:$0xf]
    %v4437 = vld [vmem:[#allocation8 + $0x10c] sm:$0xf]
    %v4438 = vld [vmem:[#allocation8 + $0x110] sm:$0xf]
    %v4439 = vld [vmem:[#allocation8 + $0x114] sm:$0xf]
    %v4440 = vld [vmem:[#allocation8 + $0x118] sm:$0xf]
    %v4441 = vld [vmem:[#allocation8 + $0x11c] sm:$0xf]
    %v4442 = vld [vmem:[#allocation8 + $0x120] sm:$0xf]
    %v4443 = vld [vmem:[#allocation8 + $0x124] sm:$0xf]
    %v4444 = vld [vmem:[#allocation8 + $0x128] sm:$0xf]
    %v4445 = vld [vmem:[#allocation8 + $0x12c] sm:$0xf]
    %v4446 = vld [vmem:[#allocation8 + $0x130] sm:$0xf]
    %v4447 = vld [vmem:[#allocation8 + $0x134] sm:$0xf]
    %v4448 = vld [vmem:[#allocation8 + $0x138] sm:$0xf]
    %v4449 = vld [vmem:[#allocation8 + $0x13c] sm:$0xf]
    %v4450 = vld [vmem:[#allocation8 + $0x140] sm:$0xf]
    %v4451 = vld [vmem:[#allocation8 + $0x144] sm:$0xf]
    %v4452 = vld [vmem:[#allocation8 + $0x148] sm:$0xf]
    %v4453 = vld [vmem:[#allocation8 + $0x14c] sm:$0xf]
    %v4454 = vld [vmem:[#allocation8 + $0x150] sm:$0xf]
    %v4455 = vld [vmem:[#allocation8 + $0x154] sm:$0xf]
    %v4456 = vld [vmem:[#allocation8 + $0x158] sm:$0xf]
    %v4457 = vld [vmem:[#allocation8 + $0x15c] sm:$0xf]
    %v4458 = vld [vmem:[#allocation8 + $0x160] sm:$0xf]
    %v4459 = vld [vmem:[#allocation8 + $0x164] sm:$0xf]
    %v4460 = vld [vmem:[#allocation8 + $0x168] sm:$0xf]
    %v4461 = vld [vmem:[#allocation8 + $0x16c] sm:$0xf]
    %v4462 = vld [vmem:[#allocation8 + $0x170] sm:$0xf]
    %v4463 = vld [vmem:[#allocation8 + $0x174] sm:$0xf]
    %v4464 = vld [vmem:[#allocation8 + $0x178] sm:$0xf]
    %v4465 = vld [vmem:[#allocation8 + $0x17c] sm:$0xf]
    %v4466 = vld [vmem:[#allocation8 + $0x180] sm:$0xf]
    %v4467 = vld [vmem:[#allocation8 + $0x184] sm:$0xf]
    %v4468 = vld [vmem:[#allocation8 + $0x188] sm:$0xf]
    %v4469 = vld [vmem:[#allocation8 + $0x18c] sm:$0xf]
    %v4470 = vld [vmem:[#allocation8 + $0x190] sm:$0xf]
    %v4471 = vld [vmem:[#allocation8 + $0x194] sm:$0xf]
    %v4472 = vld [vmem:[#allocation8 + $0x198] sm:$0xf]
    %v4473 = vld [vmem:[#allocation8 + $0x19c] sm:$0xf]
    %v4474 = vld [vmem:[#allocation8 + $0x1a0] sm:$0xf]
    %v4475 = vld [vmem:[#allocation8 + $0x1a4] sm:$0xf]
    %v4476 = vld [vmem:[#allocation8 + $0x1a8] sm:$0xf]
    %v4477 = vld [vmem:[#allocation8 + $0x1ac] sm:$0xf]
    %v4478 = vld [vmem:[#allocation8 + $0x1b0] sm:$0xf]
    %v4479 = vld [vmem:[#allocation8 + $0x1b4] sm:$0xf]
    %v4480 = vld [vmem:[#allocation8 + $0x1b8] sm:$0xf]
    %v4481 = vld [vmem:[#allocation8 + $0x1bc] sm:$0xf]
    %v4482 = vld [vmem:[#allocation8 + $0x1c0] sm:$0xf]
    %v4483 = vld [vmem:[#allocation8 + $0x1c4] sm:$0xf]
    %v4484 = vld [vmem:[#allocation8 + $0x1c8] sm:$0xf]
    %v4485 = vld [vmem:[#allocation8 + $0x1cc] sm:$0xf]
    %v4486 = vld [vmem:[#allocation8 + $0x1d0] sm:$0xf]
    %v4487 = vld [vmem:[#allocation8 + $0x1d4] sm:$0xf]
    %v4488 = vld [vmem:[#allocation8 + $0x1d8] sm:$0xf]
    %v4489 = vld [vmem:[#allocation8 + $0x1dc] sm:$0xf]
    %v4490 = vld [vmem:[#allocation8 + $0x1e0] sm:$0xf]
    %v4491 = vld [vmem:[#allocation8 + $0x1e4] sm:$0xf]
    %v4492 = vld [vmem:[#allocation8 + $0x1e8] sm:$0xf]
    %v4493 = vld [vmem:[#allocation8 + $0x1ec] sm:$0xf]
    %v4494 = vld [vmem:[#allocation8 + $0x1f0] sm:$0xf]
    %v4495 = vld [vmem:[#allocation8 + $0x1f4] sm:$0xf]
    %v4496 = vld [vmem:[#allocation8 + $0x1f8] sm:$0xf]
    %v4497 = vld [vmem:[#allocation8 + $0x1fc] sm:$0xf]
    %v4498 = vld [vmem:[#allocation10] sm:$0x1]
    %v4500 = vperm.slane %v4498, 0
    %v4630 = vunpack.c.l.b16 %v4370
    %v4631 = vunpack.c.l.b16 %v4371
    %v4632 = vunpack.c.l.b16 %v4372
    %v4633 = vunpack.c.l.b16 %v4373
    %v4634 = vunpack.c.l.b16 %v4374
    %v4635 = vunpack.c.l.b16 %v4375
    %v4636 = vunpack.c.l.b16 %v4376
    %v4637 = vunpack.c.l.b16 %v4377
    %v4638 = vunpack.c.l.b16 %v4378
    %v4639 = vunpack.c.l.b16 %v4379
    %v4640 = vunpack.c.l.b16 %v4380
    %v4641 = vunpack.c.l.b16 %v4381
    %v4642 = vunpack.c.l.b16 %v4382
    %v4643 = vunpack.c.l.b16 %v4383
    %v4644 = vunpack.c.l.b16 %v4384
    %v4645 = vunpack.c.l.b16 %v4385
    %v4646 = vunpack.c.l.b16 %v4386
    %v4647 = vunpack.c.l.b16 %v4387
    %v4648 = vunpack.c.l.b16 %v4388
    %v4649 = vunpack.c.l.b16 %v4389
    %v4650 = vunpack.c.l.b16 %v4390
    %v4651 = vunpack.c.l.b16 %v4391
    %v4652 = vunpack.c.l.b16 %v4392
    %v4653 = vunpack.c.l.b16 %v4393
    %v4654 = vunpack.c.l.b16 %v4394
    %v4655 = vunpack.c.l.b16 %v4395
    %v4656 = vunpack.c.l.b16 %v4396
    %v4657 = vunpack.c.l.b16 %v4397
    %v4658 = vunpack.c.l.b16 %v4398
    %v4659 = vunpack.c.l.b16 %v4399
    %v4660 = vunpack.c.l.b16 %v4400
    %v4661 = vunpack.c.l.b16 %v4401
    %v4662 = vunpack.c.l.b16 %v4402
    %v4663 = vunpack.c.l.b16 %v4403
    %v4664 = vunpack.c.l.b16 %v4404
    %v4665 = vunpack.c.l.b16 %v4405
    %v4666 = vunpack.c.l.b16 %v4406
    %v4667 = vunpack.c.l.b16 %v4407
    %v4668 = vunpack.c.l.b16 %v4408
    %v4669 = vunpack.c.l.b16 %v4409
    %v4670 = vunpack.c.l.b16 %v4410
    %v4671 = vunpack.c.l.b16 %v4411
    %v4672 = vunpack.c.l.b16 %v4412
    %v4673 = vunpack.c.l.b16 %v4413
    %v4674 = vunpack.c.l.b16 %v4414
    %v4675 = vunpack.c.l.b16 %v4415
    %v4676 = vunpack.c.l.b16 %v4416
    %v4677 = vunpack.c.l.b16 %v4417
    %v4678 = vunpack.c.l.b16 %v4418
    %v4679 = vunpack.c.l.b16 %v4419
    %v4680 = vunpack.c.l.b16 %v4420
    %v4681 = vunpack.c.l.b16 %v4421
    %v4682 = vunpack.c.l.b16 %v4422
    %v4683 = vunpack.c.l.b16 %v4423
    %v4684 = vunpack.c.l.b16 %v4424
    %v4685 = vunpack.c.l.b16 %v4425
    %v4686 = vunpack.c.l.b16 %v4426
    %v4687 = vunpack.c.l.b16 %v4427
    %v4688 = vunpack.c.l.b16 %v4428
    %v4689 = vunpack.c.l.b16 %v4429
    %v4690 = vunpack.c.l.b16 %v4430
    %v4691 = vunpack.c.l.b16 %v4431
    %v4692 = vunpack.c.l.b16 %v4432
    %v4693 = vunpack.c.l.b16 %v4433
    %v4694 = vunpack.c.l.b16 %v4434
    %v4695 = vunpack.c.l.b16 %v4435
    %v4696 = vunpack.c.l.b16 %v4436
    %v4697 = vunpack.c.l.b16 %v4437
    %v4698 = vunpack.c.l.b16 %v4438
    %v4699 = vunpack.c.l.b16 %v4439
    %v4700 = vunpack.c.l.b16 %v4440
    %v4701 = vunpack.c.l.b16 %v4441
    %v4702 = vunpack.c.l.b16 %v4442
    %v4703 = vunpack.c.l.b16 %v4443
    %v4704 = vunpack.c.l.b16 %v4444
    %v4705 = vunpack.c.l.b16 %v4445
    %v4706 = vunpack.c.l.b16 %v4446
    %v4707 = vunpack.c.l.b16 %v4447
    %v4708 = vunpack.c.l.b16 %v4448
    %v4709 = vunpack.c.l.b16 %v4449
    %v4710 = vunpack.c.l.b16 %v4450
    %v4711 = vunpack.c.l.b16 %v4451
    %v4712 = vunpack.c.l.b16 %v4452
    %v4713 = vunpack.c.l.b16 %v4453
    %v4714 = vunpack.c.l.b16 %v4454
    %v4715 = vunpack.c.l.b16 %v4455
    %v4716 = vunpack.c.l.b16 %v4456
    %v4717 = vunpack.c.l.b16 %v4457
    %v4718 = vunpack.c.l.b16 %v4458
    %v4719 = vunpack.c.l.b16 %v4459
    %v4720 = vunpack.c.l.b16 %v4460
    %v4721 = vunpack.c.l.b16 %v4461
    %v4722 = vunpack.c.l.b16 %v4462
    %v4723 = vunpack.c.l.b16 %v4463
    %v4724 = vunpack.c.l.b16 %v4464
    %v4725 = vunpack.c.l.b16 %v4465
    %v4726 = vunpack.c.l.b16 %v4466
    %v4727 = vunpack.c.l.b16 %v4467
    %v4728 = vunpack.c.l.b16 %v4468
    %v4729 = vunpack.c.l.b16 %v4469
    %v4730 = vunpack.c.l.b16 %v4470
    %v4731 = vunpack.c.l.b16 %v4471
    %v4732 = vunpack.c.l.b16 %v4472
    %v4733 = vunpack.c.l.b16 %v4473
    %v4734 = vunpack.c.l.b16 %v4474
    %v4735 = vunpack.c.l.b16 %v4475
    %v4736 = vunpack.c.l.b16 %v4476
    %v4737 = vunpack.c.l.b16 %v4477
    %v4738 = vunpack.c.l.b16 %v4478
    %v4739 = vunpack.c.l.b16 %v4479
    %v4740 = vunpack.c.l.b16 %v4480
    %v4741 = vunpack.c.l.b16 %v4481
    %v4742 = vunpack.c.l.b16 %v4482
    %v4743 = vunpack.c.l.b16 %v4483
    %v4744 = vunpack.c.l.b16 %v4484
    %v4745 = vunpack.c.l.b16 %v4485
    %v4746 = vunpack.c.l.b16 %v4486
    %v4747 = vunpack.c.l.b16 %v4487
    %v4748 = vunpack.c.l.b16 %v4488
    %v4749 = vunpack.c.l.b16 %v4489
    %v4750 = vunpack.c.l.b16 %v4490
    %v4751 = vunpack.c.l.b16 %v4491
    %v4752 = vunpack.c.l.b16 %v4492
    %v4753 = vunpack.c.l.b16 %v4493
    %v4754 = vunpack.c.l.b16 %v4494
    %v4755 = vunpack.c.l.b16 %v4495
    %v4756 = vunpack.c.l.b16 %v4496
    %v4757 = vunpack.c.l.b16 %v4497
    %v4758 = vpack.c.b16 %v4631, %v4630
    %v4759 = vpack.c.b16 %v4633, %v4632
    %v4760 = vpack.c.b16 %v4635, %v4634
    %v4761 = vpack.c.b16 %v4637, %v4636
    %v4762 = vpack.c.b16 %v4639, %v4638
    %v4763 = vpack.c.b16 %v4641, %v4640
    %v4764 = vpack.c.b16 %v4643, %v4642
    %v4765 = vpack.c.b16 %v4645, %v4644
    %v4766 = vpack.c.b16 %v4647, %v4646
    %v4767 = vpack.c.b16 %v4649, %v4648
    %v4768 = vpack.c.b16 %v4651, %v4650
    %v4769 = vpack.c.b16 %v4653, %v4652
    %v4770 = vpack.c.b16 %v4655, %v4654
    %v4771 = vpack.c.b16 %v4657, %v4656
    %v4772 = vpack.c.b16 %v4659, %v4658
    %v4773 = vpack.c.b16 %v4661, %v4660
    %v4774 = vpack.c.b16 %v4663, %v4662
    %v4775 = vpack.c.b16 %v4665, %v4664
    %v4776 = vpack.c.b16 %v4667, %v4666
    %v4777 = vpack.c.b16 %v4669, %v4668
    %v4778 = vpack.c.b16 %v4671, %v4670
    %v4779 = vpack.c.b16 %v4673, %v4672
    %v4780 = vpack.c.b16 %v4675, %v4674
    %v4781 = vpack.c.b16 %v4677, %v4676
    %v4782 = vpack.c.b16 %v4679, %v4678
    %v4783 = vpack.c.b16 %v4681, %v4680
    %v4784 = vpack.c.b16 %v4683, %v4682
    %v4785 = vpack.c.b16 %v4685, %v4684
    %v4786 = vpack.c.b16 %v4687, %v4686
    %v4787 = vpack.c.b16 %v4689, %v4688
    %v4788 = vpack.c.b16 %v4691, %v4690
    %v4789 = vpack.c.b16 %v4693, %v4692
    %v4790 = vpack.c.b16 %v4695, %v4694
    %v4791 = vpack.c.b16 %v4697, %v4696
    %v4792 = vpack.c.b16 %v4699, %v4698
    %v4793 = vpack.c.b16 %v4701, %v4700
    %v4794 = vpack.c.b16 %v4703, %v4702
    %v4795 = vpack.c.b16 %v4705, %v4704
    %v4796 = vpack.c.b16 %v4707, %v4706
    %v4797 = vpack.c.b16 %v4709, %v4708
    %v4798 = vpack.c.b16 %v4711, %v4710
    %v4799 = vpack.c.b16 %v4713, %v4712
    %v4800 = vpack.c.b16 %v4715, %v4714
    %v4801 = vpack.c.b16 %v4717, %v4716
    %v4802 = vpack.c.b16 %v4719, %v4718
    %v4803 = vpack.c.b16 %v4721, %v4720
    %v4804 = vpack.c.b16 %v4723, %v4722
    %v4805 = vpack.c.b16 %v4725, %v4724
    %v4806 = vpack.c.b16 %v4727, %v4726
    %v4807 = vpack.c.b16 %v4729, %v4728
    %v4808 = vpack.c.b16 %v4731, %v4730
    %v4809 = vpack.c.b16 %v4733, %v4732
    %v4810 = vpack.c.b16 %v4735, %v4734
    %v4811 = vpack.c.b16 %v4737, %v4736
    %v4812 = vpack.c.b16 %v4739, %v4738
    %v4813 = vpack.c.b16 %v4741, %v4740
    %v4814 = vpack.c.b16 %v4743, %v4742
    %v4815 = vpack.c.b16 %v4745, %v4744
    %v4816 = vpack.c.b16 %v4747, %v4746
    %v4817 = vpack.c.b16 %v4749, %v4748
    %v4818 = vpack.c.b16 %v4751, %v4750
    %v4819 = vpack.c.b16 %v4753, %v4752
    %v4820 = vpack.c.b16 %v4755, %v4754
    %v4821 = vpack.c.b16 %v4757, %v4756
    %4886 = vmatpush.bf16.msra.mxu0 %v4765
    %4887 = vmatpush.bf16.msra.mxu0 %v4764
    %4888 = vmatpush.bf16.msra.mxu0 %v4763
    %4889 = vmatpush.bf16.msra.mxu0 %v4762
    %4890 = vmatpush.bf16.msra.mxu0 %v4761
    %4891 = vmatpush.bf16.msra.mxu0 %v4760
    %4892 = vmatpush.bf16.msra.mxu0 %v4759
    %4893 = vmatpush.bf16.msra.mxu0 %v4758
    %4894 = vmatmul.bf16.gmra.mxu0 %v4362
    %v4895 = vpop.f32.mrf.mxu0
    %v4896 = vadd.f32 %v4500, %v4895
    %v4897 = vpop.f32.mrf.mxu0
    %v4898 = vadd.f32 %v4500, %v4897
    %4899 = vdwg.mxu0
    %4900 = vmatpush.bf16.msra.mxu0 %v4773
    %4901 = vmatpush.bf16.msra.mxu0 %v4772
    %4902 = vmatpush.bf16.msra.mxu0 %v4771
    %4903 = vmatpush.bf16.msra.mxu0 %v4770
    %4904 = vmatpush.bf16.msra.mxu0 %v4769
    %4905 = vmatpush.bf16.msra.mxu0 %v4768
    %4906 = vmatpush.bf16.msra.mxu0 %v4767
    %4907 = vmatpush.bf16.msra.mxu0 %v4766
    %4908 = vmatmul.bf16.gmra.mxu0 %v4363
    %v4909 = vpop.f32.mrf.mxu0
    %v4910 = vadd.f32 %v4896, %v4909
    %v4911 = vpop.f32.mrf.mxu0
    %v4912 = vadd.f32 %v4898, %v4911
    %4913 = vdwg.mxu0
    %4914 = vmatpush.bf16.msra.mxu0 %v4781
    %4915 = vmatpush.bf16.msra.mxu0 %v4780
    %4916 = vmatpush.bf16.msra.mxu0 %v4779
    %4917 = vmatpush.bf16.msra.mxu0 %v4778
    %4918 = vmatpush.bf16.msra.mxu0 %v4777
    %4919 = vmatpush.bf16.msra.mxu0 %v4776
    %4920 = vmatpush.bf16.msra.mxu0 %v4775
    %4921 = vmatpush.bf16.msra.mxu0 %v4774
    %4922 = vmatmul.bf16.gmra.mxu0 %v4364
    %v4923 = vpop.f32.mrf.mxu0
    %v4924 = vadd.f32 %v4910, %v4923
    %v4925 = vpop.f32.mrf.mxu0
    %v4926 = vadd.f32 %v4912, %v4925
    %4927 = vdwg.mxu0
    %4928 = vmatpush.bf16.msra.mxu0 %v4789
    %4929 = vmatpush.bf16.msra.mxu0 %v4788
    %4930 = vmatpush.bf16.msra.mxu0 %v4787
    %4931 = vmatpush.bf16.msra.mxu0 %v4786
    %4932 = vmatpush.bf16.msra.mxu0 %v4785
    %4933 = vmatpush.bf16.msra.mxu0 %v4784
    %4934 = vmatpush.bf16.msra.mxu0 %v4783
    %4935 = vmatpush.bf16.msra.mxu0 %v4782
    %4936 = vmatmul.bf16.gmra.mxu0 %v4365
    %v4937 = vpop.f32.mrf.mxu0
    %v4938 = vadd.f32 %v4924, %v4937
    %v4939 = vpop.f32.mrf.mxu0
    %v4940 = vadd.f32 %v4926, %v4939
    %4941 = vdwg.mxu0
    %4942 = vmatpush.bf16.msra.mxu0 %v4797
    %4943 = vmatpush.bf16.msra.mxu0 %v4796
    %4944 = vmatpush.bf16.msra.mxu0 %v4795
    %4945 = vmatpush.bf16.msra.mxu0 %v4794
    %4946 = vmatpush.bf16.msra.mxu0 %v4793
    %4947 = vmatpush.bf16.msra.mxu0 %v4792
    %4948 = vmatpush.bf16.msra.mxu0 %v4791
    %4949 = vmatpush.bf16.msra.mxu0 %v4790
    %4950 = vmatmul.bf16.gmra.mxu0 %v4366
    %v4951 = vpop.f32.mrf.mxu0
    %v4952 = vadd.f32 %v4938, %v4951
    %v4953 = vpop.f32.mrf.mxu0
    %v4954 = vadd.f32 %v4940, %v4953
    %4955 = vdwg.mxu0
    %4956 = vmatpush.bf16.msra.mxu0 %v4805
    %4957 = vmatpush.bf16.msra.mxu0 %v4804
    %4958 = vmatpush.bf16.msra.mxu0 %v4803
    %4959 = vmatpush.bf16.msra.mxu0 %v4802
    %4960 = vmatpush.bf16.msra.mxu0 %v4801
    %4961 = vmatpush.bf16.msra.mxu0 %v4800
    %4962 = vmatpush.bf16.msra.mxu0 %v4799
    %4963 = vmatpush.bf16.msra.mxu0 %v4798
    %4964 = vmatmul.bf16.gmra.mxu0 %v4367
    %v4965 = vpop.f32.mrf.mxu0
    %v4966 = vadd.f32 %v4952, %v4965
    %v4967 = vpop.f32.mrf.mxu0
    %v4968 = vadd.f32 %v4954, %v4967
    %4969 = vdwg.mxu0
    %4970 = vmatpush.bf16.msra.mxu0 %v4813
    %4971 = vmatpush.bf16.msra.mxu0 %v4812
    %4972 = vmatpush.bf16.msra.mxu0 %v4811
    %4973 = vmatpush.bf16.msra.mxu0 %v4810
    %4974 = vmatpush.bf16.msra.mxu0 %v4809
    %4975 = vmatpush.bf16.msra.mxu0 %v4808
    %4976 = vmatpush.bf16.msra.mxu0 %v4807
    %4977 = vmatpush.bf16.msra.mxu0 %v4806
    %4978 = vmatmul.bf16.gmra.mxu0 %v4368
    %v4979 = vpop.f32.mrf.mxu0
    %v4980 = vadd.f32 %v4966, %v4979
    %v4981 = vpop.f32.mrf.mxu0
    %v4982 = vadd.f32 %v4968, %v4981
    %4983 = vdwg.mxu0
    %4984 = vmatpush.bf16.msra.mxu0 %v4821
    %4985 = vmatpush.bf16.msra.mxu0 %v4820
    %4986 = vmatpush.bf16.msra.mxu0 %v4819
    %4987 = vmatpush.bf16.msra.mxu0 %v4818
    %4988 = vmatpush.bf16.msra.mxu0 %v4817
    %4989 = vmatpush.bf16.msra.mxu0 %v4816
    %4990 = vmatpush.bf16.msra.mxu0 %v4815
    %4991 = vmatpush.bf16.msra.mxu0 %v4814
    %4992 = vmatmul.bf16.gmra.mxu0 %v4369
    %v4993 = vpop.f32.mrf.mxu0
    %v4994 = vadd.f32 %v4980, %v4993
    %v4995 = vpop.f32.mrf.mxu0
    %v4996 = vadd.f32 %v4982, %v4995
    %4997 = vdwg.mxu0
    %v4998 = vmax.f32 %v4994, 0.0
    %v4999 = vmax.f32 %v4996, 0.0
    %v5000 = vpack.c.bf16 %v4999, %v4998
    %v5001 = vld [vmem:[#allocation11] sm:$0xf]
    %v5002 = vld [vmem:[#allocation11 + $0x4] sm:$0xf]
    %v5003 = vld [vmem:[#allocation11 + $0x8] sm:$0xf]
    %v5004 = vld [vmem:[#allocation11 + $0xc] sm:$0xf]
    %v5005 = vld [vmem:[#allocation11 + $0x10] sm:$0xf]
    %v5006 = vld [vmem:[#allocation11 + $0x14] sm:$0xf]
    %v5007 = vld [vmem:[#allocation11 + $0x18] sm:$0xf]
    %v5008 = vld [vmem:[#allocation11 + $0x1c] sm:$0xf]
    %v5009 = vld [vmem:[#allocation11 + $0x20] sm:$0xf]
    %v5010 = vld [vmem:[#allocation11 + $0x24] sm:$0xf]
    %v5011 = vld [vmem:[#allocation11 + $0x28] sm:$0xf]
    %v5012 = vld [vmem:[#allocation11 + $0x2c] sm:$0xf]
    %v5013 = vld [vmem:[#allocation11 + $0x30] sm:$0xf]
    %v5014 = vld [vmem:[#allocation11 + $0x34] sm:$0xf]
    %v5015 = vld [vmem:[#allocation11 + $0x38] sm:$0xf]
    %v5016 = vld [vmem:[#allocation11 + $0x3c] sm:$0xf]
    %v5017 = vld [vmem:[#allocation13] sm:$0x1]
    %v5019 = vperm.slane %v5017, 0
    %v5037 = vunpack.c.l.b16 %v5001
    %v5038 = vunpack.c.l.b16 %v5002
    %v5039 = vunpack.c.l.b16 %v5003
    %v5040 = vunpack.c.l.b16 %v5004
    %v5041 = vunpack.c.l.b16 %v5005
    %v5042 = vunpack.c.l.b16 %v5006
    %v5043 = vunpack.c.l.b16 %v5007
    %v5044 = vunpack.c.l.b16 %v5008
    %v5045 = vunpack.c.l.b16 %v5009
    %v5046 = vunpack.c.l.b16 %v5010
    %v5047 = vunpack.c.l.b16 %v5011
    %v5048 = vunpack.c.l.b16 %v5012
    %v5049 = vunpack.c.l.b16 %v5013
    %v5050 = vunpack.c.l.b16 %v5014
    %v5051 = vunpack.c.l.b16 %v5015
    %v5052 = vunpack.c.l.b16 %v5016
    %v5053 = vpack.c.b16 %v5038, %v5037
    %v5054 = vpack.c.b16 %v5040, %v5039
    %v5055 = vpack.c.b16 %v5042, %v5041
    %v5056 = vpack.c.b16 %v5044, %v5043
    %v5057 = vpack.c.b16 %v5046, %v5045
    %v5058 = vpack.c.b16 %v5048, %v5047
    %v5059 = vpack.c.b16 %v5050, %v5049
    %v5060 = vpack.c.b16 %v5052, %v5051
    %5069 = vmatpush.bf16.msra.mxu0 %v5060
    %5070 = vmatpush.bf16.msra.mxu0 %v5059
    %5071 = vmatpush.bf16.msra.mxu0 %v5058
    %5072 = vmatpush.bf16.msra.mxu0 %v5057
    %5073 = vmatpush.bf16.msra.mxu0 %v5056
    %5074 = vmatpush.bf16.msra.mxu0 %v5055
    %5075 = vmatpush.bf16.msra.mxu0 %v5054
    %5076 = vmatpush.bf16.msra.mxu0 %v5053
    %5077 = vmatmul.bf16.gmra.mxu0 %v5000
    %v5078 = vpop.f32.mrf.mxu0
    %v5079 = vadd.f32 %v5019, %v5078
    %v5080 = vpop.f32.mrf.mxu0
    %v5081 = vadd.f32 %v5019, %v5080
    %5082 = vdwg.mxu0
    %v5083 = vadd.f32 %v5079, %v4998
    %v5084 = vadd.f32 %v5081, %v4999
    %v5085 = vld [vmem:[#allocation14] sm:$0x1]
    %v5086 = vld [vmem:[#allocation16] sm:$0x1]
    %5087 = vadd.xlane.f32.xlu0 %v5083
    %v5088 = vpop.xlane.xlu0 %5087
    %5089 = vadd.xlane.f32.xlu0 %v5084
    %v5090 = vpop.xlane.xlu0 %5089
    %v5091 = vrcp.pop 128.0
    %v5092 = vmul.f32 128.0, %v5091
    %v5093 = vsub.f32 1.0, %v5092
    %v5094 = vmul.f32 %v5091, %v5093
    %v5095 = vadd.f32 %v5091, %v5094
    %vm5096 = vweird.f32 %v5091
    %v5097 = vsel %vm5096, %v5091, %v5095
    %v5098 = vmul.f32 %v5088, %v5097
    %v5099 = vmul.f32 %v5090, %v5097
    %v5100 = vsub.f32 %v5083, %v5098
    %v5101 = vsub.f32 %v5084, %v5099
    %v5102 = vmul.f32 %v5100, %v5100
    %v5103 = vmul.f32 %v5101, %v5101
    %5104 = vadd.xlane.f32.xlu0 %v5102
    %v5105 = vpop.xlane.xlu0 %5104
    %5106 = vadd.xlane.f32.xlu0 %v5103
    %v5107 = vpop.xlane.xlu0 %5106
    %v5108 = vmul.f32 %v5105, %v5097
    %v5109 = vmul.f32 %v5107, %v5097
    %v5110 = vadd.f32 %v5108, 1e-05
    %v5111 = vadd.f32 %v5109, 1e-05
    %v5112 = vrsqrt.pop %v5110
    %v5113 = vmul.f32 %v5112, %v5110
    %v5114 = vmul.f32 %v5113, %v5112
    %v5115 = vmul.f32 0.5, %v5114
    %v5116 = vsub.f32 1.5, %v5115
    %v5117 = vmul.f32 %v5112, %v5116
    %vm5118 = vweird.f32 %v5110
    %vm5119 = vweird.f32 %v5112
    %vm5120 = vmor %vm5118, %vm5119
    %v5121 = vsel %vm5120, %v5112, %v5117
    %v5122 = vrsqrt.pop %v5111
    %v5123 = vmul.f32 %v5122, %v5111
    %v5124 = vmul.f32 %v5123, %v5122
    %v5125 = vmul.f32 0.5, %v5124
    %v5126 = vsub.f32 1.5, %v5125
    %v5127 = vmul.f32 %v5122, %v5126
    %vm5128 = vweird.f32 %v5111
    %vm5129 = vweird.f32 %v5122
    %vm5130 = vmor %vm5128, %vm5129
    %v5131 = vsel %vm5130, %v5122, %v5127
    %v5132 = vmul.f32 %v5100, %v5121
    %v5133 = vmul.f32 %v5101, %v5131
    %v5135 = vperm.slane %v5085, 0
    %v5137 = vmul.f32 %v5132, %v5135
    %v5138 = vmul.f32 %v5133, %v5135
    %v5140 = vperm.slane %v5086, 0
    %v5142 = vadd.f32 %v5137, %v5140
    %v5143 = vadd.f32 %v5138, %v5140
    %v5144 = vpack.c.bf16 %v5143, %v5142
    %v5145 = vld [vmem:[#allocation17] sm:$0xff]
    %v5146 = vld [vmem:[#allocation17 + $0x8] sm:$0xff]
    %v5147 = vld [vmem:[#allocation17 + $0x10] sm:$0xff]
    %v5148 = vld [vmem:[#allocation17 + $0x18] sm:$0xff]
    %v5149 = vld [vmem:[#allocation17 + $0x20] sm:$0xff]
    %v5150 = vld [vmem:[#allocation17 + $0x28] sm:$0xff]
    %v5151 = vld [vmem:[#allocation17 + $0x30] sm:$0xff]
    %v5152 = vld [vmem:[#allocation17 + $0x38] sm:$0xff]
    %v5153 = vld [vmem:[#allocation17 + $0x40] sm:$0xff]
    %v5154 = vld [vmem:[#allocation17 + $0x48] sm:$0xff]
    %v5155 = vld [vmem:[#allocation17 + $0x50] sm:$0xff]
    %v5156 = vld [vmem:[#allocation17 + $0x58] sm:$0xff]
    %v5157 = vld [vmem:[#allocation17 + $0x60] sm:$0xff]
    %v5158 = vld [vmem:[#allocation17 + $0x68] sm:$0xff]
    %v5159 = vld [vmem:[#allocation17 + $0x70] sm:$0xff]
    %v5160 = vld [vmem:[#allocation17 + $0x78] sm:$0xff]
    %v5161 = vld [vmem:[#allocation19] sm:$0x3]
    %v5163 = vperm.slane %v5161, 0
    %v5164 = vperm.slane %v5161, 1
    %v5183 = vunpack.c.l.b16 %v5145
    %v5184 = vunpack.c.h.b16 %v5145
    %v5185 = vunpack.c.l.b16 %v5146
    %v5186 = vunpack.c.h.b16 %v5146
    %v5187 = vunpack.c.l.b16 %v5147
    %v5188 = vunpack.c.h.b16 %v5147
    %v5189 = vunpack.c.l.b16 %v5148
    %v5190 = vunpack.c.h.b16 %v5148
    %v5191 = vunpack.c.l.b16 %v5149
    %v5192 = vunpack.c.h.b16 %v5149
    %v5193 = vunpack.c.l.b16 %v5150
    %v5194 = vunpack.c.h.b16 %v5150
    %v5195 = vunpack.c.l.b16 %v5151
    %v5196 = vunpack.c.h.b16 %v5151
    %v5197 = vunpack.c.l.b16 %v5152
    %v5198 = vunpack.c.h.b16 %v5152
    %v5199 = vunpack.c.l.b16 %v5153
    %v5200 = vunpack.c.h.b16 %v5153
    %v5201 = vunpack.c.l.b16 %v5154
    %v5202 = vunpack.c.h.b16 %v5154
    %v5203 = vunpack.c.l.b16 %v5155
    %v5204 = vunpack.c.h.b16 %v5155
    %v5205 = vunpack.c.l.b16 %v5156
    %v5206 = vunpack.c.h.b16 %v5156
    %v5207 = vunpack.c.l.b16 %v5157
    %v5208 = vunpack.c.h.b16 %v5157
    %v5209 = vunpack.c.l.b16 %v5158
    %v5210 = vunpack.c.h.b16 %v5158
    %v5211 = vunpack.c.l.b16 %v5159
    %v5212 = vunpack.c.h.b16 %v5159
    %v5213 = vunpack.c.l.b16 %v5160
    %v5214 = vunpack.c.h.b16 %v5160
    %v5215 = vpack.c.b16 %v5185, %v5183
    %v5216 = vpack.c.b16 %v5186, %v5184
    %v5217 = vpack.c.b16 %v5189, %v5187
    %v5218 = vpack.c.b16 %v5190, %v5188
    %v5219 = vpack.c.b16 %v5193, %v5191
    %v5220 = vpack.c.b16 %v5194, %v5192
    %v5221 = vpack.c.b16 %v5197, %v5195
    %v5222 = vpack.c.b16 %v5198, %v5196
    %v5223 = vpack.c.b16 %v5201, %v5199
    %v5224 = vpack.c.b16 %v5202, %v5200
    %v5225 = vpack.c.b16 %v5205, %v5203
    %v5226 = vpack.c.b16 %v5206, %v5204
    %v5227 = vpack.c.b16 %v5209, %v5207
    %v5228 = vpack.c.b16 %v5210, %v5208
    %v5229 = vpack.c.b16 %v5213, %v5211
    %v5230 = vpack.c.b16 %v5214, %v5212
    %5247 = vmatpush.bf16.msra.mxu0 %v5229
    %5248 = vmatpush.bf16.msra.mxu0 %v5227
    %5249 = vmatpush.bf16.msra.mxu0 %v5225
    %5250 = vmatpush.bf16.msra.mxu0 %v5223
    %5251 = vmatpush.bf16.msra.mxu0 %v5221
    %5252 = vmatpush.bf16.msra.mxu0 %v5219
    %5253 = vmatpush.bf16.msra.mxu0 %v5217
    %5254 = vmatpush.bf16.msra.mxu0 %v5215
    %5255 = vmatmul.bf16.gmra.mxu0 %v5144
    %v5256 = vpop.f32.mrf.mxu0
    %v5257 = vadd.f32 %v5163, %v5256
    %v5258 = vpop.f32.mrf.mxu0
    %v5259 = vadd.f32 %v5163, %v5258
    %5260 = vdwg.mxu0
    %5261 = vmatpush.bf16.msra.mxu0 %v5230
    %5262 = vmatpush.bf16.msra.mxu0 %v5228
    %5263 = vmatpush.bf16.msra.mxu0 %v5226
    %5264 = vmatpush.bf16.msra.mxu0 %v5224
    %5265 = vmatpush.bf16.msra.mxu0 %v5222
    %5266 = vmatpush.bf16.msra.mxu0 %v5220
    %5267 = vmatpush.bf16.msra.mxu0 %v5218
    %5268 = vmatpush.bf16.msra.mxu0 %v5216
    %5269 = vmatmul.bf16.gmra.mxu0 %v5144
    %v5270 = vpop.f32.mrf.mxu0
    %v5271 = vadd.f32 %v5164, %v5270
    %v5272 = vpop.f32.mrf.mxu0
    %v5273 = vadd.f32 %v5164, %v5272
    %5274 = vdwg.mxu0
    %v5275 = vmax.f32 %v5257, 0.0
    %v5276 = vmax.f32 %v5271, 0.0
    %v5277 = vmax.f32 %v5259, 0.0
    %v5278 = vmax.f32 %v5273, 0.0
    %v5279 = vpack.c.bf16 %v5277, %v5275
    %v5280 = vpack.c.bf16 %v5278, %v5276
    %v5281 = vld [vmem:[#allocation20] sm:$0xf]
    %v5282 = vld [vmem:[#allocation20 + $0x4] sm:$0xf]
    %v5283 = vld [vmem:[#allocation20 + $0x8] sm:$0xf]
    %v5284 = vld [vmem:[#allocation20 + $0xc] sm:$0xf]
    %v5285 = vld [vmem:[#allocation20 + $0x10] sm:$0xf]
    %v5286 = vld [vmem:[#allocation20 + $0x14] sm:$0xf]
    %v5287 = vld [vmem:[#allocation20 + $0x18] sm:$0xf]
    %v5288 = vld [vmem:[#allocation20 + $0x1c] sm:$0xf]
    %v5289 = vld [vmem:[#allocation20 + $0x20] sm:$0xf]
    %v5290 = vld [vmem:[#allocation20 + $0x24] sm:$0xf]
    %v5291 = vld [vmem:[#allocation20 + $0x28] sm:$0xf]
    %v5292 = vld [vmem:[#allocation20 + $0x2c] sm:$0xf]
    %v5293 = vld [vmem:[#allocation20 + $0x30] sm:$0xf]
    %v5294 = vld [vmem:[#allocation20 + $0x34] sm:$0xf]
    %v5295 = vld [vmem:[#allocation20 + $0x38] sm:$0xf]
    %v5296 = vld [vmem:[#allocation20 + $0x3c] sm:$0xf]
    %v5297 = vld [vmem:[#allocation20 + $0x40] sm:$0xf]
    %v5298 = vld [vmem:[#allocation20 + $0x44] sm:$0xf]
    %v5299 = vld [vmem:[#allocation20 + $0x48] sm:$0xf]
    %v5300 = vld [vmem:[#allocation20 + $0x4c] sm:$0xf]
    %v5301 = vld [vmem:[#allocation20 + $0x50] sm:$0xf]
    %v5302 = vld [vmem:[#allocation20 + $0x54] sm:$0xf]
    %v5303 = vld [vmem:[#allocation20 + $0x58] sm:$0xf]
    %v5304 = vld [vmem:[#allocation20 + $0x5c] sm:$0xf]
    %v5305 = vld [vmem:[#allocation20 + $0x60] sm:$0xf]
    %v5306 = vld [vmem:[#allocation20 + $0x64] sm:$0xf]
    %v5307 = vld [vmem:[#allocation20 + $0x68] sm:$0xf]
    %v5308 = vld [vmem:[#allocation20 + $0x6c] sm:$0xf]
    %v5309 = vld [vmem:[#allocation20 + $0x70] sm:$0xf]
    %v5310 = vld [vmem:[#allocation20 + $0x74] sm:$0xf]
    %v5311 = vld [vmem:[#allocation20 + $0x78] sm:$0xf]
    %v5312 = vld [vmem:[#allocation20 + $0x7c] sm:$0xf]
    %v5313 = vld [vmem:[#allocation22] sm:$0x1]
    %v5315 = vperm.slane %v5313, 0
    %v5349 = vunpack.c.l.b16 %v5281
    %v5350 = vunpack.c.l.b16 %v5282
    %v5351 = vunpack.c.l.b16 %v5283
    %v5352 = vunpack.c.l.b16 %v5284
    %v5353 = vunpack.c.l.b16 %v5285
    %v5354 = vunpack.c.l.b16 %v5286
    %v5355 = vunpack.c.l.b16 %v5287
    %v5356 = vunpack.c.l.b16 %v5288
    %v5357 = vunpack.c.l.b16 %v5289
    %v5358 = vunpack.c.l.b16 %v5290
    %v5359 = vunpack.c.l.b16 %v5291
    %v5360 = vunpack.c.l.b16 %v5292
    %v5361 = vunpack.c.l.b16 %v5293
    %v5362 = vunpack.c.l.b16 %v5294
    %v5363 = vunpack.c.l.b16 %v5295
    %v5364 = vunpack.c.l.b16 %v5296
    %v5365 = vunpack.c.l.b16 %v5297
    %v5366 = vunpack.c.l.b16 %v5298
    %v5367 = vunpack.c.l.b16 %v5299
    %v5368 = vunpack.c.l.b16 %v5300
    %v5369 = vunpack.c.l.b16 %v5301
    %v5370 = vunpack.c.l.b16 %v5302
    %v5371 = vunpack.c.l.b16 %v5303
    %v5372 = vunpack.c.l.b16 %v5304
    %v5373 = vunpack.c.l.b16 %v5305
    %v5374 = vunpack.c.l.b16 %v5306
    %v5375 = vunpack.c.l.b16 %v5307
    %v5376 = vunpack.c.l.b16 %v5308
    %v5377 = vunpack.c.l.b16 %v5309
    %v5378 = vunpack.c.l.b16 %v5310
    %v5379 = vunpack.c.l.b16 %v5311
    %v5380 = vunpack.c.l.b16 %v5312
    %v5381 = vpack.c.b16 %v5350, %v5349
    %v5382 = vpack.c.b16 %v5352, %v5351
    %v5383 = vpack.c.b16 %v5354, %v5353
    %v5384 = vpack.c.b16 %v5356, %v5355
    %v5385 = vpack.c.b16 %v5358, %v5357
    %v5386 = vpack.c.b16 %v5360, %v5359
    %v5387 = vpack.c.b16 %v5362, %v5361
    %v5388 = vpack.c.b16 %v5364, %v5363
    %v5389 = vpack.c.b16 %v5366, %v5365
    %v5390 = vpack.c.b16 %v5368, %v5367
    %v5391 = vpack.c.b16 %v5370, %v5369
    %v5392 = vpack.c.b16 %v5372, %v5371
    %v5393 = vpack.c.b16 %v5374, %v5373
    %v5394 = vpack.c.b16 %v5376, %v5375
    %v5395 = vpack.c.b16 %v5378, %v5377
    %v5396 = vpack.c.b16 %v5380, %v5379
    %5413 = vmatpush.bf16.msra.mxu0 %v5388
    %5414 = vmatpush.bf16.msra.mxu0 %v5387
    %5415 = vmatpush.bf16.msra.mxu0 %v5386
    %5416 = vmatpush.bf16.msra.mxu0 %v5385
    %5417 = vmatpush.bf16.msra.mxu0 %v5384
    %5418 = vmatpush.bf16.msra.mxu0 %v5383
    %5419 = vmatpush.bf16.msra.mxu0 %v5382
    %5420 = vmatpush.bf16.msra.mxu0 %v5381
    %5421 = vmatmul.bf16.gmra.mxu0 %v5279
    %v5422 = vpop.f32.mrf.mxu0
    %v5423 = vadd.f32 %v5315, %v5422
    %v5424 = vpop.f32.mrf.mxu0
    %v5425 = vadd.f32 %v5315, %v5424
    %5426 = vdwg.mxu0
    %5427 = vmatpush.bf16.msra.mxu0 %v5396
    %5428 = vmatpush.bf16.msra.mxu0 %v5395
    %5429 = vmatpush.bf16.msra.mxu0 %v5394
    %5430 = vmatpush.bf16.msra.mxu0 %v5393
    %5431 = vmatpush.bf16.msra.mxu0 %v5392
    %5432 = vmatpush.bf16.msra.mxu0 %v5391
    %5433 = vmatpush.bf16.msra.mxu0 %v5390
    %5434 = vmatpush.bf16.msra.mxu0 %v5389
    %5435 = vmatmul.bf16.gmra.mxu0 %v5280
    %v5436 = vpop.f32.mrf.mxu0
    %v5437 = vadd.f32 %v5423, %v5436
    %v5438 = vpop.f32.mrf.mxu0
    %v5439 = vadd.f32 %v5425, %v5438
    %5440 = vdwg.mxu0
    %v5441 = vadd.f32 %v5437, %v5142
    %v5442 = vadd.f32 %v5439, %v5143
    %v5443 = vld [vmem:[#allocation23] sm:$0x1]
    %v5444 = vld [vmem:[#allocation25] sm:$0x1]
    %5445 = vadd.xlane.f32.xlu0 %v5441
    %v5446 = vpop.xlane.xlu0 %5445
    %5447 = vadd.xlane.f32.xlu0 %v5442
    %v5448 = vpop.xlane.xlu0 %5447
    %v5449 = vmul.f32 %v5446, %v5097
    %v5450 = vmul.f32 %v5448, %v5097
    %v5451 = vsub.f32 %v5441, %v5449
    %v5452 = vsub.f32 %v5442, %v5450
    %v5453 = vmul.f32 %v5451, %v5451
    %v5454 = vmul.f32 %v5452, %v5452
    %5455 = vadd.xlane.f32.xlu0 %v5453
    %v5456 = vpop.xlane.xlu0 %5455
    %5457 = vadd.xlane.f32.xlu0 %v5454
    %v5458 = vpop.xlane.xlu0 %5457
    %v5459 = vmul.f32 %v5456, %v5097
    %v5460 = vmul.f32 %v5458, %v5097
    %v5461 = vadd.f32 %v5459, 1e-05
    %v5462 = vadd.f32 %v5460, 1e-05
    %v5463 = vrsqrt.pop %v5461
    %v5464 = vmul.f32 %v5463, %v5461
    %v5465 = vmul.f32 %v5464, %v5463
    %v5466 = vmul.f32 0.5, %v5465
    %v5467 = vsub.f32 1.5, %v5466
    %v5468 = vmul.f32 %v5463, %v5467
    %vm5469 = vweird.f32 %v5461
    %vm5470 = vweird.f32 %v5463
    %vm5471 = vmor %vm5469, %vm5470
    %v5472 = vsel %vm5471, %v5463, %v5468
    %v5473 = vrsqrt.pop %v5462
    %v5474 = vmul.f32 %v5473, %v5462
    %v5475 = vmul.f32 %v5474, %v5473
    %v5476 = vmul.f32 0.5, %v5475
    %v5477 = vsub.f32 1.5, %v5476
    %v5478 = vmul.f32 %v5473, %v5477
    %vm5479 = vweird.f32 %v5462
    %vm5480 = vweird.f32 %v5473
    %vm5481 = vmor %vm5479, %vm5480
    %v5482 = vsel %vm5481, %v5473, %v5478
    %v5483 = vmul.f32 %v5451, %v5472
    %v5484 = vmul.f32 %v5452, %v5482
    %v5486 = vperm.slane %v5443, 0
    %v5488 = vmul.f32 %v5483, %v5486
    %v5489 = vmul.f32 %v5484, %v5486
    %v5491 = vperm.slane %v5444, 0
    %v5493 = vadd.f32 %v5488, %v5491
    %v5494 = vadd.f32 %v5489, %v5491
    %v5495 = vpack.c.bf16 %v5494, %v5493
    %v5496 = vld [vmem:[#allocation26] sm:$0xff]
    %v5497 = vld [vmem:[#allocation26 + $0x8] sm:$0xff]
    %v5498 = vld [vmem:[#allocation26 + $0x10] sm:$0xff]
    %v5499 = vld [vmem:[#allocation26 + $0x18] sm:$0xff]
    %v5500 = vld [vmem:[#allocation26 + $0x20] sm:$0xff]
    %v5501 = vld [vmem:[#allocation26 + $0x28] sm:$0xff]
    %v5502 = vld [vmem:[#allocation26 + $0x30] sm:$0xff]
    %v5503 = vld [vmem:[#allocation26 + $0x38] sm:$0xff]
    %v5504 = vld [vmem:[#allocation26 + $0x40] sm:$0xff]
    %v5505 = vld [vmem:[#allocation26 + $0x48] sm:$0xff]
    %v5506 = vld [vmem:[#allocation26 + $0x50] sm:$0xff]
    %v5507 = vld [vmem:[#allocation26 + $0x58] sm:$0xff]
    %v5508 = vld [vmem:[#allocation26 + $0x60] sm:$0xff]
    %v5509 = vld [vmem:[#allocation26 + $0x68] sm:$0xff]
    %v5510 = vld [vmem:[#allocation26 + $0x70] sm:$0xff]
    %v5511 = vld [vmem:[#allocation26 + $0x78] sm:$0xff]
    %v5512 = vld [vmem:[#allocation26 + $0x80] sm:$0xff]
    %v5513 = vld [vmem:[#allocation26 + $0x88] sm:$0xff]
    %v5514 = vld [vmem:[#allocation26 + $0x90] sm:$0xff]
    %v5515 = vld [vmem:[#allocation26 + $0x98] sm:$0xff]
    %v5516 = vld [vmem:[#allocation26 + $0xa0] sm:$0xff]
    %v5517 = vld [vmem:[#allocation26 + $0xa8] sm:$0xff]
    %v5518 = vld [vmem:[#allocation26 + $0xb0] sm:$0xff]
    %v5519 = vld [vmem:[#allocation26 + $0xb8] sm:$0xff]
    %v5520 = vld [vmem:[#allocation26 + $0xc0] sm:$0xff]
    %v5521 = vld [vmem:[#allocation26 + $0xc8] sm:$0xff]
    %v5522 = vld [vmem:[#allocation26 + $0xd0] sm:$0xff]
    %v5523 = vld [vmem:[#allocation26 + $0xd8] sm:$0xff]
    %v5524 = vld [vmem:[#allocation26 + $0xe0] sm:$0xff]
    %v5525 = vld [vmem:[#allocation26 + $0xe8] sm:$0xff]
    %v5526 = vld [vmem:[#allocation26 + $0xf0] sm:$0xff]
    %v5527 = vld [vmem:[#allocation26 + $0xf8] sm:$0xff]
    %v5528 = vld [vmem:[#allocation28] sm:$0xf]
    %v5530 = vperm.slane %v5528, 0
    %v5531 = vperm.slane %v5528, 1
    %v5532 = vperm.slane %v5528, 2
    %v5533 = vperm.slane %v5528, 3
    %v5570 = vunpack.c.l.b16 %v5496
    %v5571 = vunpack.c.h.b16 %v5496
    %v5572 = vunpack.c.l.b16 %v5497
    %v5573 = vunpack.c.h.b16 %v5497
    %v5574 = vunpack.c.l.b16 %v5498
    %v5575 = vunpack.c.h.b16 %v5498
    %v5576 = vunpack.c.l.b16 %v5499
    %v5577 = vunpack.c.h.b16 %v5499
    %v5578 = vunpack.c.l.b16 %v5500
    %v5579 = vunpack.c.h.b16 %v5500
    %v5580 = vunpack.c.l.b16 %v5501
    %v5581 = vunpack.c.h.b16 %v5501
    %v5582 = vunpack.c.l.b16 %v5502
    %v5583 = vunpack.c.h.b16 %v5502
    %v5584 = vunpack.c.l.b16 %v5503
    %v5585 = vunpack.c.h.b16 %v5503
    %v5586 = vunpack.c.l.b16 %v5504
    %v5587 = vunpack.c.h.b16 %v5504
    %v5588 = vunpack.c.l.b16 %v5505
    %v5589 = vunpack.c.h.b16 %v5505
    %v5590 = vunpack.c.l.b16 %v5506
    %v5591 = vunpack.c.h.b16 %v5506
    %v5592 = vunpack.c.l.b16 %v5507
    %v5593 = vunpack.c.h.b16 %v5507
    %v5594 = vunpack.c.l.b16 %v5508
    %v5595 = vunpack.c.h.b16 %v5508
    %v5596 = vunpack.c.l.b16 %v5509
    %v5597 = vunpack.c.h.b16 %v5509
    %v5598 = vunpack.c.l.b16 %v5510
    %v5599 = vunpack.c.h.b16 %v5510
    %v5600 = vunpack.c.l.b16 %v5511
    %v5601 = vunpack.c.h.b16 %v5511
    %v5602 = vunpack.c.l.b16 %v5512
    %v5603 = vunpack.c.h.b16 %v5512
    %v5604 = vunpack.c.l.b16 %v5513
    %v5605 = vunpack.c.h.b16 %v5513
    %v5606 = vunpack.c.l.b16 %v5514
    %v5607 = vunpack.c.h.b16 %v5514
    %v5608 = vunpack.c.l.b16 %v5515
    %v5609 = vunpack.c.h.b16 %v5515
    %v5610 = vunpack.c.l.b16 %v5516
    %v5611 = vunpack.c.h.b16 %v5516
    %v5612 = vunpack.c.l.b16 %v5517
    %v5613 = vunpack.c.h.b16 %v5517
    %v5614 = vunpack.c.l.b16 %v5518
    %v5615 = vunpack.c.h.b16 %v5518
    %v5616 = vunpack.c.l.b16 %v5519
    %v5617 = vunpack.c.h.b16 %v5519
    %v5618 = vunpack.c.l.b16 %v5520
    %v5619 = vunpack.c.h.b16 %v5520
    %v5620 = vunpack.c.l.b16 %v5521
    %v5621 = vunpack.c.h.b16 %v5521
    %v5622 = vunpack.c.l.b16 %v5522
    %v5623 = vunpack.c.h.b16 %v5522
    %v5624 = vunpack.c.l.b16 %v5523
    %v5625 = vunpack.c.h.b16 %v5523
    %v5626 = vunpack.c.l.b16 %v5524
    %v5627 = vunpack.c.h.b16 %v5524
    %v5628 = vunpack.c.l.b16 %v5525
    %v5629 = vunpack.c.h.b16 %v5525
    %v5630 = vunpack.c.l.b16 %v5526
    %v5631 = vunpack.c.h.b16 %v5526
    %v5632 = vunpack.c.l.b16 %v5527
    %v5633 = vunpack.c.h.b16 %v5527
    %v5634 = vpack.c.b16 %v5574, %v5570
    %v5635 = vpack.c.b16 %v5575, %v5571
    %v5636 = vpack.c.b16 %v5576, %v5572
    %v5637 = vpack.c.b16 %v5577, %v5573
    %v5638 = vpack.c.b16 %v5582, %v5578
    %v5639 = vpack.c.b16 %v5583, %v5579
    %v5640 = vpack.c.b16 %v5584, %v5580
    %v5641 = vpack.c.b16 %v5585, %v5581
    %v5642 = vpack.c.b16 %v5590, %v5586
    %v5643 = vpack.c.b16 %v5591, %v5587
    %v5644 = vpack.c.b16 %v5592, %v5588
    %v5645 = vpack.c.b16 %v5593, %v5589
    %v5646 = vpack.c.b16 %v5598, %v5594
    %v5647 = vpack.c.b16 %v5599, %v5595
    %v5648 = vpack.c.b16 %v5600, %v5596
    %v5649 = vpack.c.b16 %v5601, %v5597
    %v5650 = vpack.c.b16 %v5606, %v5602
    %v5651 = vpack.c.b16 %v5607, %v5603
    %v5652 = vpack.c.b16 %v5608, %v5604
    %v5653 = vpack.c.b16 %v5609, %v5605
    %v5654 = vpack.c.b16 %v5614, %v5610
    %v5655 = vpack.c.b16 %v5615, %v5611
    %v5656 = vpack.c.b16 %v5616, %v5612
    %v5657 = vpack.c.b16 %v5617, %v5613
    %v5658 = vpack.c.b16 %v5622, %v5618
    %v5659 = vpack.c.b16 %v5623, %v5619
    %v5660 = vpack.c.b16 %v5624, %v5620
    %v5661 = vpack.c.b16 %v5625, %v5621
    %v5662 = vpack.c.b16 %v5630, %v5626
    %v5663 = vpack.c.b16 %v5631, %v5627
    %v5664 = vpack.c.b16 %v5632, %v5628
    %v5665 = vpack.c.b16 %v5633, %v5629
    %5698 = vmatpush.bf16.msra.mxu0 %v5662
    %5699 = vmatpush.bf16.msra.mxu0 %v5658
    %5700 = vmatpush.bf16.msra.mxu0 %v5654
    %5701 = vmatpush.bf16.msra.mxu0 %v5650
    %5702 = vmatpush.bf16.msra.mxu0 %v5646
    %5703 = vmatpush.bf16.msra.mxu0 %v5642
    %5704 = vmatpush.bf16.msra.mxu0 %v5638
    %5705 = vmatpush.bf16.msra.mxu0 %v5634
    %5706 = vmatmul.bf16.gmra.mxu0 %v5495
    %v5707 = vpop.f32.mrf.mxu0
    %v5708 = vadd.f32 %v5530, %v5707
    %v5709 = vpop.f32.mrf.mxu0
    %v5710 = vadd.f32 %v5530, %v5709
    %5711 = vdwg.mxu0
    %5712 = vmatpush.bf16.msra.mxu0 %v5663
    %5713 = vmatpush.bf16.msra.mxu0 %v5659
    %5714 = vmatpush.bf16.msra.mxu0 %v5655
    %5715 = vmatpush.bf16.msra.mxu0 %v5651
    %5716 = vmatpush.bf16.msra.mxu0 %v5647
    %5717 = vmatpush.bf16.msra.mxu0 %v5643
    %5718 = vmatpush.bf16.msra.mxu0 %v5639
    %5719 = vmatpush.bf16.msra.mxu0 %v5635
    %5720 = vmatmul.bf16.gmra.mxu0 %v5495
    %v5721 = vpop.f32.mrf.mxu0
    %v5722 = vadd.f32 %v5531, %v5721
    %v5723 = vpop.f32.mrf.mxu0
    %v5724 = vadd.f32 %v5531, %v5723
    %5725 = vdwg.mxu0
    %5726 = vmatpush.bf16.msra.mxu0 %v5664
    %5727 = vmatpush.bf16.msra.mxu0 %v5660
    %5728 = vmatpush.bf16.msra.mxu0 %v5656
    %5729 = vmatpush.bf16.msra.mxu0 %v5652
    %5730 = vmatpush.bf16.msra.mxu0 %v5648
    %5731 = vmatpush.bf16.msra.mxu0 %v5644
    %5732 = vmatpush.bf16.msra.mxu0 %v5640
    %5733 = vmatpush.bf16.msra.mxu0 %v5636
    %5734 = vmatmul.bf16.gmra.mxu0 %v5495
    %v5735 = vpop.f32.mrf.mxu0
    %v5736 = vadd.f32 %v5532, %v5735
    %v5737 = vpop.f32.mrf.mxu0
    %v5738 = vadd.f32 %v5532, %v5737
    %5739 = vdwg.mxu0
    %5740 = vmatpush.bf16.msra.mxu0 %v5665
    %5741 = vmatpush.bf16.msra.mxu0 %v5661
    %5742 = vmatpush.bf16.msra.mxu0 %v5657
    %5743 = vmatpush.bf16.msra.mxu0 %v5653
    %5744 = vmatpush.bf16.msra.mxu0 %v5649
    %5745 = vmatpush.bf16.msra.mxu0 %v5645
    %5746 = vmatpush.bf16.msra.mxu0 %v5641
    %5747 = vmatpush.bf16.msra.mxu0 %v5637
    %5748 = vmatmul.bf16.gmra.mxu0 %v5495
    %v5749 = vpop.f32.mrf.mxu0
    %v5750 = vadd.f32 %v5533, %v5749
    %v5751 = vpop.f32.mrf.mxu0
    %v5752 = vadd.f32 %v5533, %v5751
    %5753 = vdwg.mxu0
    %v5754 = vmax.f32 %v5708, 0.0
    %v5755 = vmax.f32 %v5722, 0.0
    %v5756 = vmax.f32 %v5736, 0.0
    %v5757 = vmax.f32 %v5750, 0.0
    %v5758 = vmax.f32 %v5710, 0.0
    %v5759 = vmax.f32 %v5724, 0.0
    %v5760 = vmax.f32 %v5738, 0.0
    %v5761 = vmax.f32 %v5752, 0.0
    %v5762 = vpack.c.bf16 %v5758, %v5754
    %v5763 = vpack.c.bf16 %v5759, %v5755
    %v5764 = vpack.c.bf16 %v5760, %v5756
    %v5765 = vpack.c.bf16 %v5761, %v5757
    %v5766 = vld [vmem:[#allocation29] sm:$0xf]
    %v5767 = vld [vmem:[#allocation29 + $0x4] sm:$0xf]
    %v5768 = vld [vmem:[#allocation29 + $0x8] sm:$0xf]
    %v5769 = vld [vmem:[#allocation29 + $0xc] sm:$0xf]
    %v5770 = vld [vmem:[#allocation29 + $0x10] sm:$0xf]
    %v5771 = vld [vmem:[#allocation29 + $0x14] sm:$0xf]
    %v5772 = vld [vmem:[#allocation29 + $0x18] sm:$0xf]
    %v5773 = vld [vmem:[#allocation29 + $0x1c] sm:$0xf]
    %v5774 = vld [vmem:[#allocation29 + $0x20] sm:$0xf]
    %v5775 = vld [vmem:[#allocation29 + $0x24] sm:$0xf]
    %v5776 = vld [vmem:[#allocation29 + $0x28] sm:$0xf]
    %v5777 = vld [vmem:[#allocation29 + $0x2c] sm:$0xf]
    %v5778 = vld [vmem:[#allocation29 + $0x30] sm:$0xf]
    %v5779 = vld [vmem:[#allocation29 + $0x34] sm:$0xf]
    %v5780 = vld [vmem:[#allocation29 + $0x38] sm:$0xf]
    %v5781 = vld [vmem:[#allocation29 + $0x3c] sm:$0xf]
    %v5782 = vld [vmem:[#allocation29 + $0x40] sm:$0xf]
    %v5783 = vld [vmem:[#allocation29 + $0x44] sm:$0xf]
    %v5784 = vld [vmem:[#allocation29 + $0x48] sm:$0xf]
    %v5785 = vld [vmem:[#allocation29 + $0x4c] sm:$0xf]
    %v5786 = vld [vmem:[#allocation29 + $0x50] sm:$0xf]
    %v5787 = vld [vmem:[#allocation29 + $0x54] sm:$0xf]
    %v5788 = vld [vmem:[#allocation29 + $0x58] sm:$0xf]
    %v5789 = vld [vmem:[#allocation29 + $0x5c] sm:$0xf]
    %v5790 = vld [vmem:[#allocation29 + $0x60] sm:$0xf]
    %v5791 = vld [vmem:[#allocation29 + $0x64] sm:$0xf]
    %v5792 = vld [vmem:[#allocation29 + $0x68] sm:$0xf]
    %v5793 = vld [vmem:[#allocation29 + $0x6c] sm:$0xf]
    %v5794 = vld [vmem:[#allocation29 + $0x70] sm:$0xf]
    %v5795 = vld [vmem:[#allocation29 + $0x74] sm:$0xf]
    %v5796 = vld [vmem:[#allocation29 + $0x78] sm:$0xf]
    %v5797 = vld [vmem:[#allocation29 + $0x7c] sm:$0xf]
    %v5798 = vld [vmem:[#allocation29 + $0x80] sm:$0xf]
    %v5799 = vld [vmem:[#allocation29 + $0x84] sm:$0xf]
    %v5800 = vld [vmem:[#allocation29 + $0x88] sm:$0xf]
    %v5801 = vld [vmem:[#allocation29 + $0x8c] sm:$0xf]
    %v5802 = vld [vmem:[#allocation29 + $0x90] sm:$0xf]
    %v5803 = vld [vmem:[#allocation29 + $0x94] sm:$0xf]
    %v5804 = vld [vmem:[#allocation29 + $0x98] sm:$0xf]
    %v5805 = vld [vmem:[#allocation29 + $0x9c] sm:$0xf]
    %v5806 = vld [vmem:[#allocation29 + $0xa0] sm:$0xf]
    %v5807 = vld [vmem:[#allocation29 + $0xa4] sm:$0xf]
    %v5808 = vld [vmem:[#allocation29 + $0xa8] sm:$0xf]
    %v5809 = vld [vmem:[#allocation29 + $0xac] sm:$0xf]
    %v5810 = vld [vmem:[#allocation29 + $0xb0] sm:$0xf]
    %v5811 = vld [vmem:[#allocation29 + $0xb4] sm:$0xf]
    %v5812 = vld [vmem:[#allocation29 + $0xb8] sm:$0xf]
    %v5813 = vld [vmem:[#allocation29 + $0xbc] sm:$0xf]
    %v5814 = vld [vmem:[#allocation29 + $0xc0] sm:$0xf]
    %v5815 = vld [vmem:[#allocation29 + $0xc4] sm:$0xf]
    %v5816 = vld [vmem:[#allocation29 + $0xc8] sm:$0xf]
    %v5817 = vld [vmem:[#allocation29 + $0xcc] sm:$0xf]
    %v5818 = vld [vmem:[#allocation29 + $0xd0] sm:$0xf]
    %v5819 = vld [vmem:[#allocation29 + $0xd4] sm:$0xf]
    %v5820 = vld [vmem:[#allocation29 + $0xd8] sm:$0xf]
    %v5821 = vld [vmem:[#allocation29 + $0xdc] sm:$0xf]
    %v5822 = vld [vmem:[#allocation29 + $0xe0] sm:$0xf]
    %v5823 = vld [vmem:[#allocation29 + $0xe4] sm:$0xf]
    %v5824 = vld [vmem:[#allocation29 + $0xe8] sm:$0xf]
    %v5825 = vld [vmem:[#allocation29 + $0xec] sm:$0xf]
    %v5826 = vld [vmem:[#allocation29 + $0xf0] sm:$0xf]
    %v5827 = vld [vmem:[#allocation29 + $0xf4] sm:$0xf]
    %v5828 = vld [vmem:[#allocation29 + $0xf8] sm:$0xf]
    %v5829 = vld [vmem:[#allocation29 + $0xfc] sm:$0xf]
    %v5830 = vld [vmem:[#allocation31] sm:$0x1]
    %v5832 = vperm.slane %v5830, 0
    %v5898 = vunpack.c.l.b16 %v5766
    %v5899 = vunpack.c.l.b16 %v5767
    %v5900 = vunpack.c.l.b16 %v5768
    %v5901 = vunpack.c.l.b16 %v5769
    %v5902 = vunpack.c.l.b16 %v5770
    %v5903 = vunpack.c.l.b16 %v5771
    %v5904 = vunpack.c.l.b16 %v5772
    %v5905 = vunpack.c.l.b16 %v5773
    %v5906 = vunpack.c.l.b16 %v5774
    %v5907 = vunpack.c.l.b16 %v5775
    %v5908 = vunpack.c.l.b16 %v5776
    %v5909 = vunpack.c.l.b16 %v5777
    %v5910 = vunpack.c.l.b16 %v5778
    %v5911 = vunpack.c.l.b16 %v5779
    %v5912 = vunpack.c.l.b16 %v5780
    %v5913 = vunpack.c.l.b16 %v5781
    %v5914 = vunpack.c.l.b16 %v5782
    %v5915 = vunpack.c.l.b16 %v5783
    %v5916 = vunpack.c.l.b16 %v5784
    %v5917 = vunpack.c.l.b16 %v5785
    %v5918 = vunpack.c.l.b16 %v5786
    %v5919 = vunpack.c.l.b16 %v5787
    %v5920 = vunpack.c.l.b16 %v5788
    %v5921 = vunpack.c.l.b16 %v5789
    %v5922 = vunpack.c.l.b16 %v5790
    %v5923 = vunpack.c.l.b16 %v5791
    %v5924 = vunpack.c.l.b16 %v5792
    %v5925 = vunpack.c.l.b16 %v5793
    %v5926 = vunpack.c.l.b16 %v5794
    %v5927 = vunpack.c.l.b16 %v5795
    %v5928 = vunpack.c.l.b16 %v5796
    %v5929 = vunpack.c.l.b16 %v5797
    %v5930 = vunpack.c.l.b16 %v5798
    %v5931 = vunpack.c.l.b16 %v5799
    %v5932 = vunpack.c.l.b16 %v5800
    %v5933 = vunpack.c.l.b16 %v5801
    %v5934 = vunpack.c.l.b16 %v5802
    %v5935 = vunpack.c.l.b16 %v5803
    %v5936 = vunpack.c.l.b16 %v5804
    %v5937 = vunpack.c.l.b16 %v5805
    %v5938 = vunpack.c.l.b16 %v5806
    %v5939 = vunpack.c.l.b16 %v5807
    %v5940 = vunpack.c.l.b16 %v5808
    %v5941 = vunpack.c.l.b16 %v5809
    %v5942 = vunpack.c.l.b16 %v5810
    %v5943 = vunpack.c.l.b16 %v5811
    %v5944 = vunpack.c.l.b16 %v5812
    %v5945 = vunpack.c.l.b16 %v5813
    %v5946 = vunpack.c.l.b16 %v5814
    %v5947 = vunpack.c.l.b16 %v5815
    %v5948 = vunpack.c.l.b16 %v5816
    %v5949 = vunpack.c.l.b16 %v5817
    %v5950 = vunpack.c.l.b16 %v5818
    %v5951 = vunpack.c.l.b16 %v5819
    %v5952 = vunpack.c.l.b16 %v5820
    %v5953 = vunpack.c.l.b16 %v5821
    %v5954 = vunpack.c.l.b16 %v5822
    %v5955 = vunpack.c.l.b16 %v5823
    %v5956 = vunpack.c.l.b16 %v5824
    %v5957 = vunpack.c.l.b16 %v5825
    %v5958 = vunpack.c.l.b16 %v5826
    %v5959 = vunpack.c.l.b16 %v5827
    %v5960 = vunpack.c.l.b16 %v5828
    %v5961 = vunpack.c.l.b16 %v5829
    %v5962 = vpack.c.b16 %v5899, %v5898
    %v5963 = vpack.c.b16 %v5901, %v5900
    %v5964 = vpack.c.b16 %v5903, %v5902
    %v5965 = vpack.c.b16 %v5905, %v5904
    %v5966 = vpack.c.b16 %v5907, %v5906
    %v5967 = vpack.c.b16 %v5909, %v5908
    %v5968 = vpack.c.b16 %v5911, %v5910
    %v5969 = vpack.c.b16 %v5913, %v5912
    %v5970 = vpack.c.b16 %v5915, %v5914
    %v5971 = vpack.c.b16 %v5917, %v5916
    %v5972 = vpack.c.b16 %v5919, %v5918
    %v5973 = vpack.c.b16 %v5921, %v5920
    %v5974 = vpack.c.b16 %v5923, %v5922
    %v5975 = vpack.c.b16 %v5925, %v5924
    %v5976 = vpack.c.b16 %v5927, %v5926
    %v5977 = vpack.c.b16 %v5929, %v5928
    %v5978 = vpack.c.b16 %v5931, %v5930
    %v5979 = vpack.c.b16 %v5933, %v5932
    %v5980 = vpack.c.b16 %v5935, %v5934
    %v5981 = vpack.c.b16 %v5937, %v5936
    %v5982 = vpack.c.b16 %v5939, %v5938
    %v5983 = vpack.c.b16 %v5941, %v5940
    %v5984 = vpack.c.b16 %v5943, %v5942
    %v5985 = vpack.c.b16 %v5945, %v5944
    %v5986 = vpack.c.b16 %v5947, %v5946
    %v5987 = vpack.c.b16 %v5949, %v5948
    %v5988 = vpack.c.b16 %v5951, %v5950
    %v5989 = vpack.c.b16 %v5953, %v5952
    %v5990 = vpack.c.b16 %v5955, %v5954
    %v5991 = vpack.c.b16 %v5957, %v5956
    %v5992 = vpack.c.b16 %v5959, %v5958
    %v5993 = vpack.c.b16 %v5961, %v5960
    %6026 = vmatpush.bf16.msra.mxu0 %v5969
    %6027 = vmatpush.bf16.msra.mxu0 %v5968
    %6028 = vmatpush.bf16.msra.mxu0 %v5967
    %6029 = vmatpush.bf16.msra.mxu0 %v5966
    %6030 = vmatpush.bf16.msra.mxu0 %v5965
    %6031 = vmatpush.bf16.msra.mxu0 %v5964
    %6032 = vmatpush.bf16.msra.mxu0 %v5963
    %6033 = vmatpush.bf16.msra.mxu0 %v5962
    %6034 = vmatmul.bf16.gmra.mxu0 %v5762
    %v6035 = vpop.f32.mrf.mxu0
    %v6036 = vadd.f32 %v5832, %v6035
    %v6037 = vpop.f32.mrf.mxu0
    %v6038 = vadd.f32 %v5832, %v6037
    %6039 = vdwg.mxu0
    %6040 = vmatpush.bf16.msra.mxu0 %v5977
    %6041 = vmatpush.bf16.msra.mxu0 %v5976
    %6042 = vmatpush.bf16.msra.mxu0 %v5975
    %6043 = vmatpush.bf16.msra.mxu0 %v5974
    %6044 = vmatpush.bf16.msra.mxu0 %v5973
    %6045 = vmatpush.bf16.msra.mxu0 %v5972
    %6046 = vmatpush.bf16.msra.mxu0 %v5971
    %6047 = vmatpush.bf16.msra.mxu0 %v5970
    %6048 = vmatmul.bf16.gmra.mxu0 %v5763
    %v6049 = vpop.f32.mrf.mxu0
    %v6050 = vadd.f32 %v6036, %v6049
    %v6051 = vpop.f32.mrf.mxu0
    %v6052 = vadd.f32 %v6038, %v6051
    %6053 = vdwg.mxu0
    %6054 = vmatpush.bf16.msra.mxu0 %v5985
    %6055 = vmatpush.bf16.msra.mxu0 %v5984
    %6056 = vmatpush.bf16.msra.mxu0 %v5983
    %6057 = vmatpush.bf16.msra.mxu0 %v5982
    %6058 = vmatpush.bf16.msra.mxu0 %v5981
    %6059 = vmatpush.bf16.msra.mxu0 %v5980
    %6060 = vmatpush.bf16.msra.mxu0 %v5979
    %6061 = vmatpush.bf16.msra.mxu0 %v5978
    %6062 = vmatmul.bf16.gmra.mxu0 %v5764
    %v6063 = vpop.f32.mrf.mxu0
    %v6064 = vadd.f32 %v6050, %v6063
    %v6065 = vpop.f32.mrf.mxu0
    %v6066 = vadd.f32 %v6052, %v6065
    %6067 = vdwg.mxu0
    %6068 = vmatpush.bf16.msra.mxu0 %v5993
    %6069 = vmatpush.bf16.msra.mxu0 %v5992
    %6070 = vmatpush.bf16.msra.mxu0 %v5991
    %6071 = vmatpush.bf16.msra.mxu0 %v5990
    %6072 = vmatpush.bf16.msra.mxu0 %v5989
    %6073 = vmatpush.bf16.msra.mxu0 %v5988
    %6074 = vmatpush.bf16.msra.mxu0 %v5987
    %6075 = vmatpush.bf16.msra.mxu0 %v5986
    %6076 = vmatmul.bf16.gmra.mxu0 %v5765
    %v6077 = vpop.f32.mrf.mxu0
    %v6078 = vadd.f32 %v6064, %v6077
    %v6079 = vpop.f32.mrf.mxu0
    %v6080 = vadd.f32 %v6066, %v6079
    %6081 = vdwg.mxu0
    %6082 = vst [vmem:[#allocation32] sm:$0xff] %v6078
    %6083 = vst [vmem:[#allocation32 + $0x8] sm:$0xff] %v6080
    // Predicated region
    $region154: #{tpu_custom_call.1} parent=1 // pred_check
      _
    $region155: #{tpu_custom_call.1} parent=1 // pred_check_branch
      %6085 = sbr.rel (0) target = $region157
    $region156: #{tpu_custom_call.1} parent=1 // pred_region
      %6087 = vsyncadd [#allocation4], 0
      %s6088 = sshll.u32 [#allocation32], 4
      %s6089 = int_to_ptr.vmem [resolvable:$true] %s6088
      %s6090 = sshll.u32 %s19, 4
      %s6091 = int_to_ptr.hbm [resolvable:$true] %s6090
      %6096 = dma.vmem_to_hbm [thread:$0]  %s6089, 256, %s6091, [#allocation4], 128, 128, 8
    $region157: #{tpu_custom_call.1} parent=1 // pred_fallthru
      _
    // Predicated region
    $region158: #{tpu_custom_call.1} parent=1 // pred_check
      _
    $region159: #{tpu_custom_call.1} parent=1 // pred_check_branch
      %6098 = sbr.rel (0) target = $region161
    $region160: #{tpu_custom_call.1} parent=1 // pred_region
      %6100 = dma.done [#allocation4], 256
    $region161: #{tpu_custom_call.1} parent=1 // pred_fallthru
      _
    %6101 = vsyncpa [#allocation3], 1
    %6102 = vsyncpa [#allocation6], 1
    %6103 = vsyncpa [#allocation9], 1
    %6104 = vsyncpa [#allocation12], 1
    %6105 = vsyncpa [#allocation15], 1
    %6106 = vsyncpa [#allocation18], 1
    %6107 = vsyncpa [#allocation21], 1
    %6108 = vsyncpa [#allocation24], 1
    %6109 = vsyncpa [#allocation27], 1
    %6110 = vsyncpa [#allocation30], 1
    %6111 = vsyncpa [#allocation4], 1

</llo_original>
